<compile_context>
chip_gen: v5e
topology: v5e:2x2
jax: 0.10.0
libtpu: 0.0.40
codegen_flags: <defaults>
</compile_context>

<pallas_src>
import math

import jax
import jax.numpy as jnp
from jax.experimental import pallas as pl
from jax.experimental.pallas import tpu as pltpu

# Original layer dims of the autoencoder.
DIMS = [784, 128, 64, 8, 64, 128, 784]
# ReLU after every layer except the encoder bottleneck output (layer 3) and the final layer.
RELU = [True, True, False, True, True, False]

F_IN = DIMS[0]  # 784


def _autoencoder_kernel(x_ref,
                        w1, b1, w2, b2, w34, b34, w5, b5, w6, b6,
                        o_ref):
    """Whole fused forward pass on one batch tile, fully resident in VMEM.

    Input tile is f32 (cast to bf16 in-register before each matmul), weights bf16,
    biases f32.  Matmuls accumulate in f32 (preferred_element_type); bias-add and
    ReLU stay in f32; output is written as bf16.
    """

    def layer(h, w_ref, b_ref, relu):
        y = jnp.dot(h.astype(jnp.bfloat16), w_ref[...],
                    preferred_element_type=jnp.float32) + b_ref[...]
        return jnp.maximum(y, 0.0) if relu else y

    h = x_ref[...]                       # f32 [bt, 784]
    h = layer(h, w1, b1, True)           # 784 -> 128, ReLU
    h = layer(h, w2, b2, True)           # 128 -> 64,  ReLU
    h = layer(h, w34, b34, True)         # fused 64 -> 8 -> 64 (no ReLU in between), ReLU after
    h = layer(h, w5, b5, True)           # 64  -> 128, ReLU
    h = layer(h, w6, b6, False)          # 128 -> 784, no activation
    o_ref[...] = h.astype(o_ref.dtype)   # bf16 out


def init_params(key):
    """Params matching PyTorch nn.Linear default init (U(-1/sqrt(fan_in), +1/sqrt(fan_in)))."""
    params = []
    for i in range(len(DIMS) - 1):
        fan_in, fan_out = DIMS[i], DIMS[i + 1]
        key, kw, kb = jax.random.split(key, 3)
        bound = 1.0 / math.sqrt(fan_in)
        w = jax.random.uniform(kw, (fan_in, fan_out), jnp.float32, -bound, bound)  # (in, out)
        b = jax.random.uniform(kb, (1, fan_out), jnp.float32, -bound, bound)
        params.append((w, b))
    return params


def _fuse_params(params):
    """Fuse the ReLU-free bottleneck (64->8->64) into one 64x64 layer; cast weights to bf16."""
    # Fusion is only valid because there is NO activation between layer 3 and layer 4.
    assert RELU[2] is False, "bottleneck fusion requires no activation after the 64->8 layer"

    (w1, b1), (w2, b2), (w3, b3), (w4, b4), (w5, b5), (w6, b6) = params
    w34 = w3 @ w4            # (64, 64), fused in f32 then cast once
    b34 = b3 @ w4 + b4       # (1, 64)

    fused = [(w1, b1), (w2, b2), (w34, b34), (w5, b5), (w6, b6)]
    # bf16 weights for the MXU; biases stay f32 (f32 VPU add + ReLU, safe on v5e).
    return [(w.astype(jnp.bfloat16), b.astype(jnp.float32)) for w, b in fused]


def _pick_batch_tile(B):
    """Largest MXU-friendly tile (<=1024 rows) that still leaves >=2 grid steps (v7x megacore)."""
    for bt in (1024, 512, 256, 128):
        if B >= 2 * bt:
            return bt
    # Tiny batch: a single tile covering the 16-aligned padded batch.
    return max(16, -(-B // 16) * 16)


def autoencoder_forward(x, params, *, batch_tile=None):
    """Forward pass.  Returns a bf16 [B, 784] reconstruction."""
    B, F = x.shape
    assert F == F_IN, f"expected {F_IN} features, got {F}"

    bt = _pick_batch_tile(B) if batch_tile is None else int(batch_tile)
    assert bt % 16 == 0, "batch_tile must be a multiple of 16 (ideally 128/256)"

    B_pad = ((B + bt - 1) // bt) * bt
    grid = (B_pad // bt,)

    # Only pad the batch dim, and only if needed (B=multiple of bt avoids any extra HBM pass).
    xp = x if B_pad == B else jnp.pad(x, ((0, B_pad - B), (0, 0)))

    fused = _fuse_params(params)

    flat_params = []
    in_specs = [pl.BlockSpec((bt, F_IN), lambda i: (i, 0))]   # f32 input tile, lane dim = full 784
    for w, b in fused:
        flat_params.extend([w, b])
        # Full-extent blocks with constant block index -> weights stay VMEM-resident.
        in_specs.append(pl.BlockSpec(w.shape, lambda i: (0, 0)))
        in_specs.append(pl.BlockSpec(b.shape, lambda i: (0, 0)))

    out_spec = pl.BlockSpec((bt, F_IN), lambda i: (i, 0))

    flops = 2 * B_pad * sum(w.shape[0] * w.shape[1] for w, _ in fused)
    bytes_accessed = (B_pad * F_IN * xp.dtype.itemsize        # f32 input stream
                      + B_pad * F_IN * 2                      # bf16 output stream
                      + sum(w.size * 2 + b.size * 4 for w, b in fused))

    out = pl.pallas_call(
        _autoencoder_kernel,
        out_shape=jax.ShapeDtypeStruct((B_pad, F_IN), jnp.bfloat16),
        grid_spec=pltpu.PrefetchScalarGridSpec(
            num_scalar_prefetch=0,
            grid=grid,
            in_specs=in_specs,
            out_specs=out_spec,
        ),
        compiler_params=pltpu.CompilerParams(
            dimension_semantics=("parallel",),
        ),
        cost_estimate=pl.CostEstimate(
            flops=flops, transcendentals=0, bytes_accessed=bytes_accessed),
    )(xp, *flat_params)

    return out if B_pad == B else out[:B]


def reference_forward(x, params):
    """Pure-JAX f32 reference of the original (unfused) 6-layer module."""
    h = x
    for (w, b), relu in zip(params, RELU):
        h = h @ w + b
        if relu:
            h = jnp.maximum(h, 0.0)
    return h


if __name__ == "__main__":
    key = jax.random.PRNGKey(0)
    key, kx = jax.random.split(key)

    B = 512  # flattened 28x28 images; auto tile -> bt=256, grid=(2,) (both v7x TCs busy)
    x = jax.random.normal(kx, (B, DIMS[0]), jnp.float32)

    params = init_params(key)

    out = autoencoder_forward(x, params)
    out = jax.block_until_ready(out)

    ref = reference_forward(x, params)
    assert out.shape == (B, DIMS[-1])

    out_f32 = out.astype(jnp.float32)
    max_err = float(jnp.max(jnp.abs(out_f32 - ref)))
    # bf16 matmul inputs + bf16 output + fused bottleneck => bf16-appropriate tolerance vs f32 ref.
    assert jnp.allclose(out_f32, ref, atol=3e-2, rtol=3e-2), f"mismatch vs reference (max abs err {max_err})"

    print("KERNEL_OK")
</pallas_src>

<mosaic_0001>
module attributes {stable_mosaic.version = 11 : i64} {
  func.func @_autoencoder_kernel(%arg0: i32, %arg1: memref<256x784xf32, #tpu.memory_space<vmem>>, %arg2: memref<784x128xbf16, #tpu.memory_space<vmem>>, %arg3: memref<1x128xf32, #tpu.memory_space<vmem>>, %arg4: memref<128x64xbf16, #tpu.memory_space<vmem>>, %arg5: memref<1x64xf32, #tpu.memory_space<vmem>>, %arg6: memref<64x64xbf16, #tpu.memory_space<vmem>>, %arg7: memref<1x64xf32, #tpu.memory_space<vmem>>, %arg8: memref<64x128xbf16, #tpu.memory_space<vmem>>, %arg9: memref<1x128xf32, #tpu.memory_space<vmem>>, %arg10: memref<128x784xbf16, #tpu.memory_space<vmem>>, %arg11: memref<1x784xf32, #tpu.memory_space<vmem>>, %arg12: memref<256x784xbf16, #tpu.memory_space<vmem>>) attributes {dimension_semantics = [#tpu.dimension_semantics<parallel>], iteration_bounds = array<i64: 2>, scalar_prefetch = 0 : i64, scratch_operands = 0 : i64, tpu.core_type = #tpu.core_type<tc>, window_params = [{transform_indices = @transform_0, window_bounds = array<i64: 256, 784>}, {pipeline_mode = #tpu.pipeline_mode<synchronous>, transform_indices = @transform_1, window_bounds = array<i64: 784, 128>}, {pipeline_mode = #tpu.pipeline_mode<synchronous>, transform_indices = @transform_2, window_bounds = array<i64: 1, 128>}, {pipeline_mode = #tpu.pipeline_mode<synchronous>, transform_indices = @transform_3, window_bounds = array<i64: 128, 64>}, {pipeline_mode = #tpu.pipeline_mode<synchronous>, transform_indices = @transform_4, window_bounds = array<i64: 1, 64>}, {pipeline_mode = #tpu.pipeline_mode<synchronous>, transform_indices = @transform_5, window_bounds = array<i64: 64, 64>}, {pipeline_mode = #tpu.pipeline_mode<synchronous>, transform_indices = @transform_6, window_bounds = array<i64: 1, 64>}, {pipeline_mode = #tpu.pipeline_mode<synchronous>, transform_indices = @transform_7, window_bounds = array<i64: 64, 128>}, {pipeline_mode = #tpu.pipeline_mode<synchronous>, transform_indices = @transform_8, window_bounds = array<i64: 1, 128>}, {pipeline_mode = #tpu.pipeline_mode<synchronous>, transform_indices = @transform_9, window_bounds = array<i64: 128, 784>}, {pipeline_mode = #tpu.pipeline_mode<synchronous>, transform_indices = @transform_10, window_bounds = array<i64: 1, 784>}, {transform_indices = @transform_11, window_bounds = array<i64: 256, 784>}]} {
    %c0 = arith.constant 0 : index
    %c0_0 = arith.constant 0 : index
    %0 = vector.load %arg1[%c0, %c0_0] : memref<256x784xf32, #tpu.memory_space<vmem>>, vector<256x784xf32>
    %1 = arith.truncf %0 : vector<256x784xf32> to vector<256x784xbf16>
    %c0_1 = arith.constant 0 : index
    %c0_2 = arith.constant 0 : index
    %2 = vector.load %arg2[%c0_1, %c0_2] : memref<784x128xbf16, #tpu.memory_space<vmem>>, vector<784x128xbf16>
    %cst = arith.constant dense<0.000000e+00> : vector<256x128xf32>
    %3 = tpu.matmul %1, %2, %cst {dimension_numbers = #tpu.dot_dimension_numbers<[1], [0], [0], [1], [0, 0, 1, 1], [], []>} : vector<256x784xbf16>, vector<784x128xbf16>, vector<256x128xf32> -> vector<256x128xf32>
    %c0_3 = arith.constant 0 : index
    %c0_4 = arith.constant 0 : index
    %4 = vector.load %arg3[%c0_3, %c0_4] : memref<1x128xf32, #tpu.memory_space<vmem>>, vector<1x128xf32>
    %5 = vector.broadcast %4 : vector<1x128xf32> to vector<256x128xf32>
    %6 = arith.addf %3, %5 : vector<256x128xf32>
    %cst_5 = arith.constant 0.000000e+00 : f32
    %7 = vector.broadcast %cst_5 : f32 to vector<256x128xf32>
    %8 = arith.maximumf %6, %7 : vector<256x128xf32>
    %9 = arith.truncf %8 : vector<256x128xf32> to vector<256x128xbf16>
    %c0_6 = arith.constant 0 : index
    %c0_7 = arith.constant 0 : index
    %10 = vector.load %arg4[%c0_6, %c0_7] : memref<128x64xbf16, #tpu.memory_space<vmem>>, vector<128x64xbf16>
    %cst_8 = arith.constant dense<0.000000e+00> : vector<256x64xf32>
    %11 = tpu.matmul %9, %10, %cst_8 {dimension_numbers = #tpu.dot_dimension_numbers<[1], [0], [0], [1], [0, 0, 1, 1], [], []>} : vector<256x128xbf16>, vector<128x64xbf16>, vector<256x64xf32> -> vector<256x64xf32>
    %c0_9 = arith.constant 0 : index
    %c0_10 = arith.constant 0 : index
    %12 = vector.load %arg5[%c0_9, %c0_10] : memref<1x64xf32, #tpu.memory_space<vmem>>, vector<1x64xf32>
    %13 = vector.broadcast %12 : vector<1x64xf32> to vector<256x64xf32>
    %14 = arith.addf %11, %13 : vector<256x64xf32>
    %cst_11 = arith.constant 0.000000e+00 : f32
    %15 = vector.broadcast %cst_11 : f32 to vector<256x64xf32>
    %16 = arith.maximumf %14, %15 : vector<256x64xf32>
    %17 = arith.truncf %16 : vector<256x64xf32> to vector<256x64xbf16>
    %c0_12 = arith.constant 0 : index
    %c0_13 = arith.constant 0 : index
    %18 = vector.load %arg6[%c0_12, %c0_13] : memref<64x64xbf16, #tpu.memory_space<vmem>>, vector<64x64xbf16>
    %cst_14 = arith.constant dense<0.000000e+00> : vector<256x64xf32>
    %19 = tpu.matmul %17, %18, %cst_14 {dimension_numbers = #tpu.dot_dimension_numbers<[1], [0], [0], [1], [0, 0, 1, 1], [], []>} : vector<256x64xbf16>, vector<64x64xbf16>, vector<256x64xf32> -> vector<256x64xf32>
    %c0_15 = arith.constant 0 : index
    %c0_16 = arith.constant 0 : index
    %20 = vector.load %arg7[%c0_15, %c0_16] : memref<1x64xf32, #tpu.memory_space<vmem>>, vector<1x64xf32>
    %21 = vector.broadcast %20 : vector<1x64xf32> to vector<256x64xf32>
    %22 = arith.addf %19, %21 : vector<256x64xf32>
    %cst_17 = arith.constant 0.000000e+00 : f32
    %23 = vector.broadcast %cst_17 : f32 to vector<256x64xf32>
    %24 = arith.maximumf %22, %23 : vector<256x64xf32>
    %25 = arith.truncf %24 : vector<256x64xf32> to vector<256x64xbf16>
    %c0_18 = arith.constant 0 : index
    %c0_19 = arith.constant 0 : index
    %26 = vector.load %arg8[%c0_18, %c0_19] : memref<64x128xbf16, #tpu.memory_space<vmem>>, vector<64x128xbf16>
    %cst_20 = arith.constant dense<0.000000e+00> : vector<256x128xf32>
    %27 = tpu.matmul %25, %26, %cst_20 {dimension_numbers = #tpu.dot_dimension_numbers<[1], [0], [0], [1], [0, 0, 1, 1], [], []>} : vector<256x64xbf16>, vector<64x128xbf16>, vector<256x128xf32> -> vector<256x128xf32>
    %c0_21 = arith.constant 0 : index
    %c0_22 = arith.constant 0 : index
    %28 = vector.load %arg9[%c0_21, %c0_22] : memref<1x128xf32, #tpu.memory_space<vmem>>, vector<1x128xf32>
    %29 = vector.broadcast %28 : vector<1x128xf32> to vector<256x128xf32>
    %30 = arith.addf %27, %29 : vector<256x128xf32>
    %cst_23 = arith.constant 0.000000e+00 : f32
    %31 = vector.broadcast %cst_23 : f32 to vector<256x128xf32>
    %32 = arith.maximumf %30, %31 : vector<256x128xf32>
    %33 = arith.truncf %32 : vector<256x128xf32> to vector<256x128xbf16>
    %c0_24 = arith.constant 0 : index
    %c0_25 = arith.constant 0 : index
    %34 = vector.load %arg10[%c0_24, %c0_25] : memref<128x784xbf16, #tpu.memory_space<vmem>>, vector<128x784xbf16>
    %cst_26 = arith.constant dense<0.000000e+00> : vector<256x784xf32>
    %35 = tpu.matmul %33, %34, %cst_26 {dimension_numbers = #tpu.dot_dimension_numbers<[1], [0], [0], [1], [0, 0, 1, 1], [], []>} : vector<256x128xbf16>, vector<128x784xbf16>, vector<256x784xf32> -> vector<256x784xf32>
    %c0_27 = arith.constant 0 : index
    %c0_28 = arith.constant 0 : index
    %36 = vector.load %arg11[%c0_27, %c0_28] : memref<1x784xf32, #tpu.memory_space<vmem>>, vector<1x784xf32>
    %37 = vector.broadcast %36 : vector<1x784xf32> to vector<256x784xf32>
    %38 = arith.addf %35, %37 : vector<256x784xf32>
    %39 = arith.truncf %38 : vector<256x784xf32> to vector<256x784xbf16>
    %c0_29 = arith.constant 0 : index
    %c0_30 = arith.constant 0 : index
    %40 = vector.load %arg12[%c0_29, %c0_30] : memref<256x784xbf16, #tpu.memory_space<vmem>>, vector<256x784xbf16>
    tpu.vector_store %arg12[%c0_29, %c0_30], %39 {strides = array<i32>} : memref<256x784xbf16, #tpu.memory_space<vmem>>, vector<256x784xbf16>,
    return
  }
  func.func @transform_0(%arg0: i32) -> (i32, i32) {
    %c0_i32 = arith.constant 0 : i32
    %c0_i32_0 = arith.constant 0 : i32
    return %arg0, %c0_i32 : i32, i32
  }
  func.func @transform_1(%arg0: i32) -> (i32, i32) {
    %c0_i32 = arith.constant 0 : i32
    %c0_i32_0 = arith.constant 0 : i32
    %c0_i32_1 = arith.constant 0 : i32
    return %c0_i32, %c0_i32_0 : i32, i32
  }
  func.func @transform_2(%arg0: i32) -> (i32, i32) {
    %c0_i32 = arith.constant 0 : i32
    %c0_i32_0 = arith.constant 0 : i32
    %c0_i32_1 = arith.constant 0 : i32
    return %c0_i32, %c0_i32_0 : i32, i32
  }
  func.func @transform_3(%arg0: i32) -> (i32, i32) {
    %c0_i32 = arith.constant 0 : i32
    %c0_i32_0 = arith.constant 0 : i32
    %c0_i32_1 = arith.constant 0 : i32
    return %c0_i32, %c0_i32_0 : i32, i32
  }
  func.func @transform_4(%arg0: i32) -> (i32, i32) {
    %c0_i32 = arith.constant 0 : i32
    %c0_i32_0 = arith.constant 0 : i32
    %c0_i32_1 = arith.constant 0 : i32
    return %c0_i32, %c0_i32_0 : i32, i32
  }
  func.func @transform_5(%arg0: i32) -> (i32, i32) {
    %c0_i32 = arith.constant 0 : i32
    %c0_i32_0 = arith.constant 0 : i32
    %c0_i32_1 = arith.constant 0 : i32
    return %c0_i32, %c0_i32_0 : i32, i32
  }
  func.func @transform_6(%arg0: i32) -> (i32, i32) {
    %c0_i32 = arith.constant 0 : i32
    %c0_i32_0 = arith.constant 0 : i32
    %c0_i32_1 = arith.constant 0 : i32
    return %c0_i32, %c0_i32_0 : i32, i32
  }
  func.func @transform_7(%arg0: i32) -> (i32, i32) {
    %c0_i32 = arith.constant 0 : i32
    %c0_i32_0 = arith.constant 0 : i32
    %c0_i32_1 = arith.constant 0 : i32
    return %c0_i32, %c0_i32_0 : i32, i32
  }
  func.func @transform_8(%arg0: i32) -> (i32, i32) {
    %c0_i32 = arith.constant 0 : i32
    %c0_i32_0 = arith.constant 0 : i32
    %c0_i32_1 = arith.constant 0 : i32
    return %c0_i32, %c0_i32_0 : i32, i32
  }
  func.func @transform_9(%arg0: i32) -> (i32, i32) {
    %c0_i32 = arith.constant 0 : i32
    %c0_i32_0 = arith.constant 0 : i32
    %c0_i32_1 = arith.constant 0 : i32
    return %c0_i32, %c0_i32_0 : i32, i32
  }
  func.func @transform_10(%arg0: i32) -> (i32, i32) {
    %c0_i32 = arith.constant 0 : i32
    %c0_i32_0 = arith.constant 0 : i32
    %c0_i32_1 = arith.constant 0 : i32
    return %c0_i32, %c0_i32_0 : i32, i32
  }
  func.func @transform_11(%arg0: i32) -> (i32, i32) {
    %c0_i32 = arith.constant 0 : i32
    %c0_i32_0 = arith.constant 0 : i32
    return %arg0, %c0_i32 : i32, i32
  }
}

</mosaic_0001>

<llo_original>
// kernel: tpu_custom_call.1
$region0: #{tpu_custom_call.1}
  #allocation0 [shape = 'u32[]', space=smem, size = 0x4, offset = 0x4, fixed_abs, tag = 'smem constant byte address 0x4 - core index']
  #allocation1 [shape = 'u32[72,128]{1,0:T(1,128)}', space=vmem, size = 0x9000, scoped, tag = 'internal scratch']
  %s0 = inlined_call_operand.vmem [shape: f32[512,784], index: 0, kind: input, shape index: {}]
  %s1 = inlined_call_operand.vmem [shape: bf16[784,128], index: 1, kind: input, shape index: {}]
  %s2 = inlined_call_operand.vmem [shape: f32[1,128], index: 2, kind: input, shape index: {}]
  %s3 = inlined_call_operand.vmem [shape: bf16[128,64], index: 3, kind: input, shape index: {}]
  %s4 = inlined_call_operand.vmem [shape: f32[1,64], index: 4, kind: input, shape index: {}]
  %s5 = inlined_call_operand.vmem [shape: bf16[64,64], index: 5, kind: input, shape index: {}]
  %s6 = inlined_call_operand.vmem [shape: f32[1,64], index: 6, kind: input, shape index: {}]
  %s7 = inlined_call_operand.vmem [shape: bf16[64,128], index: 7, kind: input, shape index: {}]
  %s8 = inlined_call_operand.vmem [shape: f32[1,128], index: 8, kind: input, shape index: {}]
  %s9 = inlined_call_operand.vmem [shape: bf16[128,784], index: 9, kind: input, shape index: {}]
  %s10 = inlined_call_operand.vmem [shape: f32[1,784], index: 10, kind: input, shape index: {}]
  %s11 = inlined_call_operand.vmem [shape: bf16[512,784], index: 11, kind: output, shape index: {}]
  %s12 = sld [smem:[#allocation0]]
  $region77: #{tpu_custom_call.1} parent=0
    _
  %s14 = ssub.s32 1, %s12
  %s15 = scalar_select 0, %s14, %s12
  loop: start=0, step=1, limit=4
  $region2: #{tpu_custom_call.1} parent=0 // loop_pre_header
    _
  $region3: #{tpu_custom_call.1} parent=0 // loop_header
    %s17 = sphi 0, %s21
    %p18 = scmp.ge.s32.totalorder %s17, 4
    %s27 = sphi 0, %s29
    %s30 = sphi 0, %s27
    %s31 = sphi 0, %s30
    %s47 = sphi 0, %s31
    %s51 = sphi 0, %s51
    %s53 = sphi 0, %s51
    %s54 = sphi 0, %s53
    %s68 = sphi 0, %s54
    %s72 = sphi 0, %s72
    %s74 = sphi 0, %s72
    %s75 = sphi 0, %s74
    %s89 = sphi 0, %s75
    %s93 = sphi 0, %s93
    %s95 = sphi 0, %s93
    %s96 = sphi 0, %s95
    %s110 = sphi 0, %s96
    %s114 = sphi 0, %s114
    %s116 = sphi 0, %s114
    %s117 = sphi 0, %s116
    %s131 = sphi 0, %s117
    %s135 = sphi 0, %s135
    %s137 = sphi 0, %s135
    %s138 = sphi 0, %s137
    %s152 = sphi 0, %s138
    %s156 = sphi 0, %s156
    %s158 = sphi 0, %s156
    %s159 = sphi 0, %s158
    %s173 = sphi 0, %s159
    %s177 = sphi 0, %s177
    %s179 = sphi 0, %s177
    %s180 = sphi 0, %s179
    %s194 = sphi 0, %s180
    %s198 = sphi 0, %s198
    %s200 = sphi 0, %s198
    %s201 = sphi 0, %s200
    %s215 = sphi 0, %s201
    %s219 = sphi 0, %s219
    %s221 = sphi 0, %s219
    %s222 = sphi 0, %s221
    %s236 = sphi 0, %s222
    %s240 = sphi 0, %s240
    %s242 = sphi 0, %s240
    %s243 = sphi 0, %s242
    %s257 = sphi 0, %s243
    %s263 = sphi 0, %s265
    %s266 = sphi 0, %s263
    %s267 = sphi 0, %s266
    %s283 = sphi 0, %s267
  $region4: #{tpu_custom_call.1} parent=0 // loop_header_branch
    %20 = sbr.rel (%p18) target = $region8
  $region5: #{tpu_custom_call.1} parent=0 // loop_body
    %s22 = ssub.s32 %s17, 1
    %s23 = ssub.s32 %s17, 2
    %s24 = sadd.s32 %s17, 1
    %s25 = ssub.s32 %s17, %s24
    %p26 = scmp.eq.s32.totalorder %s25, 0
    %s28 = sadd.s32 %s27, 1
    %s29 = scalar_select %p26, %s27, %s28
    %p32 = pneg %p26
    %p33 = scmp.eq.s32.totalorder %s17, 1
    %p34 = por %p32, %p33
    %p35 = scmp.ne.s32.totalorder %s27, %s30
    %p36 = scmp.eq.s32.totalorder %s17, 0
    %p37 = por %p35, %p36
    %p38 = scmp.ne.s32.totalorder %s27, %s30
    %p39 = scmp.eq.s32.totalorder %s22, 1
    %p40 = por %p38, %p39
    %p41 = scmp.ne.s32.totalorder %s30, %s31
    %p42 = scmp.eq.s32.totalorder %s22, 0
    %p43 = por %p41, %p42
    %p44 = scmp.ne.s32.totalorder %s30, %s31
    %p45 = scmp.eq.s32.totalorder %s23, 1
    %p46 = por %p44, %p45
    %p48 = scmp.ne.s32.totalorder %s31, %s47
    %p49 = scmp.eq.s32.totalorder %s23, 0
    %p50 = por %p48, %p49
    %s52 = sadd.s32 %s51, 1
    %p55 = scmp.eq.s32.totalorder %s17, 1
    %p56 = scmp.ne.s32.totalorder %s51, %s53
    %p57 = scmp.eq.s32.totalorder %s17, 0
    %p58 = por %p56, %p57
    %p59 = scmp.ne.s32.totalorder %s51, %s53
    %p60 = scmp.eq.s32.totalorder %s22, 1
    %p61 = por %p59, %p60
    %p62 = scmp.ne.s32.totalorder %s53, %s54
    %p63 = scmp.eq.s32.totalorder %s22, 0
    %p64 = por %p62, %p63
    %p65 = scmp.ne.s32.totalorder %s53, %s54
    %p66 = scmp.eq.s32.totalorder %s23, 1
    %p67 = por %p65, %p66
    %p69 = scmp.ne.s32.totalorder %s54, %s68
    %p70 = scmp.eq.s32.totalorder %s23, 0
    %p71 = por %p69, %p70
    %s73 = sadd.s32 %s72, 1
    %p76 = scmp.eq.s32.totalorder %s17, 1
    %p77 = scmp.ne.s32.totalorder %s72, %s74
    %p78 = scmp.eq.s32.totalorder %s17, 0
    %p79 = por %p77, %p78
    %p80 = scmp.ne.s32.totalorder %s72, %s74
    %p81 = scmp.eq.s32.totalorder %s22, 1
    %p82 = por %p80, %p81
    %p83 = scmp.ne.s32.totalorder %s74, %s75
    %p84 = scmp.eq.s32.totalorder %s22, 0
    %p85 = por %p83, %p84
    %p86 = scmp.ne.s32.totalorder %s74, %s75
    %p87 = scmp.eq.s32.totalorder %s23, 1
    %p88 = por %p86, %p87
    %p90 = scmp.ne.s32.totalorder %s75, %s89
    %p91 = scmp.eq.s32.totalorder %s23, 0
    %p92 = por %p90, %p91
    %s94 = sadd.s32 %s93, 1
    %p97 = scmp.eq.s32.totalorder %s17, 1
    %p98 = scmp.ne.s32.totalorder %s93, %s95
    %p99 = scmp.eq.s32.totalorder %s17, 0
    %p100 = por %p98, %p99
    %p101 = scmp.ne.s32.totalorder %s93, %s95
    %p102 = scmp.eq.s32.totalorder %s22, 1
    %p103 = por %p101, %p102
    %p104 = scmp.ne.s32.totalorder %s95, %s96
    %p105 = scmp.eq.s32.totalorder %s22, 0
    %p106 = por %p104, %p105
    %p107 = scmp.ne.s32.totalorder %s95, %s96
    %p108 = scmp.eq.s32.totalorder %s23, 1
    %p109 = por %p107, %p108
    %p111 = scmp.ne.s32.totalorder %s96, %s110
    %p112 = scmp.eq.s32.totalorder %s23, 0
    %p113 = por %p111, %p112
    %s115 = sadd.s32 %s114, 1
    %p118 = scmp.eq.s32.totalorder %s17, 1
    %p119 = scmp.ne.s32.totalorder %s114, %s116
    %p120 = scmp.eq.s32.totalorder %s17, 0
    %p121 = por %p119, %p120
    %p122 = scmp.ne.s32.totalorder %s114, %s116
    %p123 = scmp.eq.s32.totalorder %s22, 1
    %p124 = por %p122, %p123
    %p125 = scmp.ne.s32.totalorder %s116, %s117
    %p126 = scmp.eq.s32.totalorder %s22, 0
    %p127 = por %p125, %p126
    %p128 = scmp.ne.s32.totalorder %s116, %s117
    %p129 = scmp.eq.s32.totalorder %s23, 1
    %p130 = por %p128, %p129
    %p132 = scmp.ne.s32.totalorder %s117, %s131
    %p133 = scmp.eq.s32.totalorder %s23, 0
    %p134 = por %p132, %p133
    %s136 = sadd.s32 %s135, 1
    %p139 = scmp.eq.s32.totalorder %s17, 1
    %p140 = scmp.ne.s32.totalorder %s135, %s137
    %p141 = scmp.eq.s32.totalorder %s17, 0
    %p142 = por %p140, %p141
    %p143 = scmp.ne.s32.totalorder %s135, %s137
    %p144 = scmp.eq.s32.totalorder %s22, 1
    %p145 = por %p143, %p144
    %p146 = scmp.ne.s32.totalorder %s137, %s138
    %p147 = scmp.eq.s32.totalorder %s22, 0
    %p148 = por %p146, %p147
    %p149 = scmp.ne.s32.totalorder %s137, %s138
    %p150 = scmp.eq.s32.totalorder %s23, 1
    %p151 = por %p149, %p150
    %p153 = scmp.ne.s32.totalorder %s138, %s152
    %p154 = scmp.eq.s32.totalorder %s23, 0
    %p155 = por %p153, %p154
    %s157 = sadd.s32 %s156, 1
    %p160 = scmp.eq.s32.totalorder %s17, 1
    %p161 = scmp.ne.s32.totalorder %s156, %s158
    %p162 = scmp.eq.s32.totalorder %s17, 0
    %p163 = por %p161, %p162
    %p164 = scmp.ne.s32.totalorder %s156, %s158
    %p165 = scmp.eq.s32.totalorder %s22, 1
    %p166 = por %p164, %p165
    %p167 = scmp.ne.s32.totalorder %s158, %s159
    %p168 = scmp.eq.s32.totalorder %s22, 0
    %p169 = por %p167, %p168
    %p170 = scmp.ne.s32.totalorder %s158, %s159
    %p171 = scmp.eq.s32.totalorder %s23, 1
    %p172 = por %p170, %p171
    %p174 = scmp.ne.s32.totalorder %s159, %s173
    %p175 = scmp.eq.s32.totalorder %s23, 0
    %p176 = por %p174, %p175
    %s178 = sadd.s32 %s177, 1
    %p181 = scmp.eq.s32.totalorder %s17, 1
    %p182 = scmp.ne.s32.totalorder %s177, %s179
    %p183 = scmp.eq.s32.totalorder %s17, 0
    %p184 = por %p182, %p183
    %p185 = scmp.ne.s32.totalorder %s177, %s179
    %p186 = scmp.eq.s32.totalorder %s22, 1
    %p187 = por %p185, %p186
    %p188 = scmp.ne.s32.totalorder %s179, %s180
    %p189 = scmp.eq.s32.totalorder %s22, 0
    %p190 = por %p188, %p189
    %p191 = scmp.ne.s32.totalorder %s179, %s180
    %p192 = scmp.eq.s32.totalorder %s23, 1
    %p193 = por %p191, %p192
    %p195 = scmp.ne.s32.totalorder %s180, %s194
    %p196 = scmp.eq.s32.totalorder %s23, 0
    %p197 = por %p195, %p196
    %s199 = sadd.s32 %s198, 1
    %p202 = scmp.eq.s32.totalorder %s17, 1
    %p203 = scmp.ne.s32.totalorder %s198, %s200
    %p204 = scmp.eq.s32.totalorder %s17, 0
    %p205 = por %p203, %p204
    %p206 = scmp.ne.s32.totalorder %s198, %s200
    %p207 = scmp.eq.s32.totalorder %s22, 1
    %p208 = por %p206, %p207
    %p209 = scmp.ne.s32.totalorder %s200, %s201
    %p210 = scmp.eq.s32.totalorder %s22, 0
    %p211 = por %p209, %p210
    %p212 = scmp.ne.s32.totalorder %s200, %s201
    %p213 = scmp.eq.s32.totalorder %s23, 1
    %p214 = por %p212, %p213
    %p216 = scmp.ne.s32.totalorder %s201, %s215
    %p217 = scmp.eq.s32.totalorder %s23, 0
    %p218 = por %p216, %p217
    %s220 = sadd.s32 %s219, 1
    %p223 = scmp.eq.s32.totalorder %s17, 1
    %p224 = scmp.ne.s32.totalorder %s219, %s221
    %p225 = scmp.eq.s32.totalorder %s17, 0
    %p226 = por %p224, %p225
    %p227 = scmp.ne.s32.totalorder %s219, %s221
    %p228 = scmp.eq.s32.totalorder %s22, 1
    %p229 = por %p227, %p228
    %p230 = scmp.ne.s32.totalorder %s221, %s222
    %p231 = scmp.eq.s32.totalorder %s22, 0
    %p232 = por %p230, %p231
    %p233 = scmp.ne.s32.totalorder %s221, %s222
    %p234 = scmp.eq.s32.totalorder %s23, 1
    %p235 = por %p233, %p234
    %p237 = scmp.ne.s32.totalorder %s222, %s236
    %p238 = scmp.eq.s32.totalorder %s23, 0
    %p239 = por %p237, %p238
    %s241 = sadd.s32 %s240, 1
    %p244 = scmp.eq.s32.totalorder %s17, 1
    %p245 = scmp.ne.s32.totalorder %s240, %s242
    %p246 = scmp.eq.s32.totalorder %s17, 0
    %p247 = por %p245, %p246
    %p248 = scmp.ne.s32.totalorder %s240, %s242
    %p249 = scmp.eq.s32.totalorder %s22, 1
    %p250 = por %p248, %p249
    %p251 = scmp.ne.s32.totalorder %s242, %s243
    %p252 = scmp.eq.s32.totalorder %s22, 0
    %p253 = por %p251, %p252
    %p254 = scmp.ne.s32.totalorder %s242, %s243
    %p255 = scmp.eq.s32.totalorder %s23, 1
    %p256 = por %p254, %p255
    %p258 = scmp.ne.s32.totalorder %s243, %s257
    %p259 = scmp.eq.s32.totalorder %s23, 0
    %p260 = por %p258, %p259
    %s261 = ssub.s32 %s17, %s24
    %p262 = scmp.eq.s32.totalorder %s261, 0
    %s264 = sadd.s32 %s263, 1
    %s265 = scalar_select %p262, %s263, %s264
    %p268 = pneg %p262
    %p269 = scmp.eq.s32.totalorder %s17, 1
    %p270 = por %p268, %p269
    %p271 = scmp.ne.s32.totalorder %s263, %s266
    %p272 = scmp.eq.s32.totalorder %s17, 0
    %p273 = por %p271, %p272
    %p274 = scmp.ne.s32.totalorder %s263, %s266
    %p275 = scmp.eq.s32.totalorder %s22, 1
    %p276 = por %p274, %p275
    %p277 = scmp.ne.s32.totalorder %s266, %s267
    %p278 = scmp.eq.s32.totalorder %s22, 0
    %p279 = por %p277, %p278
    %p280 = scmp.ne.s32.totalorder %s266, %s267
    %p281 = scmp.eq.s32.totalorder %s23, 1
    %p282 = por %p280, %p281
    %p284 = scmp.ne.s32.totalorder %s267, %s283
    %p285 = scmp.eq.s32.totalorder %s23, 0
    %p286 = por %p284, %p285
    %p287 = scmp.le.s32.totalorder 1, %s17
    %p288 = scmp.lt.s32.totalorder %s17, 3
    %p289 = pnand %p287, %p288
    %p290 = pneg %p289
    // Predicated region
    $region9: #{tpu_custom_call.1} parent=5 // pred_check
      _
    $region10: #{tpu_custom_call.1} parent=5 // pred_check_branch
      %292 = sbr.rel (%p289) target = $region12
    $region11: #{tpu_custom_call.1} parent=5 // pred_region
      %s293 = ssub.s32 %s17, 1
      // Predicated region
      $region13: #{tpu_custom_call.1} parent=11 // pred_check
        %p294 = pneg %p64
      $region14: #{tpu_custom_call.1} parent=11 // pred_check_branch
        %296 = sbr.rel (%p294) target = $region16
      $region15: #{tpu_custom_call.1} parent=11 // pred_region
        _
      $region16: #{tpu_custom_call.1} parent=11 // pred_fallthru
        _
      // Predicated region
      $region17: #{tpu_custom_call.1} parent=11 // pred_check
        %p297 = pneg %p85
      $region18: #{tpu_custom_call.1} parent=11 // pred_check_branch
        %299 = sbr.rel (%p297) target = $region20
      $region19: #{tpu_custom_call.1} parent=11 // pred_region
        _
      $region20: #{tpu_custom_call.1} parent=11 // pred_fallthru
        _
      // Predicated region
      $region21: #{tpu_custom_call.1} parent=11 // pred_check
        %p300 = pneg %p106
      $region22: #{tpu_custom_call.1} parent=11 // pred_check_branch
        %302 = sbr.rel (%p300) target = $region24
      $region23: #{tpu_custom_call.1} parent=11 // pred_region
        _
      $region24: #{tpu_custom_call.1} parent=11 // pred_fallthru
        _
      // Predicated region
      $region25: #{tpu_custom_call.1} parent=11 // pred_check
        %p303 = pneg %p127
      $region26: #{tpu_custom_call.1} parent=11 // pred_check_branch
        %305 = sbr.rel (%p303) target = $region28
      $region27: #{tpu_custom_call.1} parent=11 // pred_region
        _
      $region28: #{tpu_custom_call.1} parent=11 // pred_fallthru
        _
      // Predicated region
      $region29: #{tpu_custom_call.1} parent=11 // pred_check
        %p306 = pneg %p148
      $region30: #{tpu_custom_call.1} parent=11 // pred_check_branch
        %308 = sbr.rel (%p306) target = $region32
      $region31: #{tpu_custom_call.1} parent=11 // pred_region
        _
      $region32: #{tpu_custom_call.1} parent=11 // pred_fallthru
        _
      // Predicated region
      $region33: #{tpu_custom_call.1} parent=11 // pred_check
        %p309 = pneg %p169
      $region34: #{tpu_custom_call.1} parent=11 // pred_check_branch
        %311 = sbr.rel (%p309) target = $region36
      $region35: #{tpu_custom_call.1} parent=11 // pred_region
        _
      $region36: #{tpu_custom_call.1} parent=11 // pred_fallthru
        _
      // Predicated region
      $region37: #{tpu_custom_call.1} parent=11 // pred_check
        %p312 = pneg %p190
      $region38: #{tpu_custom_call.1} parent=11 // pred_check_branch
        %314 = sbr.rel (%p312) target = $region40
      $region39: #{tpu_custom_call.1} parent=11 // pred_region
        _
      $region40: #{tpu_custom_call.1} parent=11 // pred_fallthru
        _
      // Predicated region
      $region41: #{tpu_custom_call.1} parent=11 // pred_check
        %p315 = pneg %p211
      $region42: #{tpu_custom_call.1} parent=11 // pred_check_branch
        %317 = sbr.rel (%p315) target = $region44
      $region43: #{tpu_custom_call.1} parent=11 // pred_region
        _
      $region44: #{tpu_custom_call.1} parent=11 // pred_fallthru
        _
      // Predicated region
      $region45: #{tpu_custom_call.1} parent=11 // pred_check
        %p318 = pneg %p232
      $region46: #{tpu_custom_call.1} parent=11 // pred_check_branch
        %320 = sbr.rel (%p318) target = $region48
      $region47: #{tpu_custom_call.1} parent=11 // pred_region
        _
      $region48: #{tpu_custom_call.1} parent=11 // pred_fallthru
        _
      // Predicated region
      $region49: #{tpu_custom_call.1} parent=11 // pred_check
        %p321 = pneg %p253
      $region50: #{tpu_custom_call.1} parent=11 // pred_check_branch
        %323 = sbr.rel (%p321) target = $region52
      $region51: #{tpu_custom_call.1} parent=11 // pred_region
        _
      $region52: #{tpu_custom_call.1} parent=11 // pred_fallthru
        _
    $region12: #{tpu_custom_call.1} parent=5 // pred_fallthru
      _
    %p324 = scmp.lt.s32.totalorder %s17, 2
    // Predicated region
    $region53: #{tpu_custom_call.1} parent=5 // pred_check
      %p325 = pneg %p324
    $region54: #{tpu_custom_call.1} parent=5 // pred_check_branch
      %327 = sbr.rel (%p325) target = $region56
    $region55: #{tpu_custom_call.1} parent=5 // pred_region
      // Predicated region
      $region57: #{tpu_custom_call.1} parent=55 // pred_check
        %p328 = pneg %p37
      $region58: #{tpu_custom_call.1} parent=55 // pred_check_branch
        %330 = sbr.rel (%p328) target = $region60
      $region59: #{tpu_custom_call.1} parent=55 // pred_region
        %s331 = smul.u32 32, %s17
        %p332 = scmp.lt.s32.totalorder %s331, 63
        %s333 = scalar_select %p332, %s331, 63
        %s334 = smul.addr %s333, 7
        %s335 = smul.addr %s334, 8
        %s336 = scalar_lea.vmem %s0, %s335
        %s337 = smul.u32 32, %s17
      $region60: #{tpu_custom_call.1} parent=55 // pred_fallthru
        _
    $region56: #{tpu_custom_call.1} parent=5 // pred_fallthru
      _
    %p338 = scmp.le.s32.totalorder 1, %s17
    %p339 = scmp.lt.s32.totalorder %s17, 3
    %p340 = pnand %p338, %p339
    %p341 = pneg %p340
    // Predicated region
    $region61: #{tpu_custom_call.1} parent=5 // pred_check
      _
    $region62: #{tpu_custom_call.1} parent=5 // pred_check_branch
      %343 = sbr.rel (%p340) target = $region64
    $region63: #{tpu_custom_call.1} parent=5 // pred_region
      %s344 = ssub.s32 %s17, 1
      %s345 = smul.u32 32, %s22
      %p346 = scmp.lt.s32.totalorder %s345, 63
      %s347 = scalar_select %p346, %s345, 63
      %s348 = smul.addr %s347, 7
      %s349 = smul.addr %s348, 8
      %s350 = scalar_lea.vmem %s0, %s349
      %p351 = pneg %p43
      %p352 = pneg %p40
      %p353 = pneg %p64
      %p354 = pneg %p61
      %p355 = pneg %p85
      %p356 = pneg %p82
      %p357 = pneg %p106
      %p358 = pneg %p103
      %p359 = pneg %p127
      %p360 = pneg %p124
      %p361 = pneg %p148
      %p362 = pneg %p145
      %p363 = pneg %p169
      %p364 = pneg %p166
      %p365 = pneg %p190
      %p366 = pneg %p187
      %p367 = pneg %p211
      %p368 = pneg %p208
      %p369 = pneg %p232
      %p370 = pneg %p229
      %p371 = pneg %p253
      %p372 = pneg %p250
      %p373 = pneg %p279
      %p374 = pneg %p276
      %s375 = smul.u32 32, %s22
      %p376 = scmp.lt.s32.totalorder %s375, 63
      %s377 = scalar_select %p376, %s375, 63
      %s378 = smul.addr %s377, 7
      %s379 = smul.addr %s378, 4
      %s380 = scalar_lea.vmem %s11, %s379
      %s381 = smul.u32 32, %s22
      %p382 = scmp.lt.s32.totalorder %s381, 63
      %s383 = scalar_select %p382, %s381, 63
      %s384 = smul.addr %s383, 7
      %s385 = smul.addr %s384, 8
      %s386 = scalar_lea.vmem %s0, %s385
      %s387 = smul.u32 32, %s22
      %s388 = smul.u32 32, %s22
      %p389 = scmp.lt.s32.totalorder %s388, 63
      %s390 = scalar_select %p389, %s388, 63
      %s391 = smul.addr %s390, 7
      %s392 = smul.addr %s391, 4
      %s393 = scalar_lea.vmem %s11, %s392
      %s394 = smul.u32 32, %s22
      %v396 = vld [vmem:[%s386] sm:$0xff]
      %v397 = vld [vmem:[%s386 + $0x8] sm:$0xff]
      %v398 = vld [vmem:[%s386 + $0x10] sm:$0xff]
      %v399 = vld [vmem:[%s386 + $0x18] sm:$0xff]
      %v400 = vld [vmem:[%s386 + $0x20] sm:$0xff]
      %v401 = vld [vmem:[%s386 + $0x28] sm:$0xff]
      %v402 = vld [vmem:[%s386 + $0x30] sm:$0xff]
      %v403 = vld [vmem:[%s386 + $0x38] sm:$0xff]
      %v404 = vld [vmem:[%s386 + $0x40] sm:$0xff]
      %v405 = vld [vmem:[%s386 + $0x48] sm:$0xff]
      %v406 = vld [vmem:[%s386 + $0x50] sm:$0xff]
      %v407 = vld [vmem:[%s386 + $0x58] sm:$0xff]
      %v408 = vld [vmem:[%s386 + $0x60] sm:$0xff]
      %v409 = vld [vmem:[%s386 + $0x68] sm:$0xff]
      %v410 = vld [vmem:[%s386 + $0x70] sm:$0xff]
      %v411 = vld [vmem:[%s386 + $0x78] sm:$0xff]
      %v412 = vld [vmem:[%s386 + $0x80] sm:$0xff]
      %v413 = vld [vmem:[%s386 + $0x88] sm:$0xff]
      %v414 = vld [vmem:[%s386 + $0x90] sm:$0xff]
      %v415 = vld [vmem:[%s386 + $0x98] sm:$0xff]
      %v416 = vld [vmem:[%s386 + $0xa0] sm:$0xff]
      %v417 = vld [vmem:[%s386 + $0xa8] sm:$0xff]
      %v418 = vld [vmem:[%s386 + $0xb0] sm:$0xff]
      %v419 = vld [vmem:[%s386 + $0xb8] sm:$0xff]
      %v420 = vld [vmem:[%s386 + $0xc0] sm:$0xff]
      %v421 = vld [vmem:[%s386 + $0xc8] sm:$0xff]
      %v422 = vld [vmem:[%s386 + $0xd0] sm:$0xff]
      %v423 = vld [vmem:[%s386 + $0xd8] sm:$0xff]
      %v424 = vld [vmem:[%s386 + $0xe0] sm:$0xff]
      %v425 = vld [vmem:[%s386 + $0xe8] sm:$0xff]
      %v426 = vld [vmem:[%s386 + $0xf0] sm:$0xff]
      %v427 = vld [vmem:[%s386 + $0xf8] sm:$0xff]
      %v428 = vld [vmem:[%s386 + $0x100] sm:$0xff]
      %v429 = vld [vmem:[%s386 + $0x108] sm:$0xff]
      %v430 = vld [vmem:[%s386 + $0x110] sm:$0xff]
      %v431 = vld [vmem:[%s386 + $0x118] sm:$0xff]
      %v432 = vld [vmem:[%s386 + $0x120] sm:$0xff]
      %v433 = vld [vmem:[%s386 + $0x128] sm:$0xff]
      %v434 = vld [vmem:[%s386 + $0x130] sm:$0xff]
      %v435 = vld [vmem:[%s386 + $0x138] sm:$0xff]
      %v436 = vld [vmem:[%s386 + $0x140] sm:$0xff]
      %v437 = vld [vmem:[%s386 + $0x148] sm:$0xff]
      %v438 = vld [vmem:[%s386 + $0x150] sm:$0xff]
      %v439 = vld [vmem:[%s386 + $0x158] sm:$0xff]
      %v440 = vld [vmem:[%s386 + $0x160] sm:$0xff]
      %v441 = vld [vmem:[%s386 + $0x168] sm:$0xff]
      %v442 = vld [vmem:[%s386 + $0x170] sm:$0xff]
      %v443 = vld [vmem:[%s386 + $0x178] sm:$0xff]
      %v444 = vld [vmem:[%s386 + $0x180] sm:$0xff]
      %v445 = vld [vmem:[%s386 + $0x188] sm:$0xff]
      %v446 = vld [vmem:[%s386 + $0x190] sm:$0xff]
      %v447 = vld [vmem:[%s386 + $0x198] sm:$0xff]
      %v448 = vld [vmem:[%s386 + $0x1a0] sm:$0xff]
      %v449 = vld [vmem:[%s386 + $0x1a8] sm:$0xff]
      %v450 = vld [vmem:[%s386 + $0x1b0] sm:$0xff]
      %v451 = vld [vmem:[%s386 + $0x1b8] sm:$0xff]
      %v452 = vld [vmem:[%s386 + $0x1c0] sm:$0xff]
      %v453 = vld [vmem:[%s386 + $0x1c8] sm:$0xff]
      %v454 = vld [vmem:[%s386 + $0x1d0] sm:$0xff]
      %v455 = vld [vmem:[%s386 + $0x1d8] sm:$0xff]
      %v456 = vld [vmem:[%s386 + $0x1e0] sm:$0xff]
      %v457 = vld [vmem:[%s386 + $0x1e8] sm:$0xff]
      %v458 = vld [vmem:[%s386 + $0x1f0] sm:$0xff]
      %v459 = vld [vmem:[%s386 + $0x1f8] sm:$0xff]
      %v460 = vld [vmem:[%s386 + $0x200] sm:$0xff]
      %v461 = vld [vmem:[%s386 + $0x208] sm:$0xff]
      %v462 = vld [vmem:[%s386 + $0x210] sm:$0xff]
      %v463 = vld [vmem:[%s386 + $0x218] sm:$0xff]
      %v464 = vld [vmem:[%s386 + $0x220] sm:$0xff]
      %v465 = vld [vmem:[%s386 + $0x228] sm:$0xff]
      %v466 = vld [vmem:[%s386 + $0x230] sm:$0xff]
      %v467 = vld [vmem:[%s386 + $0x238] sm:$0xff]
      %v468 = vld [vmem:[%s386 + $0x240] sm:$0xff]
      %v469 = vld [vmem:[%s386 + $0x248] sm:$0xff]
      %v470 = vld [vmem:[%s386 + $0x250] sm:$0xff]
      %v471 = vld [vmem:[%s386 + $0x258] sm:$0xff]
      %v472 = vld [vmem:[%s386 + $0x260] sm:$0xff]
      %v473 = vld [vmem:[%s386 + $0x268] sm:$0xff]
      %v474 = vld [vmem:[%s386 + $0x270] sm:$0xff]
      %v475 = vld [vmem:[%s386 + $0x278] sm:$0xff]
      %v476 = vld [vmem:[%s386 + $0x280] sm:$0xff]
      %v477 = vld [vmem:[%s386 + $0x288] sm:$0xff]
      %v478 = vld [vmem:[%s386 + $0x290] sm:$0xff]
      %v479 = vld [vmem:[%s386 + $0x298] sm:$0xff]
      %v480 = vld [vmem:[%s386 + $0x2a0] sm:$0xff]
      %v481 = vld [vmem:[%s386 + $0x2a8] sm:$0xff]
      %v482 = vld [vmem:[%s386 + $0x2b0] sm:$0xff]
      %v483 = vld [vmem:[%s386 + $0x2b8] sm:$0xff]
      %v484 = vld [vmem:[%s386 + $0x2c0] sm:$0xff]
      %v485 = vld [vmem:[%s386 + $0x2c8] sm:$0xff]
      %v486 = vld [vmem:[%s386 + $0x2d0] sm:$0xff]
      %v487 = vld [vmem:[%s386 + $0x2d8] sm:$0xff]
      %v488 = vld [vmem:[%s386 + $0x2e0] sm:$0xff]
      %v489 = vld [vmem:[%s386 + $0x2e8] sm:$0xff]
      %v490 = vld [vmem:[%s386 + $0x2f0] sm:$0xff]
      %v491 = vld [vmem:[%s386 + $0x2f8] sm:$0xff]
      %v492 = vld [vmem:[%s386 + $0x300] sm:$0xff]
      %v493 = vld [vmem:[%s386 + $0x308] sm:$0xff]
      %v494 = vld [vmem:[%s386 + $0x310] sm:$0xff]
      %v495 = vld [vmem:[%s386 + $0x318] sm:$0xff]
      %v496 = vld [vmem:[%s386 + $0x320] sm:$0xff]
      %v497 = vld [vmem:[%s386 + $0x328] sm:$0xff]
      %v498 = vld [vmem:[%s386 + $0x330] sm:$0xff]
      %v499 = vld [vmem:[%s386 + $0x338] sm:$0xff]
      %v500 = vld [vmem:[%s386 + $0x340] sm:$0xff]
      %v501 = vld [vmem:[%s386 + $0x348] sm:$0xff]
      %v502 = vld [vmem:[%s386 + $0x350] sm:$0xff]
      %v503 = vld [vmem:[%s386 + $0x358] sm:$0xff]
      %v504 = vld [vmem:[%s386 + $0x360] sm:$0xff]
      %v505 = vld [vmem:[%s386 + $0x368] sm:$0xff]
      %v506 = vld [vmem:[%s386 + $0x370] sm:$0xff]
      %v507 = vld [vmem:[%s386 + $0x378] sm:$0xff]
      %v508 = vld [vmem:[%s386 + $0x380] sm:$0xff]
      %v509 = vld [vmem:[%s386 + $0x388] sm:$0xff]
      %v510 = vld [vmem:[%s386 + $0x390] sm:$0xff]
      %v511 = vld [vmem:[%s386 + $0x398] sm:$0xff]
      %v512 = vld [vmem:[%s386 + $0x3a0] sm:$0xff]
      %v513 = vld [vmem:[%s386 + $0x3a8] sm:$0xff]
      %v514 = vld [vmem:[%s386 + $0x3b0] sm:$0xff]
      %v515 = vld [vmem:[%s386 + $0x3b8] sm:$0xff]
      %v516 = vld [vmem:[%s386 + $0x3c0] sm:$0xff]
      %v517 = vld [vmem:[%s386 + $0x3c8] sm:$0xff]
      %v518 = vld [vmem:[%s386 + $0x3d0] sm:$0xff]
      %v519 = vld [vmem:[%s386 + $0x3d8] sm:$0xff]
      %v520 = vld [vmem:[%s386 + $0x3e0] sm:$0xff]
      %v521 = vld [vmem:[%s386 + $0x3e8] sm:$0xff]
      %v522 = vld [vmem:[%s386 + $0x3f0] sm:$0xff]
      %v523 = vld [vmem:[%s386 + $0x3f8] sm:$0xff]
      %v524 = vld [vmem:[%s386 + $0x400] sm:$0xff]
      %v525 = vld [vmem:[%s386 + $0x408] sm:$0xff]
      %v526 = vld [vmem:[%s386 + $0x410] sm:$0xff]
      %v527 = vld [vmem:[%s386 + $0x418] sm:$0xff]
      %v528 = vld [vmem:[%s386 + $0x420] sm:$0xff]
      %v529 = vld [vmem:[%s386 + $0x428] sm:$0xff]
      %v530 = vld [vmem:[%s386 + $0x430] sm:$0xff]
      %v531 = vld [vmem:[%s386 + $0x438] sm:$0xff]
      %v532 = vld [vmem:[%s386 + $0x440] sm:$0xff]
      %v533 = vld [vmem:[%s386 + $0x448] sm:$0xff]
      %v534 = vld [vmem:[%s386 + $0x450] sm:$0xff]
      %v535 = vld [vmem:[%s386 + $0x458] sm:$0xff]
      %v536 = vld [vmem:[%s386 + $0x460] sm:$0xff]
      %v537 = vld [vmem:[%s386 + $0x468] sm:$0xff]
      %v538 = vld [vmem:[%s386 + $0x470] sm:$0xff]
      %v539 = vld [vmem:[%s386 + $0x478] sm:$0xff]
      %v540 = vld [vmem:[%s386 + $0x480] sm:$0xff]
      %v541 = vld [vmem:[%s386 + $0x488] sm:$0xff]
      %v542 = vld [vmem:[%s386 + $0x490] sm:$0xff]
      %v543 = vld [vmem:[%s386 + $0x498] sm:$0xff]
      %v544 = vld [vmem:[%s386 + $0x4a0] sm:$0xff]
      %v545 = vld [vmem:[%s386 + $0x4a8] sm:$0xff]
      %v546 = vld [vmem:[%s386 + $0x4b0] sm:$0xff]
      %v547 = vld [vmem:[%s386 + $0x4b8] sm:$0xff]
      %v548 = vld [vmem:[%s386 + $0x4c0] sm:$0xff]
      %v549 = vld [vmem:[%s386 + $0x4c8] sm:$0xff]
      %v550 = vld [vmem:[%s386 + $0x4d0] sm:$0xff]
      %v551 = vld [vmem:[%s386 + $0x4d8] sm:$0xff]
      %v552 = vld [vmem:[%s386 + $0x4e0] sm:$0xff]
      %v553 = vld [vmem:[%s386 + $0x4e8] sm:$0xff]
      %v554 = vld [vmem:[%s386 + $0x4f0] sm:$0xff]
      %v555 = vld [vmem:[%s386 + $0x4f8] sm:$0xff]
      %v556 = vld [vmem:[%s386 + $0x500] sm:$0xff]
      %v557 = vld [vmem:[%s386 + $0x508] sm:$0xff]
      %v558 = vld [vmem:[%s386 + $0x510] sm:$0xff]
      %v559 = vld [vmem:[%s386 + $0x518] sm:$0xff]
      %v560 = vld [vmem:[%s386 + $0x520] sm:$0xff]
      %v561 = vld [vmem:[%s386 + $0x528] sm:$0xff]
      %v562 = vld [vmem:[%s386 + $0x530] sm:$0xff]
      %v563 = vld [vmem:[%s386 + $0x538] sm:$0xff]
      %v564 = vld [vmem:[%s386 + $0x540] sm:$0xff]
      %v565 = vld [vmem:[%s386 + $0x548] sm:$0xff]
      %v566 = vld [vmem:[%s386 + $0x550] sm:$0xff]
      %v567 = vld [vmem:[%s386 + $0x558] sm:$0xff]
      %v568 = vld [vmem:[%s386 + $0x560] sm:$0xff]
      %v569 = vld [vmem:[%s386 + $0x568] sm:$0xff]
      %v570 = vld [vmem:[%s386 + $0x570] sm:$0xff]
      %v571 = vld [vmem:[%s386 + $0x578] sm:$0xff]
      %v572 = vld [vmem:[%s386 + $0x580] sm:$0xff]
      %v573 = vld [vmem:[%s386 + $0x588] sm:$0xff]
      %v574 = vld [vmem:[%s386 + $0x590] sm:$0xff]
      %v575 = vld [vmem:[%s386 + $0x598] sm:$0xff]
      %v576 = vld [vmem:[%s386 + $0x5a0] sm:$0xff]
      %v577 = vld [vmem:[%s386 + $0x5a8] sm:$0xff]
      %v578 = vld [vmem:[%s386 + $0x5b0] sm:$0xff]
      %v579 = vld [vmem:[%s386 + $0x5b8] sm:$0xff]
      %v580 = vld [vmem:[%s386 + $0x5c0] sm:$0xff]
      %v581 = vld [vmem:[%s386 + $0x5c8] sm:$0xff]
      %v582 = vld [vmem:[%s386 + $0x5d0] sm:$0xff]
      %v583 = vld [vmem:[%s386 + $0x5d8] sm:$0xff]
      %v584 = vld [vmem:[%s386 + $0x5e0] sm:$0xff]
      %v585 = vld [vmem:[%s386 + $0x5e8] sm:$0xff]
      %v586 = vld [vmem:[%s386 + $0x5f0] sm:$0xff]
      %v587 = vld [vmem:[%s386 + $0x5f8] sm:$0xff]
      %v588 = vld [vmem:[%s386 + $0x600] sm:$0xff]
      %v589 = vld [vmem:[%s386 + $0x608] sm:$0xff]
      %v590 = vld [vmem:[%s386 + $0x610] sm:$0xff]
      %v591 = vld [vmem:[%s386 + $0x618] sm:$0xff]
      %v592 = vld [vmem:[%s386 + $0x620] sm:$0xff]
      %v593 = vld [vmem:[%s386 + $0x628] sm:$0xff]
      %v594 = vld [vmem:[%s386 + $0x630] sm:$0xff]
      %v595 = vld [vmem:[%s386 + $0x638] sm:$0xff]
      %v596 = vld [vmem:[%s386 + $0x640] sm:$0xff]
      %v597 = vld [vmem:[%s386 + $0x648] sm:$0xff]
      %v598 = vld [vmem:[%s386 + $0x650] sm:$0xff]
      %v599 = vld [vmem:[%s386 + $0x658] sm:$0xff]
      %v600 = vld [vmem:[%s386 + $0x660] sm:$0xff]
      %v601 = vld [vmem:[%s386 + $0x668] sm:$0xff]
      %v602 = vld [vmem:[%s386 + $0x670] sm:$0xff]
      %v603 = vld [vmem:[%s386 + $0x678] sm:$0xff]
      %v604 = vld [vmem:[%s386 + $0x680] sm:$0xff]
      %v605 = vld [vmem:[%s386 + $0x688] sm:$0xff]
      %v606 = vld [vmem:[%s386 + $0x690] sm:$0xff]
      %v607 = vld [vmem:[%s386 + $0x698] sm:$0xff]
      %v608 = vld [vmem:[%s386 + $0x6a0] sm:$0xff]
      %v609 = vld [vmem:[%s386 + $0x6a8] sm:$0xff]
      %v610 = vld [vmem:[%s386 + $0x6b0] sm:$0xff]
      %v611 = vld [vmem:[%s386 + $0x6b8] sm:$0xff]
      %v612 = vld [vmem:[%s386 + $0x6c0] sm:$0xff]
      %v613 = vld [vmem:[%s386 + $0x6c8] sm:$0xff]
      %v614 = vld [vmem:[%s386 + $0x6d0] sm:$0xff]
      %v615 = vld [vmem:[%s386 + $0x6d8] sm:$0xff]
      %v616 = vld [vmem:[%s386 + $0x6e0] sm:$0xff]
      %v617 = vld [vmem:[%s386 + $0x6e8] sm:$0xff]
      %v618 = vld [vmem:[%s386 + $0x6f0] sm:$0xff]
      %v619 = vld [vmem:[%s386 + $0x6f8] sm:$0xff]
      %v620 = vpack.c.bf16 %v403, %v396
      %v621 = vpack.c.bf16 %v404, %v397
      %v622 = vpack.c.bf16 %v405, %v398
      %v623 = vpack.c.bf16 %v406, %v399
      %v624 = vpack.c.bf16 %v407, %v400
      %v625 = vpack.c.bf16 %v408, %v401
      %v626 = vpack.c.bf16 %v409, %v402
      %v627 = vpack.c.bf16 %v417, %v410
      %v628 = vpack.c.bf16 %v418, %v411
      %v629 = vpack.c.bf16 %v419, %v412
      %v630 = vpack.c.bf16 %v420, %v413
      %v631 = vpack.c.bf16 %v421, %v414
      %v632 = vpack.c.bf16 %v422, %v415
      %v633 = vpack.c.bf16 %v423, %v416
      %v634 = vpack.c.bf16 %v431, %v424
      %v635 = vpack.c.bf16 %v432, %v425
      %v636 = vpack.c.bf16 %v433, %v426
      %v637 = vpack.c.bf16 %v434, %v427
      %v638 = vpack.c.bf16 %v435, %v428
      %v639 = vpack.c.bf16 %v436, %v429
      %v640 = vpack.c.bf16 %v437, %v430
      %v641 = vpack.c.bf16 %v445, %v438
      %v642 = vpack.c.bf16 %v446, %v439
      %v643 = vpack.c.bf16 %v447, %v440
      %v644 = vpack.c.bf16 %v448, %v441
      %v645 = vpack.c.bf16 %v449, %v442
      %v646 = vpack.c.bf16 %v450, %v443
      %v647 = vpack.c.bf16 %v451, %v444
      %v648 = vpack.c.bf16 %v459, %v452
      %v649 = vpack.c.bf16 %v460, %v453
      %v650 = vpack.c.bf16 %v461, %v454
      %v651 = vpack.c.bf16 %v462, %v455
      %v652 = vpack.c.bf16 %v463, %v456
      %v653 = vpack.c.bf16 %v464, %v457
      %v654 = vpack.c.bf16 %v465, %v458
      %v655 = vpack.c.bf16 %v473, %v466
      %v656 = vpack.c.bf16 %v474, %v467
      %v657 = vpack.c.bf16 %v475, %v468
      %v658 = vpack.c.bf16 %v476, %v469
      %v659 = vpack.c.bf16 %v477, %v470
      %v660 = vpack.c.bf16 %v478, %v471
      %v661 = vpack.c.bf16 %v479, %v472
      %v662 = vpack.c.bf16 %v487, %v480
      %v663 = vpack.c.bf16 %v488, %v481
      %v664 = vpack.c.bf16 %v489, %v482
      %v665 = vpack.c.bf16 %v490, %v483
      %v666 = vpack.c.bf16 %v491, %v484
      %v667 = vpack.c.bf16 %v492, %v485
      %v668 = vpack.c.bf16 %v493, %v486
      %v669 = vpack.c.bf16 %v501, %v494
      %v670 = vpack.c.bf16 %v502, %v495
      %v671 = vpack.c.bf16 %v503, %v496
      %v672 = vpack.c.bf16 %v504, %v497
      %v673 = vpack.c.bf16 %v505, %v498
      %v674 = vpack.c.bf16 %v506, %v499
      %v675 = vpack.c.bf16 %v507, %v500
      %v676 = vpack.c.bf16 %v515, %v508
      %v677 = vpack.c.bf16 %v516, %v509
      %v678 = vpack.c.bf16 %v517, %v510
      %v679 = vpack.c.bf16 %v518, %v511
      %v680 = vpack.c.bf16 %v519, %v512
      %v681 = vpack.c.bf16 %v520, %v513
      %v682 = vpack.c.bf16 %v521, %v514
      %v683 = vpack.c.bf16 %v529, %v522
      %v684 = vpack.c.bf16 %v530, %v523
      %v685 = vpack.c.bf16 %v531, %v524
      %v686 = vpack.c.bf16 %v532, %v525
      %v687 = vpack.c.bf16 %v533, %v526
      %v688 = vpack.c.bf16 %v534, %v527
      %v689 = vpack.c.bf16 %v535, %v528
      %v690 = vpack.c.bf16 %v543, %v536
      %v691 = vpack.c.bf16 %v544, %v537
      %v692 = vpack.c.bf16 %v545, %v538
      %v693 = vpack.c.bf16 %v546, %v539
      %v694 = vpack.c.bf16 %v547, %v540
      %v695 = vpack.c.bf16 %v548, %v541
      %v696 = vpack.c.bf16 %v549, %v542
      %v697 = vpack.c.bf16 %v557, %v550
      %v698 = vpack.c.bf16 %v558, %v551
      %v699 = vpack.c.bf16 %v559, %v552
      %v700 = vpack.c.bf16 %v560, %v553
      %v701 = vpack.c.bf16 %v561, %v554
      %v702 = vpack.c.bf16 %v562, %v555
      %v703 = vpack.c.bf16 %v563, %v556
      %v704 = vpack.c.bf16 %v571, %v564
      %v705 = vpack.c.bf16 %v572, %v565
      %v706 = vpack.c.bf16 %v573, %v566
      %v707 = vpack.c.bf16 %v574, %v567
      %v708 = vpack.c.bf16 %v575, %v568
      %v709 = vpack.c.bf16 %v576, %v569
      %v710 = vpack.c.bf16 %v577, %v570
      %v711 = vpack.c.bf16 %v585, %v578
      %v712 = vpack.c.bf16 %v586, %v579
      %v713 = vpack.c.bf16 %v587, %v580
      %v714 = vpack.c.bf16 %v588, %v581
      %v715 = vpack.c.bf16 %v589, %v582
      %v716 = vpack.c.bf16 %v590, %v583
      %v717 = vpack.c.bf16 %v591, %v584
      %v718 = vpack.c.bf16 %v599, %v592
      %v719 = vpack.c.bf16 %v600, %v593
      %v720 = vpack.c.bf16 %v601, %v594
      %v721 = vpack.c.bf16 %v602, %v595
      %v722 = vpack.c.bf16 %v603, %v596
      %v723 = vpack.c.bf16 %v604, %v597
      %v724 = vpack.c.bf16 %v605, %v598
      %v725 = vpack.c.bf16 %v613, %v606
      %v726 = vpack.c.bf16 %v614, %v607
      %v727 = vpack.c.bf16 %v615, %v608
      %v728 = vpack.c.bf16 %v616, %v609
      %v729 = vpack.c.bf16 %v617, %v610
      %v730 = vpack.c.bf16 %v618, %v611
      %v731 = vpack.c.bf16 %v619, %v612
      %v732 = vld [vmem:[%s1] sm:$0xf]
      %v733 = vld [vmem:[%s1 + $0x4] sm:$0xf]
      %v734 = vld [vmem:[%s1 + $0x8] sm:$0xf]
      %v735 = vld [vmem:[%s1 + $0xc] sm:$0xf]
      %v736 = vld [vmem:[%s1 + $0x10] sm:$0xf]
      %v737 = vld [vmem:[%s1 + $0x14] sm:$0xf]
      %v738 = vld [vmem:[%s1 + $0x18] sm:$0xf]
      %v739 = vld [vmem:[%s1 + $0x1c] sm:$0xf]
      %v740 = vld [vmem:[%s1 + $0x20] sm:$0xf]
      %v741 = vld [vmem:[%s1 + $0x24] sm:$0xf]
      %v742 = vld [vmem:[%s1 + $0x28] sm:$0xf]
      %v743 = vld [vmem:[%s1 + $0x2c] sm:$0xf]
      %v744 = vld [vmem:[%s1 + $0x30] sm:$0xf]
      %v745 = vld [vmem:[%s1 + $0x34] sm:$0xf]
      %v746 = vld [vmem:[%s1 + $0x38] sm:$0xf]
      %v747 = vld [vmem:[%s1 + $0x3c] sm:$0xf]
      %v748 = vld [vmem:[%s1 + $0x40] sm:$0xf]
      %v749 = vld [vmem:[%s1 + $0x44] sm:$0xf]
      %v750 = vld [vmem:[%s1 + $0x48] sm:$0xf]
      %v751 = vld [vmem:[%s1 + $0x4c] sm:$0xf]
      %v752 = vld [vmem:[%s1 + $0x50] sm:$0xf]
      %v753 = vld [vmem:[%s1 + $0x54] sm:$0xf]
      %v754 = vld [vmem:[%s1 + $0x58] sm:$0xf]
      %v755 = vld [vmem:[%s1 + $0x5c] sm:$0xf]
      %v756 = vld [vmem:[%s1 + $0x60] sm:$0xf]
      %v757 = vld [vmem:[%s1 + $0x64] sm:$0xf]
      %v758 = vld [vmem:[%s1 + $0x68] sm:$0xf]
      %v759 = vld [vmem:[%s1 + $0x6c] sm:$0xf]
      %v760 = vld [vmem:[%s1 + $0x70] sm:$0xf]
      %v761 = vld [vmem:[%s1 + $0x74] sm:$0xf]
      %v762 = vld [vmem:[%s1 + $0x78] sm:$0xf]
      %v763 = vld [vmem:[%s1 + $0x7c] sm:$0xf]
      %v764 = vld [vmem:[%s1 + $0x80] sm:$0xf]
      %v765 = vld [vmem:[%s1 + $0x84] sm:$0xf]
      %v766 = vld [vmem:[%s1 + $0x88] sm:$0xf]
      %v767 = vld [vmem:[%s1 + $0x8c] sm:$0xf]
      %v768 = vld [vmem:[%s1 + $0x90] sm:$0xf]
      %v769 = vld [vmem:[%s1 + $0x94] sm:$0xf]
      %v770 = vld [vmem:[%s1 + $0x98] sm:$0xf]
      %v771 = vld [vmem:[%s1 + $0x9c] sm:$0xf]
      %v772 = vld [vmem:[%s1 + $0xa0] sm:$0xf]
      %v773 = vld [vmem:[%s1 + $0xa4] sm:$0xf]
      %v774 = vld [vmem:[%s1 + $0xa8] sm:$0xf]
      %v775 = vld [vmem:[%s1 + $0xac] sm:$0xf]
      %v776 = vld [vmem:[%s1 + $0xb0] sm:$0xf]
      %v777 = vld [vmem:[%s1 + $0xb4] sm:$0xf]
      %v778 = vld [vmem:[%s1 + $0xb8] sm:$0xf]
      %v779 = vld [vmem:[%s1 + $0xbc] sm:$0xf]
      %v780 = vld [vmem:[%s1 + $0xc0] sm:$0xf]
      %v781 = vld [vmem:[%s1 + $0xc4] sm:$0xf]
      %v782 = vld [vmem:[%s1 + $0xc8] sm:$0xf]
      %v783 = vld [vmem:[%s1 + $0xcc] sm:$0xf]
      %v784 = vld [vmem:[%s1 + $0xd0] sm:$0xf]
      %v785 = vld [vmem:[%s1 + $0xd4] sm:$0xf]
      %v786 = vld [vmem:[%s1 + $0xd8] sm:$0xf]
      %v787 = vld [vmem:[%s1 + $0xdc] sm:$0xf]
      %v788 = vld [vmem:[%s1 + $0xe0] sm:$0xf]
      %v789 = vld [vmem:[%s1 + $0xe4] sm:$0xf]
      %v790 = vld [vmem:[%s1 + $0xe8] sm:$0xf]
      %v791 = vld [vmem:[%s1 + $0xec] sm:$0xf]
      %v792 = vld [vmem:[%s1 + $0xf0] sm:$0xf]
      %v793 = vld [vmem:[%s1 + $0xf4] sm:$0xf]
      %v794 = vld [vmem:[%s1 + $0xf8] sm:$0xf]
      %v795 = vld [vmem:[%s1 + $0xfc] sm:$0xf]
      %v796 = vld [vmem:[%s1 + $0x100] sm:$0xf]
      %v797 = vld [vmem:[%s1 + $0x104] sm:$0xf]
      %v798 = vld [vmem:[%s1 + $0x108] sm:$0xf]
      %v799 = vld [vmem:[%s1 + $0x10c] sm:$0xf]
      %v800 = vld [vmem:[%s1 + $0x110] sm:$0xf]
      %v801 = vld [vmem:[%s1 + $0x114] sm:$0xf]
      %v802 = vld [vmem:[%s1 + $0x118] sm:$0xf]
      %v803 = vld [vmem:[%s1 + $0x11c] sm:$0xf]
      %v804 = vld [vmem:[%s1 + $0x120] sm:$0xf]
      %v805 = vld [vmem:[%s1 + $0x124] sm:$0xf]
      %v806 = vld [vmem:[%s1 + $0x128] sm:$0xf]
      %v807 = vld [vmem:[%s1 + $0x12c] sm:$0xf]
      %v808 = vld [vmem:[%s1 + $0x130] sm:$0xf]
      %v809 = vld [vmem:[%s1 + $0x134] sm:$0xf]
      %v810 = vld [vmem:[%s1 + $0x138] sm:$0xf]
      %v811 = vld [vmem:[%s1 + $0x13c] sm:$0xf]
      %v812 = vld [vmem:[%s1 + $0x140] sm:$0xf]
      %v813 = vld [vmem:[%s1 + $0x144] sm:$0xf]
      %v814 = vld [vmem:[%s1 + $0x148] sm:$0xf]
      %v815 = vld [vmem:[%s1 + $0x14c] sm:$0xf]
      %v816 = vld [vmem:[%s1 + $0x150] sm:$0xf]
      %v817 = vld [vmem:[%s1 + $0x154] sm:$0xf]
      %v818 = vld [vmem:[%s1 + $0x158] sm:$0xf]
      %v819 = vld [vmem:[%s1 + $0x15c] sm:$0xf]
      %v820 = vld [vmem:[%s1 + $0x160] sm:$0xf]
      %v821 = vld [vmem:[%s1 + $0x164] sm:$0xf]
      %v822 = vld [vmem:[%s1 + $0x168] sm:$0xf]
      %v823 = vld [vmem:[%s1 + $0x16c] sm:$0xf]
      %v824 = vld [vmem:[%s1 + $0x170] sm:$0xf]
      %v825 = vld [vmem:[%s1 + $0x174] sm:$0xf]
      %v826 = vld [vmem:[%s1 + $0x178] sm:$0xf]
      %v827 = vld [vmem:[%s1 + $0x17c] sm:$0xf]
      %v828 = vld [vmem:[%s1 + $0x180] sm:$0xf]
      %v829 = vld [vmem:[%s1 + $0x184] sm:$0xf]
      %v830 = vld [vmem:[%s2] sm:$0x1]
      %v832 = vperm.slane %v830, 0
      %v932 = vunpack.c.l.b16 %v732
      %v933 = vunpack.c.l.b16 %v733
      %v934 = vunpack.c.l.b16 %v734
      %v935 = vunpack.c.l.b16 %v735
      %v936 = vunpack.c.l.b16 %v736
      %v937 = vunpack.c.l.b16 %v737
      %v938 = vunpack.c.l.b16 %v738
      %v939 = vunpack.c.l.b16 %v739
      %v940 = vunpack.c.l.b16 %v740
      %v941 = vunpack.c.l.b16 %v741
      %v942 = vunpack.c.l.b16 %v742
      %v943 = vunpack.c.l.b16 %v743
      %v944 = vunpack.c.l.b16 %v744
      %v945 = vunpack.c.l.b16 %v745
      %v946 = vunpack.c.l.b16 %v746
      %v947 = vunpack.c.l.b16 %v747
      %v948 = vunpack.c.l.b16 %v748
      %v949 = vunpack.c.l.b16 %v749
      %v950 = vunpack.c.l.b16 %v750
      %v951 = vunpack.c.l.b16 %v751
      %v952 = vunpack.c.l.b16 %v752
      %v953 = vunpack.c.l.b16 %v753
      %v954 = vunpack.c.l.b16 %v754
      %v955 = vunpack.c.l.b16 %v755
      %v956 = vunpack.c.l.b16 %v756
      %v957 = vunpack.c.l.b16 %v757
      %v958 = vunpack.c.l.b16 %v758
      %v959 = vunpack.c.l.b16 %v759
      %v960 = vunpack.c.l.b16 %v760
      %v961 = vunpack.c.l.b16 %v761
      %v962 = vunpack.c.l.b16 %v762
      %v963 = vunpack.c.l.b16 %v763
      %v964 = vunpack.c.l.b16 %v764
      %v965 = vunpack.c.l.b16 %v765
      %v966 = vunpack.c.l.b16 %v766
      %v967 = vunpack.c.l.b16 %v767
      %v968 = vunpack.c.l.b16 %v768
      %v969 = vunpack.c.l.b16 %v769
      %v970 = vunpack.c.l.b16 %v770
      %v971 = vunpack.c.l.b16 %v771
      %v972 = vunpack.c.l.b16 %v772
      %v973 = vunpack.c.l.b16 %v773
      %v974 = vunpack.c.l.b16 %v774
      %v975 = vunpack.c.l.b16 %v775
      %v976 = vunpack.c.l.b16 %v776
      %v977 = vunpack.c.l.b16 %v777
      %v978 = vunpack.c.l.b16 %v778
      %v979 = vunpack.c.l.b16 %v779
      %v980 = vunpack.c.l.b16 %v780
      %v981 = vunpack.c.l.b16 %v781
      %v982 = vunpack.c.l.b16 %v782
      %v983 = vunpack.c.l.b16 %v783
      %v984 = vunpack.c.l.b16 %v784
      %v985 = vunpack.c.l.b16 %v785
      %v986 = vunpack.c.l.b16 %v786
      %v987 = vunpack.c.l.b16 %v787
      %v988 = vunpack.c.l.b16 %v788
      %v989 = vunpack.c.l.b16 %v789
      %v990 = vunpack.c.l.b16 %v790
      %v991 = vunpack.c.l.b16 %v791
      %v992 = vunpack.c.l.b16 %v792
      %v993 = vunpack.c.l.b16 %v793
      %v994 = vunpack.c.l.b16 %v794
      %v995 = vunpack.c.l.b16 %v795
      %v996 = vunpack.c.l.b16 %v796
      %v997 = vunpack.c.l.b16 %v797
      %v998 = vunpack.c.l.b16 %v798
      %v999 = vunpack.c.l.b16 %v799
      %v1000 = vunpack.c.l.b16 %v800
      %v1001 = vunpack.c.l.b16 %v801
      %v1002 = vunpack.c.l.b16 %v802
      %v1003 = vunpack.c.l.b16 %v803
      %v1004 = vunpack.c.l.b16 %v804
      %v1005 = vunpack.c.l.b16 %v805
      %v1006 = vunpack.c.l.b16 %v806
      %v1007 = vunpack.c.l.b16 %v807
      %v1008 = vunpack.c.l.b16 %v808
      %v1009 = vunpack.c.l.b16 %v809
      %v1010 = vunpack.c.l.b16 %v810
      %v1011 = vunpack.c.l.b16 %v811
      %v1012 = vunpack.c.l.b16 %v812
      %v1013 = vunpack.c.l.b16 %v813
      %v1014 = vunpack.c.l.b16 %v814
      %v1015 = vunpack.c.l.b16 %v815
      %v1016 = vunpack.c.l.b16 %v816
      %v1017 = vunpack.c.l.b16 %v817
      %v1018 = vunpack.c.l.b16 %v818
      %v1019 = vunpack.c.l.b16 %v819
      %v1020 = vunpack.c.l.b16 %v820
      %v1021 = vunpack.c.l.b16 %v821
      %v1022 = vunpack.c.l.b16 %v822
      %v1023 = vunpack.c.l.b16 %v823
      %v1024 = vunpack.c.l.b16 %v824
      %v1025 = vunpack.c.l.b16 %v825
      %v1026 = vunpack.c.l.b16 %v826
      %v1027 = vunpack.c.l.b16 %v827
      %v1028 = vunpack.c.l.b16 %v828
      %v1029 = vunpack.c.l.b16 %v829
      %v1030 = vpack.c.b16 %v933, %v932
      %v1031 = vpack.c.b16 %v935, %v934
      %v1032 = vpack.c.b16 %v937, %v936
      %v1033 = vpack.c.b16 %v939, %v938
      %v1034 = vpack.c.b16 %v941, %v940
      %v1035 = vpack.c.b16 %v943, %v942
      %v1036 = vpack.c.b16 %v945, %v944
      %v1037 = vpack.c.b16 %v947, %v946
      %v1038 = vpack.c.b16 %v949, %v948
      %v1039 = vpack.c.b16 %v951, %v950
      %v1040 = vpack.c.b16 %v953, %v952
      %v1041 = vpack.c.b16 %v955, %v954
      %v1042 = vpack.c.b16 %v957, %v956
      %v1043 = vpack.c.b16 %v959, %v958
      %v1044 = vpack.c.b16 %v961, %v960
      %v1045 = vpack.c.b16 %v963, %v962
      %v1046 = vpack.c.b16 %v965, %v964
      %v1047 = vpack.c.b16 %v967, %v966
      %v1048 = vpack.c.b16 %v969, %v968
      %v1049 = vpack.c.b16 %v971, %v970
      %v1050 = vpack.c.b16 %v973, %v972
      %v1051 = vpack.c.b16 %v975, %v974
      %v1052 = vpack.c.b16 %v977, %v976
      %v1053 = vpack.c.b16 %v979, %v978
      %v1054 = vpack.c.b16 %v981, %v980
      %v1055 = vpack.c.b16 %v983, %v982
      %v1056 = vpack.c.b16 %v985, %v984
      %v1057 = vpack.c.b16 %v987, %v986
      %v1058 = vpack.c.b16 %v989, %v988
      %v1059 = vpack.c.b16 %v991, %v990
      %v1060 = vpack.c.b16 %v993, %v992
      %v1061 = vpack.c.b16 %v995, %v994
      %v1062 = vpack.c.b16 %v997, %v996
      %v1063 = vpack.c.b16 %v999, %v998
      %v1064 = vpack.c.b16 %v1001, %v1000
      %v1065 = vpack.c.b16 %v1003, %v1002
      %v1066 = vpack.c.b16 %v1005, %v1004
      %v1067 = vpack.c.b16 %v1007, %v1006
      %v1068 = vpack.c.b16 %v1009, %v1008
      %v1069 = vpack.c.b16 %v1011, %v1010
      %v1070 = vpack.c.b16 %v1013, %v1012
      %v1071 = vpack.c.b16 %v1015, %v1014
      %v1072 = vpack.c.b16 %v1017, %v1016
      %v1073 = vpack.c.b16 %v1019, %v1018
      %v1074 = vpack.c.b16 %v1021, %v1020
      %v1075 = vpack.c.b16 %v1023, %v1022
      %v1076 = vpack.c.b16 %v1025, %v1024
      %v1077 = vpack.c.b16 %v1027, %v1026
      %v1078 = vpack.c.b16 %v1029, %v1028
      %vm1128 = vcmask 130048
      %v1130 = vsel %vm1128, %v626, 0
      %v1133 = vsel %vm1128, %v633, 0
      %v1136 = vsel %vm1128, %v640, 0
      %v1139 = vsel %vm1128, %v647, 0
      %v1142 = vsel %vm1128, %v654, 0
      %v1145 = vsel %vm1128, %v661, 0
      %v1148 = vsel %vm1128, %v668, 0
      %v1151 = vsel %vm1128, %v675, 0
      %v1154 = vsel %vm1128, %v682, 0
      %v1157 = vsel %vm1128, %v689, 0
      %v1160 = vsel %vm1128, %v696, 0
      %v1163 = vsel %vm1128, %v703, 0
      %v1166 = vsel %vm1128, %v710, 0
      %v1169 = vsel %vm1128, %v717, 0
      %v1172 = vsel %vm1128, %v724, 0
      %v1175 = vsel %vm1128, %v731, 0
      %1177 = vmatpush.bf16.msra.mxu0 %v1037
      %1178 = vmatpush.bf16.msra.mxu0 %v1036
      %1179 = vmatpush.bf16.msra.mxu0 %v1035
      %1180 = vmatpush.bf16.msra.mxu0 %v1034
      %1181 = vmatpush.bf16.msra.mxu0 %v1033
      %1182 = vmatpush.bf16.msra.mxu0 %v1032
      %1183 = vmatpush.bf16.msra.mxu0 %v1031
      %1184 = vmatpush.bf16.msra.mxu0 %v1030
      %1185 = vmatmul.bf16.gmra.mxu0 %v620
      %v1186 = vpop.f32.mrf.mxu0
      %v1187 = vadd.f32 %v832, %v1186
      %v1188 = vpop.f32.mrf.mxu0
      %v1189 = vadd.f32 %v832, %v1188
      %1190 = vmatmul.bf16.gmra.mxu0 %v627
      %v1191 = vpop.f32.mrf.mxu0
      %v1192 = vadd.f32 %v832, %v1191
      %v1193 = vpop.f32.mrf.mxu0
      %v1194 = vadd.f32 %v832, %v1193
      %1195 = vmatmul.bf16.gmra.mxu0 %v634
      %v1196 = vpop.f32.mrf.mxu0
      %v1197 = vadd.f32 %v832, %v1196
      %v1198 = vpop.f32.mrf.mxu0
      %v1199 = vadd.f32 %v832, %v1198
      %1200 = vmatmul.bf16.gmra.mxu0 %v641
      %v1201 = vpop.f32.mrf.mxu0
      %v1202 = vadd.f32 %v832, %v1201
      %v1203 = vpop.f32.mrf.mxu0
      %v1204 = vadd.f32 %v832, %v1203
      %1205 = vmatmul.bf16.gmra.mxu0 %v648
      %v1206 = vpop.f32.mrf.mxu0
      %v1207 = vadd.f32 %v832, %v1206
      %v1208 = vpop.f32.mrf.mxu0
      %v1209 = vadd.f32 %v832, %v1208
      %1210 = vmatmul.bf16.gmra.mxu0 %v655
      %v1211 = vpop.f32.mrf.mxu0
      %v1212 = vadd.f32 %v832, %v1211
      %v1213 = vpop.f32.mrf.mxu0
      %v1214 = vadd.f32 %v832, %v1213
      %1215 = vmatmul.bf16.gmra.mxu0 %v662
      %v1216 = vpop.f32.mrf.mxu0
      %v1217 = vadd.f32 %v832, %v1216
      %v1218 = vpop.f32.mrf.mxu0
      %v1219 = vadd.f32 %v832, %v1218
      %1220 = vmatmul.bf16.gmra.mxu0 %v669
      %v1221 = vpop.f32.mrf.mxu0
      %v1222 = vadd.f32 %v832, %v1221
      %v1223 = vpop.f32.mrf.mxu0
      %v1224 = vadd.f32 %v832, %v1223
      %1225 = vmatmul.bf16.gmra.mxu0 %v676
      %v1226 = vpop.f32.mrf.mxu0
      %v1227 = vadd.f32 %v832, %v1226
      %v1228 = vpop.f32.mrf.mxu0
      %v1229 = vadd.f32 %v832, %v1228
      %1230 = vmatmul.bf16.gmra.mxu0 %v683
      %v1231 = vpop.f32.mrf.mxu0
      %v1232 = vadd.f32 %v832, %v1231
      %v1233 = vpop.f32.mrf.mxu0
      %v1234 = vadd.f32 %v832, %v1233
      %1235 = vmatmul.bf16.gmra.mxu0 %v690
      %v1236 = vpop.f32.mrf.mxu0
      %v1237 = vadd.f32 %v832, %v1236
      %v1238 = vpop.f32.mrf.mxu0
      %v1239 = vadd.f32 %v832, %v1238
      %1240 = vmatmul.bf16.gmra.mxu0 %v697
      %v1241 = vpop.f32.mrf.mxu0
      %v1242 = vadd.f32 %v832, %v1241
      %v1243 = vpop.f32.mrf.mxu0
      %v1244 = vadd.f32 %v832, %v1243
      %1245 = vmatmul.bf16.gmra.mxu0 %v704
      %v1246 = vpop.f32.mrf.mxu0
      %v1247 = vadd.f32 %v832, %v1246
      %v1248 = vpop.f32.mrf.mxu0
      %v1249 = vadd.f32 %v832, %v1248
      %1250 = vmatmul.bf16.gmra.mxu0 %v711
      %v1251 = vpop.f32.mrf.mxu0
      %v1252 = vadd.f32 %v832, %v1251
      %v1253 = vpop.f32.mrf.mxu0
      %v1254 = vadd.f32 %v832, %v1253
      %1255 = vmatmul.bf16.gmra.mxu0 %v718
      %v1256 = vpop.f32.mrf.mxu0
      %v1257 = vadd.f32 %v832, %v1256
      %v1258 = vpop.f32.mrf.mxu0
      %v1259 = vadd.f32 %v832, %v1258
      %1260 = vmatmul.bf16.gmra.mxu0 %v725
      %v1261 = vpop.f32.mrf.mxu0
      %v1262 = vadd.f32 %v832, %v1261
      %v1263 = vpop.f32.mrf.mxu0
      %v1264 = vadd.f32 %v832, %v1263
      %1265 = vdwg.mxu0
      %1266 = vmatpush.bf16.msra.mxu0 %v1045
      %1267 = vmatpush.bf16.msra.mxu0 %v1044
      %1268 = vmatpush.bf16.msra.mxu0 %v1043
      %1269 = vmatpush.bf16.msra.mxu0 %v1042
      %1270 = vmatpush.bf16.msra.mxu0 %v1041
      %1271 = vmatpush.bf16.msra.mxu0 %v1040
      %1272 = vmatpush.bf16.msra.mxu0 %v1039
      %1273 = vmatpush.bf16.msra.mxu0 %v1038
      %1274 = vmatmul.bf16.gmra.mxu0 %v621
      %v1275 = vpop.f32.mrf.mxu0
      %v1276 = vadd.f32 %v1187, %v1275
      %v1277 = vpop.f32.mrf.mxu0
      %v1278 = vadd.f32 %v1189, %v1277
      %1279 = vmatmul.bf16.gmra.mxu0 %v628
      %v1280 = vpop.f32.mrf.mxu0
      %v1281 = vadd.f32 %v1192, %v1280
      %v1282 = vpop.f32.mrf.mxu0
      %v1283 = vadd.f32 %v1194, %v1282
      %1284 = vmatmul.bf16.gmra.mxu0 %v635
      %v1285 = vpop.f32.mrf.mxu0
      %v1286 = vadd.f32 %v1197, %v1285
      %v1287 = vpop.f32.mrf.mxu0
      %v1288 = vadd.f32 %v1199, %v1287
      %1289 = vmatmul.bf16.gmra.mxu0 %v642
      %v1290 = vpop.f32.mrf.mxu0
      %v1291 = vadd.f32 %v1202, %v1290
      %v1292 = vpop.f32.mrf.mxu0
      %v1293 = vadd.f32 %v1204, %v1292
      %1294 = vmatmul.bf16.gmra.mxu0 %v649
      %v1295 = vpop.f32.mrf.mxu0
      %v1296 = vadd.f32 %v1207, %v1295
      %v1297 = vpop.f32.mrf.mxu0
      %v1298 = vadd.f32 %v1209, %v1297
      %1299 = vmatmul.bf16.gmra.mxu0 %v656
      %v1300 = vpop.f32.mrf.mxu0
      %v1301 = vadd.f32 %v1212, %v1300
      %v1302 = vpop.f32.mrf.mxu0
      %v1303 = vadd.f32 %v1214, %v1302
      %1304 = vmatmul.bf16.gmra.mxu0 %v663
      %v1305 = vpop.f32.mrf.mxu0
      %v1306 = vadd.f32 %v1217, %v1305
      %v1307 = vpop.f32.mrf.mxu0
      %v1308 = vadd.f32 %v1219, %v1307
      %1309 = vmatmul.bf16.gmra.mxu0 %v670
      %v1310 = vpop.f32.mrf.mxu0
      %v1311 = vadd.f32 %v1222, %v1310
      %v1312 = vpop.f32.mrf.mxu0
      %v1313 = vadd.f32 %v1224, %v1312
      %1314 = vmatmul.bf16.gmra.mxu0 %v677
      %v1315 = vpop.f32.mrf.mxu0
      %v1316 = vadd.f32 %v1227, %v1315
      %v1317 = vpop.f32.mrf.mxu0
      %v1318 = vadd.f32 %v1229, %v1317
      %1319 = vmatmul.bf16.gmra.mxu0 %v684
      %v1320 = vpop.f32.mrf.mxu0
      %v1321 = vadd.f32 %v1232, %v1320
      %v1322 = vpop.f32.mrf.mxu0
      %v1323 = vadd.f32 %v1234, %v1322
      %1324 = vmatmul.bf16.gmra.mxu0 %v691
      %v1325 = vpop.f32.mrf.mxu0
      %v1326 = vadd.f32 %v1237, %v1325
      %v1327 = vpop.f32.mrf.mxu0
      %v1328 = vadd.f32 %v1239, %v1327
      %1329 = vmatmul.bf16.gmra.mxu0 %v698
      %v1330 = vpop.f32.mrf.mxu0
      %v1331 = vadd.f32 %v1242, %v1330
      %v1332 = vpop.f32.mrf.mxu0
      %v1333 = vadd.f32 %v1244, %v1332
      %1334 = vmatmul.bf16.gmra.mxu0 %v705
      %v1335 = vpop.f32.mrf.mxu0
      %v1336 = vadd.f32 %v1247, %v1335
      %v1337 = vpop.f32.mrf.mxu0
      %v1338 = vadd.f32 %v1249, %v1337
      %1339 = vmatmul.bf16.gmra.mxu0 %v712
      %v1340 = vpop.f32.mrf.mxu0
      %v1341 = vadd.f32 %v1252, %v1340
      %v1342 = vpop.f32.mrf.mxu0
      %v1343 = vadd.f32 %v1254, %v1342
      %1344 = vmatmul.bf16.gmra.mxu0 %v719
      %v1345 = vpop.f32.mrf.mxu0
      %v1346 = vadd.f32 %v1257, %v1345
      %v1347 = vpop.f32.mrf.mxu0
      %v1348 = vadd.f32 %v1259, %v1347
      %1349 = vmatmul.bf16.gmra.mxu0 %v726
      %v1350 = vpop.f32.mrf.mxu0
      %v1351 = vadd.f32 %v1262, %v1350
      %v1352 = vpop.f32.mrf.mxu0
      %v1353 = vadd.f32 %v1264, %v1352
      %1354 = vdwg.mxu0
      %1355 = vmatpush.bf16.msra.mxu0 %v1053
      %1356 = vmatpush.bf16.msra.mxu0 %v1052
      %1357 = vmatpush.bf16.msra.mxu0 %v1051
      %1358 = vmatpush.bf16.msra.mxu0 %v1050
      %1359 = vmatpush.bf16.msra.mxu0 %v1049
      %1360 = vmatpush.bf16.msra.mxu0 %v1048
      %1361 = vmatpush.bf16.msra.mxu0 %v1047
      %1362 = vmatpush.bf16.msra.mxu0 %v1046
      %1363 = vmatmul.bf16.gmra.mxu0 %v622
      %v1364 = vpop.f32.mrf.mxu0
      %v1365 = vadd.f32 %v1276, %v1364
      %v1366 = vpop.f32.mrf.mxu0
      %v1367 = vadd.f32 %v1278, %v1366
      %1368 = vmatmul.bf16.gmra.mxu0 %v629
      %v1369 = vpop.f32.mrf.mxu0
      %v1370 = vadd.f32 %v1281, %v1369
      %v1371 = vpop.f32.mrf.mxu0
      %v1372 = vadd.f32 %v1283, %v1371
      %1373 = vmatmul.bf16.gmra.mxu0 %v636
      %v1374 = vpop.f32.mrf.mxu0
      %v1375 = vadd.f32 %v1286, %v1374
      %v1376 = vpop.f32.mrf.mxu0
      %v1377 = vadd.f32 %v1288, %v1376
      %1378 = vmatmul.bf16.gmra.mxu0 %v643
      %v1379 = vpop.f32.mrf.mxu0
      %v1380 = vadd.f32 %v1291, %v1379
      %v1381 = vpop.f32.mrf.mxu0
      %v1382 = vadd.f32 %v1293, %v1381
      %1383 = vmatmul.bf16.gmra.mxu0 %v650
      %v1384 = vpop.f32.mrf.mxu0
      %v1385 = vadd.f32 %v1296, %v1384
      %v1386 = vpop.f32.mrf.mxu0
      %v1387 = vadd.f32 %v1298, %v1386
      %1388 = vmatmul.bf16.gmra.mxu0 %v657
      %v1389 = vpop.f32.mrf.mxu0
      %v1390 = vadd.f32 %v1301, %v1389
      %v1391 = vpop.f32.mrf.mxu0
      %v1392 = vadd.f32 %v1303, %v1391
      %1393 = vmatmul.bf16.gmra.mxu0 %v664
      %v1394 = vpop.f32.mrf.mxu0
      %v1395 = vadd.f32 %v1306, %v1394
      %v1396 = vpop.f32.mrf.mxu0
      %v1397 = vadd.f32 %v1308, %v1396
      %1398 = vmatmul.bf16.gmra.mxu0 %v671
      %v1399 = vpop.f32.mrf.mxu0
      %v1400 = vadd.f32 %v1311, %v1399
      %v1401 = vpop.f32.mrf.mxu0
      %v1402 = vadd.f32 %v1313, %v1401
      %1403 = vmatmul.bf16.gmra.mxu0 %v678
      %v1404 = vpop.f32.mrf.mxu0
      %v1405 = vadd.f32 %v1316, %v1404
      %v1406 = vpop.f32.mrf.mxu0
      %v1407 = vadd.f32 %v1318, %v1406
      %1408 = vmatmul.bf16.gmra.mxu0 %v685
      %v1409 = vpop.f32.mrf.mxu0
      %v1410 = vadd.f32 %v1321, %v1409
      %v1411 = vpop.f32.mrf.mxu0
      %v1412 = vadd.f32 %v1323, %v1411
      %1413 = vmatmul.bf16.gmra.mxu0 %v692
      %v1414 = vpop.f32.mrf.mxu0
      %v1415 = vadd.f32 %v1326, %v1414
      %v1416 = vpop.f32.mrf.mxu0
      %v1417 = vadd.f32 %v1328, %v1416
      %1418 = vmatmul.bf16.gmra.mxu0 %v699
      %v1419 = vpop.f32.mrf.mxu0
      %v1420 = vadd.f32 %v1331, %v1419
      %v1421 = vpop.f32.mrf.mxu0
      %v1422 = vadd.f32 %v1333, %v1421
      %1423 = vmatmul.bf16.gmra.mxu0 %v706
      %v1424 = vpop.f32.mrf.mxu0
      %v1425 = vadd.f32 %v1336, %v1424
      %v1426 = vpop.f32.mrf.mxu0
      %v1427 = vadd.f32 %v1338, %v1426
      %1428 = vmatmul.bf16.gmra.mxu0 %v713
      %v1429 = vpop.f32.mrf.mxu0
      %v1430 = vadd.f32 %v1341, %v1429
      %v1431 = vpop.f32.mrf.mxu0
      %v1432 = vadd.f32 %v1343, %v1431
      %1433 = vmatmul.bf16.gmra.mxu0 %v720
      %v1434 = vpop.f32.mrf.mxu0
      %v1435 = vadd.f32 %v1346, %v1434
      %v1436 = vpop.f32.mrf.mxu0
      %v1437 = vadd.f32 %v1348, %v1436
      %1438 = vmatmul.bf16.gmra.mxu0 %v727
      %v1439 = vpop.f32.mrf.mxu0
      %v1440 = vadd.f32 %v1351, %v1439
      %v1441 = vpop.f32.mrf.mxu0
      %v1442 = vadd.f32 %v1353, %v1441
      %1443 = vdwg.mxu0
      %1444 = vmatpush.bf16.msra.mxu0 %v1061
      %1445 = vmatpush.bf16.msra.mxu0 %v1060
      %1446 = vmatpush.bf16.msra.mxu0 %v1059
      %1447 = vmatpush.bf16.msra.mxu0 %v1058
      %1448 = vmatpush.bf16.msra.mxu0 %v1057
      %1449 = vmatpush.bf16.msra.mxu0 %v1056
      %1450 = vmatpush.bf16.msra.mxu0 %v1055
      %1451 = vmatpush.bf16.msra.mxu0 %v1054
      %1452 = vmatmul.bf16.gmra.mxu0 %v623
      %v1453 = vpop.f32.mrf.mxu0
      %v1454 = vadd.f32 %v1365, %v1453
      %v1455 = vpop.f32.mrf.mxu0
      %v1456 = vadd.f32 %v1367, %v1455
      %1457 = vmatmul.bf16.gmra.mxu0 %v630
      %v1458 = vpop.f32.mrf.mxu0
      %v1459 = vadd.f32 %v1370, %v1458
      %v1460 = vpop.f32.mrf.mxu0
      %v1461 = vadd.f32 %v1372, %v1460
      %1462 = vmatmul.bf16.gmra.mxu0 %v637
      %v1463 = vpop.f32.mrf.mxu0
      %v1464 = vadd.f32 %v1375, %v1463
      %v1465 = vpop.f32.mrf.mxu0
      %v1466 = vadd.f32 %v1377, %v1465
      %1467 = vmatmul.bf16.gmra.mxu0 %v644
      %v1468 = vpop.f32.mrf.mxu0
      %v1469 = vadd.f32 %v1380, %v1468
      %v1470 = vpop.f32.mrf.mxu0
      %v1471 = vadd.f32 %v1382, %v1470
      %1472 = vmatmul.bf16.gmra.mxu0 %v651
      %v1473 = vpop.f32.mrf.mxu0
      %v1474 = vadd.f32 %v1385, %v1473
      %v1475 = vpop.f32.mrf.mxu0
      %v1476 = vadd.f32 %v1387, %v1475
      %1477 = vmatmul.bf16.gmra.mxu0 %v658
      %v1478 = vpop.f32.mrf.mxu0
      %v1479 = vadd.f32 %v1390, %v1478
      %v1480 = vpop.f32.mrf.mxu0
      %v1481 = vadd.f32 %v1392, %v1480
      %1482 = vmatmul.bf16.gmra.mxu0 %v665
      %v1483 = vpop.f32.mrf.mxu0
      %v1484 = vadd.f32 %v1395, %v1483
      %v1485 = vpop.f32.mrf.mxu0
      %v1486 = vadd.f32 %v1397, %v1485
      %1487 = vmatmul.bf16.gmra.mxu0 %v672
      %v1488 = vpop.f32.mrf.mxu0
      %v1489 = vadd.f32 %v1400, %v1488
      %v1490 = vpop.f32.mrf.mxu0
      %v1491 = vadd.f32 %v1402, %v1490
      %1492 = vmatmul.bf16.gmra.mxu0 %v679
      %v1493 = vpop.f32.mrf.mxu0
      %v1494 = vadd.f32 %v1405, %v1493
      %v1495 = vpop.f32.mrf.mxu0
      %v1496 = vadd.f32 %v1407, %v1495
      %1497 = vmatmul.bf16.gmra.mxu0 %v686
      %v1498 = vpop.f32.mrf.mxu0
      %v1499 = vadd.f32 %v1410, %v1498
      %v1500 = vpop.f32.mrf.mxu0
      %v1501 = vadd.f32 %v1412, %v1500
      %1502 = vmatmul.bf16.gmra.mxu0 %v693
      %v1503 = vpop.f32.mrf.mxu0
      %v1504 = vadd.f32 %v1415, %v1503
      %v1505 = vpop.f32.mrf.mxu0
      %v1506 = vadd.f32 %v1417, %v1505
      %1507 = vmatmul.bf16.gmra.mxu0 %v700
      %v1508 = vpop.f32.mrf.mxu0
      %v1509 = vadd.f32 %v1420, %v1508
      %v1510 = vpop.f32.mrf.mxu0
      %v1511 = vadd.f32 %v1422, %v1510
      %1512 = vmatmul.bf16.gmra.mxu0 %v707
      %v1513 = vpop.f32.mrf.mxu0
      %v1514 = vadd.f32 %v1425, %v1513
      %v1515 = vpop.f32.mrf.mxu0
      %v1516 = vadd.f32 %v1427, %v1515
      %1517 = vmatmul.bf16.gmra.mxu0 %v714
      %v1518 = vpop.f32.mrf.mxu0
      %v1519 = vadd.f32 %v1430, %v1518
      %v1520 = vpop.f32.mrf.mxu0
      %v1521 = vadd.f32 %v1432, %v1520
      %1522 = vmatmul.bf16.gmra.mxu0 %v721
      %v1523 = vpop.f32.mrf.mxu0
      %v1524 = vadd.f32 %v1435, %v1523
      %v1525 = vpop.f32.mrf.mxu0
      %v1526 = vadd.f32 %v1437, %v1525
      %1527 = vmatmul.bf16.gmra.mxu0 %v728
      %v1528 = vpop.f32.mrf.mxu0
      %v1529 = vadd.f32 %v1440, %v1528
      %v1530 = vpop.f32.mrf.mxu0
      %v1531 = vadd.f32 %v1442, %v1530
      %1532 = vdwg.mxu0
      %1533 = vmatpush.bf16.msra.mxu0 %v1069
      %1534 = vmatpush.bf16.msra.mxu0 %v1068
      %1535 = vmatpush.bf16.msra.mxu0 %v1067
      %1536 = vmatpush.bf16.msra.mxu0 %v1066
      %1537 = vmatpush.bf16.msra.mxu0 %v1065
      %1538 = vmatpush.bf16.msra.mxu0 %v1064
      %1539 = vmatpush.bf16.msra.mxu0 %v1063
      %1540 = vmatpush.bf16.msra.mxu0 %v1062
      %1541 = vmatmul.bf16.gmra.mxu0 %v624
      %v1542 = vpop.f32.mrf.mxu0
      %v1543 = vadd.f32 %v1454, %v1542
      %v1544 = vpop.f32.mrf.mxu0
      %v1545 = vadd.f32 %v1456, %v1544
      %1546 = vmatmul.bf16.gmra.mxu0 %v631
      %v1547 = vpop.f32.mrf.mxu0
      %v1548 = vadd.f32 %v1459, %v1547
      %v1549 = vpop.f32.mrf.mxu0
      %v1550 = vadd.f32 %v1461, %v1549
      %1551 = vmatmul.bf16.gmra.mxu0 %v638
      %v1552 = vpop.f32.mrf.mxu0
      %v1553 = vadd.f32 %v1464, %v1552
      %v1554 = vpop.f32.mrf.mxu0
      %v1555 = vadd.f32 %v1466, %v1554
      %1556 = vmatmul.bf16.gmra.mxu0 %v645
      %v1557 = vpop.f32.mrf.mxu0
      %v1558 = vadd.f32 %v1469, %v1557
      %v1559 = vpop.f32.mrf.mxu0
      %v1560 = vadd.f32 %v1471, %v1559
      %1561 = vmatmul.bf16.gmra.mxu0 %v652
      %v1562 = vpop.f32.mrf.mxu0
      %v1563 = vadd.f32 %v1474, %v1562
      %v1564 = vpop.f32.mrf.mxu0
      %v1565 = vadd.f32 %v1476, %v1564
      %1566 = vmatmul.bf16.gmra.mxu0 %v659
      %v1567 = vpop.f32.mrf.mxu0
      %v1568 = vadd.f32 %v1479, %v1567
      %v1569 = vpop.f32.mrf.mxu0
      %v1570 = vadd.f32 %v1481, %v1569
      %1571 = vmatmul.bf16.gmra.mxu0 %v666
      %v1572 = vpop.f32.mrf.mxu0
      %v1573 = vadd.f32 %v1484, %v1572
      %v1574 = vpop.f32.mrf.mxu0
      %v1575 = vadd.f32 %v1486, %v1574
      %1576 = vmatmul.bf16.gmra.mxu0 %v673
      %v1577 = vpop.f32.mrf.mxu0
      %v1578 = vadd.f32 %v1489, %v1577
      %v1579 = vpop.f32.mrf.mxu0
      %v1580 = vadd.f32 %v1491, %v1579
      %1581 = vmatmul.bf16.gmra.mxu0 %v680
      %v1582 = vpop.f32.mrf.mxu0
      %v1583 = vadd.f32 %v1494, %v1582
      %v1584 = vpop.f32.mrf.mxu0
      %v1585 = vadd.f32 %v1496, %v1584
      %1586 = vmatmul.bf16.gmra.mxu0 %v687
      %v1587 = vpop.f32.mrf.mxu0
      %v1588 = vadd.f32 %v1499, %v1587
      %v1589 = vpop.f32.mrf.mxu0
      %v1590 = vadd.f32 %v1501, %v1589
      %1591 = vmatmul.bf16.gmra.mxu0 %v694
      %v1592 = vpop.f32.mrf.mxu0
      %v1593 = vadd.f32 %v1504, %v1592
      %v1594 = vpop.f32.mrf.mxu0
      %v1595 = vadd.f32 %v1506, %v1594
      %1596 = vmatmul.bf16.gmra.mxu0 %v701
      %v1597 = vpop.f32.mrf.mxu0
      %v1598 = vadd.f32 %v1509, %v1597
      %v1599 = vpop.f32.mrf.mxu0
      %v1600 = vadd.f32 %v1511, %v1599
      %1601 = vmatmul.bf16.gmra.mxu0 %v708
      %v1602 = vpop.f32.mrf.mxu0
      %v1603 = vadd.f32 %v1514, %v1602
      %v1604 = vpop.f32.mrf.mxu0
      %v1605 = vadd.f32 %v1516, %v1604
      %1606 = vmatmul.bf16.gmra.mxu0 %v715
      %v1607 = vpop.f32.mrf.mxu0
      %v1608 = vadd.f32 %v1519, %v1607
      %v1609 = vpop.f32.mrf.mxu0
      %v1610 = vadd.f32 %v1521, %v1609
      %1611 = vmatmul.bf16.gmra.mxu0 %v722
      %v1612 = vpop.f32.mrf.mxu0
      %v1613 = vadd.f32 %v1524, %v1612
      %v1614 = vpop.f32.mrf.mxu0
      %v1615 = vadd.f32 %v1526, %v1614
      %1616 = vmatmul.bf16.gmra.mxu0 %v729
      %v1617 = vpop.f32.mrf.mxu0
      %v1618 = vadd.f32 %v1529, %v1617
      %v1619 = vpop.f32.mrf.mxu0
      %v1620 = vadd.f32 %v1531, %v1619
      %1621 = vdwg.mxu0
      %1622 = vmatpush.bf16.msra.mxu0 %v1077
      %1623 = vmatpush.bf16.msra.mxu0 %v1076
      %1624 = vmatpush.bf16.msra.mxu0 %v1075
      %1625 = vmatpush.bf16.msra.mxu0 %v1074
      %1626 = vmatpush.bf16.msra.mxu0 %v1073
      %1627 = vmatpush.bf16.msra.mxu0 %v1072
      %1628 = vmatpush.bf16.msra.mxu0 %v1071
      %1629 = vmatpush.bf16.msra.mxu0 %v1070
      %1630 = vmatmul.bf16.gmra.mxu0 %v625
      %v1631 = vpop.f32.mrf.mxu0
      %v1632 = vadd.f32 %v1543, %v1631
      %v1633 = vpop.f32.mrf.mxu0
      %v1634 = vadd.f32 %v1545, %v1633
      %1635 = vmatmul.bf16.gmra.mxu0 %v632
      %v1636 = vpop.f32.mrf.mxu0
      %v1637 = vadd.f32 %v1548, %v1636
      %v1638 = vpop.f32.mrf.mxu0
      %v1639 = vadd.f32 %v1550, %v1638
      %1640 = vmatmul.bf16.gmra.mxu0 %v639
      %v1641 = vpop.f32.mrf.mxu0
      %v1642 = vadd.f32 %v1553, %v1641
      %v1643 = vpop.f32.mrf.mxu0
      %v1644 = vadd.f32 %v1555, %v1643
      %1645 = vmatmul.bf16.gmra.mxu0 %v646
      %v1646 = vpop.f32.mrf.mxu0
      %v1647 = vadd.f32 %v1558, %v1646
      %v1648 = vpop.f32.mrf.mxu0
      %v1649 = vadd.f32 %v1560, %v1648
      %1650 = vmatmul.bf16.gmra.mxu0 %v653
      %v1651 = vpop.f32.mrf.mxu0
      %v1652 = vadd.f32 %v1563, %v1651
      %v1653 = vpop.f32.mrf.mxu0
      %v1654 = vadd.f32 %v1565, %v1653
      %1655 = vmatmul.bf16.gmra.mxu0 %v660
      %v1656 = vpop.f32.mrf.mxu0
      %v1657 = vadd.f32 %v1568, %v1656
      %v1658 = vpop.f32.mrf.mxu0
      %v1659 = vadd.f32 %v1570, %v1658
      %1660 = vmatmul.bf16.gmra.mxu0 %v667
      %v1661 = vpop.f32.mrf.mxu0
      %v1662 = vadd.f32 %v1573, %v1661
      %v1663 = vpop.f32.mrf.mxu0
      %v1664 = vadd.f32 %v1575, %v1663
      %1665 = vmatmul.bf16.gmra.mxu0 %v674
      %v1666 = vpop.f32.mrf.mxu0
      %v1667 = vadd.f32 %v1578, %v1666
      %v1668 = vpop.f32.mrf.mxu0
      %v1669 = vadd.f32 %v1580, %v1668
      %1670 = vmatmul.bf16.gmra.mxu0 %v681
      %v1671 = vpop.f32.mrf.mxu0
      %v1672 = vadd.f32 %v1583, %v1671
      %v1673 = vpop.f32.mrf.mxu0
      %v1674 = vadd.f32 %v1585, %v1673
      %1675 = vmatmul.bf16.gmra.mxu0 %v688
      %v1676 = vpop.f32.mrf.mxu0
      %v1677 = vadd.f32 %v1588, %v1676
      %v1678 = vpop.f32.mrf.mxu0
      %v1679 = vadd.f32 %v1590, %v1678
      %1680 = vmatmul.bf16.gmra.mxu0 %v695
      %v1681 = vpop.f32.mrf.mxu0
      %v1682 = vadd.f32 %v1593, %v1681
      %v1683 = vpop.f32.mrf.mxu0
      %v1684 = vadd.f32 %v1595, %v1683
      %1685 = vmatmul.bf16.gmra.mxu0 %v702
      %v1686 = vpop.f32.mrf.mxu0
      %v1687 = vadd.f32 %v1598, %v1686
      %v1688 = vpop.f32.mrf.mxu0
      %v1689 = vadd.f32 %v1600, %v1688
      %1690 = vmatmul.bf16.gmra.mxu0 %v709
      %v1691 = vpop.f32.mrf.mxu0
      %v1692 = vadd.f32 %v1603, %v1691
      %v1693 = vpop.f32.mrf.mxu0
      %v1694 = vadd.f32 %v1605, %v1693
      %1695 = vmatmul.bf16.gmra.mxu0 %v716
      %v1696 = vpop.f32.mrf.mxu0
      %v1697 = vadd.f32 %v1608, %v1696
      %v1698 = vpop.f32.mrf.mxu0
      %v1699 = vadd.f32 %v1610, %v1698
      %1700 = vmatmul.bf16.gmra.mxu0 %v723
      %v1701 = vpop.f32.mrf.mxu0
      %v1702 = vadd.f32 %v1613, %v1701
      %v1703 = vpop.f32.mrf.mxu0
      %v1704 = vadd.f32 %v1615, %v1703
      %1705 = vmatmul.bf16.gmra.mxu0 %v730
      %v1706 = vpop.f32.mrf.mxu0
      %v1707 = vadd.f32 %v1618, %v1706
      %v1708 = vpop.f32.mrf.mxu0
      %v1709 = vadd.f32 %v1620, %v1708
      %1710 = vdwg.mxu0
      %1711 = vmatpush.bf16.msra.mxu0 0
      %1712 = vmatpush.bf16.msra.mxu0 0
      %1713 = vmatpush.bf16.msra.mxu0 0
      %1714 = vmatpush.bf16.msra.mxu0 0
      %1715 = vmatpush.bf16.msra.mxu0 0
      %1716 = vmatpush.bf16.msra.mxu0 0
      %1717 = vmatpush.bf16.msra.mxu0 0
      %1718 = vmatpush.bf16.msra.mxu0 %v1078
      %1719 = vmatmul.bf16.gmra.mxu0 %v1130
      %v1720 = vpop.f32.mrf.mxu0
      %v1721 = vadd.f32 %v1632, %v1720
      %v1722 = vpop.f32.mrf.mxu0
      %v1723 = vadd.f32 %v1634, %v1722
      %1724 = vmatmul.bf16.gmra.mxu0 %v1133
      %v1725 = vpop.f32.mrf.mxu0
      %v1726 = vadd.f32 %v1637, %v1725
      %v1727 = vpop.f32.mrf.mxu0
      %v1728 = vadd.f32 %v1639, %v1727
      %1729 = vmatmul.bf16.gmra.mxu0 %v1136
      %v1730 = vpop.f32.mrf.mxu0
      %v1731 = vadd.f32 %v1642, %v1730
      %v1732 = vpop.f32.mrf.mxu0
      %v1733 = vadd.f32 %v1644, %v1732
      %1734 = vmatmul.bf16.gmra.mxu0 %v1139
      %v1735 = vpop.f32.mrf.mxu0
      %v1736 = vadd.f32 %v1647, %v1735
      %v1737 = vpop.f32.mrf.mxu0
      %v1738 = vadd.f32 %v1649, %v1737
      %1739 = vmatmul.bf16.gmra.mxu0 %v1142
      %v1740 = vpop.f32.mrf.mxu0
      %v1741 = vadd.f32 %v1652, %v1740
      %v1742 = vpop.f32.mrf.mxu0
      %v1743 = vadd.f32 %v1654, %v1742
      %1744 = vmatmul.bf16.gmra.mxu0 %v1145
      %v1745 = vpop.f32.mrf.mxu0
      %v1746 = vadd.f32 %v1657, %v1745
      %v1747 = vpop.f32.mrf.mxu0
      %v1748 = vadd.f32 %v1659, %v1747
      %1749 = vmatmul.bf16.gmra.mxu0 %v1148
      %v1750 = vpop.f32.mrf.mxu0
      %v1751 = vadd.f32 %v1662, %v1750
      %v1752 = vpop.f32.mrf.mxu0
      %v1753 = vadd.f32 %v1664, %v1752
      %1754 = vmatmul.bf16.gmra.mxu0 %v1151
      %v1755 = vpop.f32.mrf.mxu0
      %v1756 = vadd.f32 %v1667, %v1755
      %v1757 = vpop.f32.mrf.mxu0
      %v1758 = vadd.f32 %v1669, %v1757
      %1759 = vmatmul.bf16.gmra.mxu0 %v1154
      %v1760 = vpop.f32.mrf.mxu0
      %v1761 = vadd.f32 %v1672, %v1760
      %v1762 = vpop.f32.mrf.mxu0
      %v1763 = vadd.f32 %v1674, %v1762
      %1764 = vmatmul.bf16.gmra.mxu0 %v1157
      %v1765 = vpop.f32.mrf.mxu0
      %v1766 = vadd.f32 %v1677, %v1765
      %v1767 = vpop.f32.mrf.mxu0
      %v1768 = vadd.f32 %v1679, %v1767
      %1769 = vmatmul.bf16.gmra.mxu0 %v1160
      %v1770 = vpop.f32.mrf.mxu0
      %v1771 = vadd.f32 %v1682, %v1770
      %v1772 = vpop.f32.mrf.mxu0
      %v1773 = vadd.f32 %v1684, %v1772
      %1774 = vmatmul.bf16.gmra.mxu0 %v1163
      %v1775 = vpop.f32.mrf.mxu0
      %v1776 = vadd.f32 %v1687, %v1775
      %v1777 = vpop.f32.mrf.mxu0
      %v1778 = vadd.f32 %v1689, %v1777
      %1779 = vmatmul.bf16.gmra.mxu0 %v1166
      %v1780 = vpop.f32.mrf.mxu0
      %v1781 = vadd.f32 %v1692, %v1780
      %v1782 = vpop.f32.mrf.mxu0
      %v1783 = vadd.f32 %v1694, %v1782
      %1784 = vmatmul.bf16.gmra.mxu0 %v1169
      %v1785 = vpop.f32.mrf.mxu0
      %v1786 = vadd.f32 %v1697, %v1785
      %v1787 = vpop.f32.mrf.mxu0
      %v1788 = vadd.f32 %v1699, %v1787
      %1789 = vmatmul.bf16.gmra.mxu0 %v1172
      %v1790 = vpop.f32.mrf.mxu0
      %v1791 = vadd.f32 %v1702, %v1790
      %v1792 = vpop.f32.mrf.mxu0
      %v1793 = vadd.f32 %v1704, %v1792
      %1794 = vmatmul.bf16.gmra.mxu0 %v1175
      %v1795 = vpop.f32.mrf.mxu0
      %v1796 = vadd.f32 %v1707, %v1795
      %v1797 = vpop.f32.mrf.mxu0
      %v1798 = vadd.f32 %v1709, %v1797
      %1799 = vdwg.mxu0
      %v1800 = vmax.f32 %v1721, 0.0
      %v1801 = vmax.f32 %v1723, 0.0
      %v1802 = vmax.f32 %v1726, 0.0
      %v1803 = vmax.f32 %v1728, 0.0
      %v1804 = vmax.f32 %v1731, 0.0
      %v1805 = vmax.f32 %v1733, 0.0
      %v1806 = vmax.f32 %v1736, 0.0
      %v1807 = vmax.f32 %v1738, 0.0
      %v1808 = vmax.f32 %v1741, 0.0
      %v1809 = vmax.f32 %v1743, 0.0
      %v1810 = vmax.f32 %v1746, 0.0
      %v1811 = vmax.f32 %v1748, 0.0
      %v1812 = vmax.f32 %v1751, 0.0
      %v1813 = vmax.f32 %v1753, 0.0
      %v1814 = vmax.f32 %v1756, 0.0
      %v1815 = vmax.f32 %v1758, 0.0
      %v1816 = vmax.f32 %v1761, 0.0
      %v1817 = vmax.f32 %v1763, 0.0
      %v1818 = vmax.f32 %v1766, 0.0
      %v1819 = vmax.f32 %v1768, 0.0
      %v1820 = vmax.f32 %v1771, 0.0
      %v1821 = vmax.f32 %v1773, 0.0
      %v1822 = vmax.f32 %v1776, 0.0
      %v1823 = vmax.f32 %v1778, 0.0
      %v1824 = vmax.f32 %v1781, 0.0
      %v1825 = vmax.f32 %v1783, 0.0
      %v1826 = vmax.f32 %v1786, 0.0
      %v1827 = vmax.f32 %v1788, 0.0
      %v1828 = vmax.f32 %v1791, 0.0
      %v1829 = vmax.f32 %v1793, 0.0
      %v1830 = vmax.f32 %v1796, 0.0
      %v1831 = vmax.f32 %v1798, 0.0
      %v1832 = vpack.c.bf16 %v1801, %v1800
      %v1833 = vpack.c.bf16 %v1803, %v1802
      %v1834 = vpack.c.bf16 %v1805, %v1804
      %v1835 = vpack.c.bf16 %v1807, %v1806
      %v1836 = vpack.c.bf16 %v1809, %v1808
      %v1837 = vpack.c.bf16 %v1811, %v1810
      %v1838 = vpack.c.bf16 %v1813, %v1812
      %v1839 = vpack.c.bf16 %v1815, %v1814
      %v1840 = vpack.c.bf16 %v1817, %v1816
      %v1841 = vpack.c.bf16 %v1819, %v1818
      %v1842 = vpack.c.bf16 %v1821, %v1820
      %v1843 = vpack.c.bf16 %v1823, %v1822
      %v1844 = vpack.c.bf16 %v1825, %v1824
      %v1845 = vpack.c.bf16 %v1827, %v1826
      %v1846 = vpack.c.bf16 %v1829, %v1828
      %v1847 = vpack.c.bf16 %v1831, %v1830
      %v1848 = vld [vmem:[%s3] sm:$0xf]
      %v1849 = vld [vmem:[%s3 + $0x4] sm:$0xf]
      %v1850 = vld [vmem:[%s3 + $0x8] sm:$0xf]
      %v1851 = vld [vmem:[%s3 + $0xc] sm:$0xf]
      %v1852 = vld [vmem:[%s3 + $0x10] sm:$0xf]
      %v1853 = vld [vmem:[%s3 + $0x14] sm:$0xf]
      %v1854 = vld [vmem:[%s3 + $0x18] sm:$0xf]
      %v1855 = vld [vmem:[%s3 + $0x1c] sm:$0xf]
      %v1856 = vld [vmem:[%s3 + $0x20] sm:$0xf]
      %v1857 = vld [vmem:[%s3 + $0x24] sm:$0xf]
      %v1858 = vld [vmem:[%s3 + $0x28] sm:$0xf]
      %v1859 = vld [vmem:[%s3 + $0x2c] sm:$0xf]
      %v1860 = vld [vmem:[%s3 + $0x30] sm:$0xf]
      %v1861 = vld [vmem:[%s3 + $0x34] sm:$0xf]
      %v1862 = vld [vmem:[%s3 + $0x38] sm:$0xf]
      %v1863 = vld [vmem:[%s3 + $0x3c] sm:$0xf]
      %v1864 = vld [vmem:[%s4] sm:$0x1]
      %v1866 = vperm.slane %v1864, 0
      %v1884 = vunpack.c.l.b16 %v1848
      %v1885 = vunpack.c.l.b16 %v1849
      %v1886 = vunpack.c.l.b16 %v1850
      %v1887 = vunpack.c.l.b16 %v1851
      %v1888 = vunpack.c.l.b16 %v1852
      %v1889 = vunpack.c.l.b16 %v1853
      %v1890 = vunpack.c.l.b16 %v1854
      %v1891 = vunpack.c.l.b16 %v1855
      %v1892 = vunpack.c.l.b16 %v1856
      %v1893 = vunpack.c.l.b16 %v1857
      %v1894 = vunpack.c.l.b16 %v1858
      %v1895 = vunpack.c.l.b16 %v1859
      %v1896 = vunpack.c.l.b16 %v1860
      %v1897 = vunpack.c.l.b16 %v1861
      %v1898 = vunpack.c.l.b16 %v1862
      %v1899 = vunpack.c.l.b16 %v1863
      %v1900 = vpack.c.b16 %v1885, %v1884
      %v1901 = vpack.c.b16 %v1887, %v1886
      %v1902 = vpack.c.b16 %v1889, %v1888
      %v1903 = vpack.c.b16 %v1891, %v1890
      %v1904 = vpack.c.b16 %v1893, %v1892
      %v1905 = vpack.c.b16 %v1895, %v1894
      %v1906 = vpack.c.b16 %v1897, %v1896
      %v1907 = vpack.c.b16 %v1899, %v1898
      %1916 = vmatpush.bf16.msra.mxu0 %v1907
      %1917 = vmatpush.bf16.msra.mxu0 %v1906
      %1918 = vmatpush.bf16.msra.mxu0 %v1905
      %1919 = vmatpush.bf16.msra.mxu0 %v1904
      %1920 = vmatpush.bf16.msra.mxu0 %v1903
      %1921 = vmatpush.bf16.msra.mxu0 %v1902
      %1922 = vmatpush.bf16.msra.mxu0 %v1901
      %1923 = vmatpush.bf16.msra.mxu0 %v1900
      %1924 = vmatmul.bf16.gmra.mxu0 %v1832
      %v1925 = vpop.f32.mrf.mxu0
      %v1926 = vadd.f32 %v1866, %v1925
      %v1927 = vpop.f32.mrf.mxu0
      %v1928 = vadd.f32 %v1866, %v1927
      %1929 = vmatmul.bf16.gmra.mxu0 %v1833
      %v1930 = vpop.f32.mrf.mxu0
      %v1931 = vadd.f32 %v1866, %v1930
      %v1932 = vpop.f32.mrf.mxu0
      %v1933 = vadd.f32 %v1866, %v1932
      %1934 = vmatmul.bf16.gmra.mxu0 %v1834
      %v1935 = vpop.f32.mrf.mxu0
      %v1936 = vadd.f32 %v1866, %v1935
      %v1937 = vpop.f32.mrf.mxu0
      %v1938 = vadd.f32 %v1866, %v1937
      %1939 = vmatmul.bf16.gmra.mxu0 %v1835
      %v1940 = vpop.f32.mrf.mxu0
      %v1941 = vadd.f32 %v1866, %v1940
      %v1942 = vpop.f32.mrf.mxu0
      %v1943 = vadd.f32 %v1866, %v1942
      %1944 = vmatmul.bf16.gmra.mxu0 %v1836
      %v1945 = vpop.f32.mrf.mxu0
      %v1946 = vadd.f32 %v1866, %v1945
      %v1947 = vpop.f32.mrf.mxu0
      %v1948 = vadd.f32 %v1866, %v1947
      %1949 = vmatmul.bf16.gmra.mxu0 %v1837
      %v1950 = vpop.f32.mrf.mxu0
      %v1951 = vadd.f32 %v1866, %v1950
      %v1952 = vpop.f32.mrf.mxu0
      %v1953 = vadd.f32 %v1866, %v1952
      %1954 = vmatmul.bf16.gmra.mxu0 %v1838
      %v1955 = vpop.f32.mrf.mxu0
      %v1956 = vadd.f32 %v1866, %v1955
      %v1957 = vpop.f32.mrf.mxu0
      %v1958 = vadd.f32 %v1866, %v1957
      %1959 = vmatmul.bf16.gmra.mxu0 %v1839
      %v1960 = vpop.f32.mrf.mxu0
      %v1961 = vadd.f32 %v1866, %v1960
      %v1962 = vpop.f32.mrf.mxu0
      %v1963 = vadd.f32 %v1866, %v1962
      %1964 = vmatmul.bf16.gmra.mxu0 %v1840
      %v1965 = vpop.f32.mrf.mxu0
      %v1966 = vadd.f32 %v1866, %v1965
      %v1967 = vpop.f32.mrf.mxu0
      %v1968 = vadd.f32 %v1866, %v1967
      %1969 = vmatmul.bf16.gmra.mxu0 %v1841
      %v1970 = vpop.f32.mrf.mxu0
      %v1971 = vadd.f32 %v1866, %v1970
      %v1972 = vpop.f32.mrf.mxu0
      %v1973 = vadd.f32 %v1866, %v1972
      %1974 = vmatmul.bf16.gmra.mxu0 %v1842
      %v1975 = vpop.f32.mrf.mxu0
      %v1976 = vadd.f32 %v1866, %v1975
      %v1977 = vpop.f32.mrf.mxu0
      %v1978 = vadd.f32 %v1866, %v1977
      %1979 = vmatmul.bf16.gmra.mxu0 %v1843
      %v1980 = vpop.f32.mrf.mxu0
      %v1981 = vadd.f32 %v1866, %v1980
      %v1982 = vpop.f32.mrf.mxu0
      %v1983 = vadd.f32 %v1866, %v1982
      %1984 = vmatmul.bf16.gmra.mxu0 %v1844
      %v1985 = vpop.f32.mrf.mxu0
      %v1986 = vadd.f32 %v1866, %v1985
      %v1987 = vpop.f32.mrf.mxu0
      %v1988 = vadd.f32 %v1866, %v1987
      %1989 = vmatmul.bf16.gmra.mxu0 %v1845
      %v1990 = vpop.f32.mrf.mxu0
      %v1991 = vadd.f32 %v1866, %v1990
      %v1992 = vpop.f32.mrf.mxu0
      %v1993 = vadd.f32 %v1866, %v1992
      %1994 = vmatmul.bf16.gmra.mxu0 %v1846
      %v1995 = vpop.f32.mrf.mxu0
      %v1996 = vadd.f32 %v1866, %v1995
      %v1997 = vpop.f32.mrf.mxu0
      %v1998 = vadd.f32 %v1866, %v1997
      %1999 = vmatmul.bf16.gmra.mxu0 %v1847
      %v2000 = vpop.f32.mrf.mxu0
      %v2001 = vadd.f32 %v1866, %v2000
      %v2002 = vpop.f32.mrf.mxu0
      %v2003 = vadd.f32 %v1866, %v2002
      %2004 = vdwg.mxu0
      %v2005 = vmax.f32 %v1926, 0.0
      %v2006 = vmax.f32 %v1928, 0.0
      %v2007 = vmax.f32 %v1931, 0.0
      %v2008 = vmax.f32 %v1933, 0.0
      %v2009 = vmax.f32 %v1936, 0.0
      %v2010 = vmax.f32 %v1938, 0.0
      %v2011 = vmax.f32 %v1941, 0.0
      %v2012 = vmax.f32 %v1943, 0.0
      %v2013 = vmax.f32 %v1946, 0.0
      %v2014 = vmax.f32 %v1948, 0.0
      %v2015 = vmax.f32 %v1951, 0.0
      %v2016 = vmax.f32 %v1953, 0.0
      %v2017 = vmax.f32 %v1956, 0.0
      %v2018 = vmax.f32 %v1958, 0.0
      %v2019 = vmax.f32 %v1961, 0.0
      %v2020 = vmax.f32 %v1963, 0.0
      %v2021 = vmax.f32 %v1966, 0.0
      %v2022 = vmax.f32 %v1968, 0.0
      %v2023 = vmax.f32 %v1971, 0.0
      %v2024 = vmax.f32 %v1973, 0.0
      %v2025 = vmax.f32 %v1976, 0.0
      %v2026 = vmax.f32 %v1978, 0.0
      %v2027 = vmax.f32 %v1981, 0.0
      %v2028 = vmax.f32 %v1983, 0.0
      %v2029 = vmax.f32 %v1986, 0.0
      %v2030 = vmax.f32 %v1988, 0.0
      %v2031 = vmax.f32 %v1991, 0.0
      %v2032 = vmax.f32 %v1993, 0.0
      %v2033 = vmax.f32 %v1996, 0.0
      %v2034 = vmax.f32 %v1998, 0.0
      %v2035 = vmax.f32 %v2001, 0.0
      %v2036 = vmax.f32 %v2003, 0.0
      %v2037 = vpack.c.bf16 %v2006, %v2005
      %v2038 = vpack.c.bf16 %v2008, %v2007
      %v2039 = vpack.c.bf16 %v2010, %v2009
      %v2040 = vpack.c.bf16 %v2012, %v2011
      %v2041 = vpack.c.bf16 %v2014, %v2013
      %v2042 = vpack.c.bf16 %v2016, %v2015
      %v2043 = vpack.c.bf16 %v2018, %v2017
      %v2044 = vpack.c.bf16 %v2020, %v2019
      %v2045 = vpack.c.bf16 %v2022, %v2021
      %v2046 = vpack.c.bf16 %v2024, %v2023
      %v2047 = vpack.c.bf16 %v2026, %v2025
      %v2048 = vpack.c.bf16 %v2028, %v2027
      %v2049 = vpack.c.bf16 %v2030, %v2029
      %v2050 = vpack.c.bf16 %v2032, %v2031
      %v2051 = vpack.c.bf16 %v2034, %v2033
      %v2052 = vpack.c.bf16 %v2036, %v2035
      %v2053 = vld [vmem:[%s5] sm:$0xf]
      %v2054 = vld [vmem:[%s5 + $0x4] sm:$0xf]
      %v2055 = vld [vmem:[%s5 + $0x8] sm:$0xf]
      %v2056 = vld [vmem:[%s5 + $0xc] sm:$0xf]
      %v2057 = vld [vmem:[%s5 + $0x10] sm:$0xf]
      %v2058 = vld [vmem:[%s5 + $0x14] sm:$0xf]
      %v2059 = vld [vmem:[%s5 + $0x18] sm:$0xf]
      %v2060 = vld [vmem:[%s5 + $0x1c] sm:$0xf]
      %v2061 = vld [vmem:[%s6] sm:$0x1]
      %v2063 = vperm.slane %v2061, 0
      %v2073 = vunpack.c.l.b16 %v2053
      %v2074 = vunpack.c.l.b16 %v2054
      %v2075 = vunpack.c.l.b16 %v2055
      %v2076 = vunpack.c.l.b16 %v2056
      %v2077 = vunpack.c.l.b16 %v2057
      %v2078 = vunpack.c.l.b16 %v2058
      %v2079 = vunpack.c.l.b16 %v2059
      %v2080 = vunpack.c.l.b16 %v2060
      %v2081 = vpack.c.b16 %v2074, %v2073
      %v2082 = vpack.c.b16 %v2076, %v2075
      %v2083 = vpack.c.b16 %v2078, %v2077
      %v2084 = vpack.c.b16 %v2080, %v2079
      %vm2089 = vcmask 523264
      %v2091 = vsel %vm2089, %v2037, 0
      %v2094 = vsel %vm2089, %v2038, 0
      %v2097 = vsel %vm2089, %v2039, 0
      %v2100 = vsel %vm2089, %v2040, 0
      %v2103 = vsel %vm2089, %v2041, 0
      %v2106 = vsel %vm2089, %v2042, 0
      %v2109 = vsel %vm2089, %v2043, 0
      %v2112 = vsel %vm2089, %v2044, 0
      %v2115 = vsel %vm2089, %v2045, 0
      %v2118 = vsel %vm2089, %v2046, 0
      %v2121 = vsel %vm2089, %v2047, 0
      %v2124 = vsel %vm2089, %v2048, 0
      %v2127 = vsel %vm2089, %v2049, 0
      %v2130 = vsel %vm2089, %v2050, 0
      %v2133 = vsel %vm2089, %v2051, 0
      %v2136 = vsel %vm2089, %v2052, 0
      %2138 = vmatpush.bf16.msra.mxu0 0
      %2139 = vmatpush.bf16.msra.mxu0 0
      %2140 = vmatpush.bf16.msra.mxu0 0
      %2141 = vmatpush.bf16.msra.mxu0 0
      %2142 = vmatpush.bf16.msra.mxu0 %v2084
      %2143 = vmatpush.bf16.msra.mxu0 %v2083
      %2144 = vmatpush.bf16.msra.mxu0 %v2082
      %2145 = vmatpush.bf16.msra.mxu0 %v2081
      %2146 = vmatmul.bf16.gmra.mxu0 %v2091
      %v2147 = vpop.f32.mrf.mxu0
      %v2148 = vadd.f32 %v2063, %v2147
      %v2149 = vpop.f32.mrf.mxu0
      %v2150 = vadd.f32 %v2063, %v2149
      %2151 = vmatmul.bf16.gmra.mxu0 %v2094
      %v2152 = vpop.f32.mrf.mxu0
      %v2153 = vadd.f32 %v2063, %v2152
      %v2154 = vpop.f32.mrf.mxu0
      %v2155 = vadd.f32 %v2063, %v2154
      %2156 = vmatmul.bf16.gmra.mxu0 %v2097
      %v2157 = vpop.f32.mrf.mxu0
      %v2158 = vadd.f32 %v2063, %v2157
      %v2159 = vpop.f32.mrf.mxu0
      %v2160 = vadd.f32 %v2063, %v2159
      %2161 = vmatmul.bf16.gmra.mxu0 %v2100
      %v2162 = vpop.f32.mrf.mxu0
      %v2163 = vadd.f32 %v2063, %v2162
      %v2164 = vpop.f32.mrf.mxu0
      %v2165 = vadd.f32 %v2063, %v2164
      %2166 = vmatmul.bf16.gmra.mxu0 %v2103
      %v2167 = vpop.f32.mrf.mxu0
      %v2168 = vadd.f32 %v2063, %v2167
      %v2169 = vpop.f32.mrf.mxu0
      %v2170 = vadd.f32 %v2063, %v2169
      %2171 = vmatmul.bf16.gmra.mxu0 %v2106
      %v2172 = vpop.f32.mrf.mxu0
      %v2173 = vadd.f32 %v2063, %v2172
      %v2174 = vpop.f32.mrf.mxu0
      %v2175 = vadd.f32 %v2063, %v2174
      %2176 = vmatmul.bf16.gmra.mxu0 %v2109
      %v2177 = vpop.f32.mrf.mxu0
      %v2178 = vadd.f32 %v2063, %v2177
      %v2179 = vpop.f32.mrf.mxu0
      %v2180 = vadd.f32 %v2063, %v2179
      %2181 = vmatmul.bf16.gmra.mxu0 %v2112
      %v2182 = vpop.f32.mrf.mxu0
      %v2183 = vadd.f32 %v2063, %v2182
      %v2184 = vpop.f32.mrf.mxu0
      %v2185 = vadd.f32 %v2063, %v2184
      %2186 = vmatmul.bf16.gmra.mxu0 %v2115
      %v2187 = vpop.f32.mrf.mxu0
      %v2188 = vadd.f32 %v2063, %v2187
      %v2189 = vpop.f32.mrf.mxu0
      %v2190 = vadd.f32 %v2063, %v2189
      %2191 = vmatmul.bf16.gmra.mxu0 %v2118
      %v2192 = vpop.f32.mrf.mxu0
      %v2193 = vadd.f32 %v2063, %v2192
      %v2194 = vpop.f32.mrf.mxu0
      %v2195 = vadd.f32 %v2063, %v2194
      %2196 = vmatmul.bf16.gmra.mxu0 %v2121
      %v2197 = vpop.f32.mrf.mxu0
      %v2198 = vadd.f32 %v2063, %v2197
      %v2199 = vpop.f32.mrf.mxu0
      %v2200 = vadd.f32 %v2063, %v2199
      %2201 = vmatmul.bf16.gmra.mxu0 %v2124
      %v2202 = vpop.f32.mrf.mxu0
      %v2203 = vadd.f32 %v2063, %v2202
      %v2204 = vpop.f32.mrf.mxu0
      %v2205 = vadd.f32 %v2063, %v2204
      %2206 = vmatmul.bf16.gmra.mxu0 %v2127
      %v2207 = vpop.f32.mrf.mxu0
      %v2208 = vadd.f32 %v2063, %v2207
      %v2209 = vpop.f32.mrf.mxu0
      %v2210 = vadd.f32 %v2063, %v2209
      %2211 = vmatmul.bf16.gmra.mxu0 %v2130
      %v2212 = vpop.f32.mrf.mxu0
      %v2213 = vadd.f32 %v2063, %v2212
      %v2214 = vpop.f32.mrf.mxu0
      %v2215 = vadd.f32 %v2063, %v2214
      %2216 = vmatmul.bf16.gmra.mxu0 %v2133
      %v2217 = vpop.f32.mrf.mxu0
      %v2218 = vadd.f32 %v2063, %v2217
      %v2219 = vpop.f32.mrf.mxu0
      %v2220 = vadd.f32 %v2063, %v2219
      %2221 = vmatmul.bf16.gmra.mxu0 %v2136
      %v2222 = vpop.f32.mrf.mxu0
      %v2223 = vadd.f32 %v2063, %v2222
      %v2224 = vpop.f32.mrf.mxu0
      %v2225 = vadd.f32 %v2063, %v2224
      %2226 = vdwg.mxu0
      %v2227 = vmax.f32 %v2148, 0.0
      %v2228 = vmax.f32 %v2150, 0.0
      %v2229 = vmax.f32 %v2153, 0.0
      %v2230 = vmax.f32 %v2155, 0.0
      %v2231 = vmax.f32 %v2158, 0.0
      %v2232 = vmax.f32 %v2160, 0.0
      %v2233 = vmax.f32 %v2163, 0.0
      %v2234 = vmax.f32 %v2165, 0.0
      %v2235 = vmax.f32 %v2168, 0.0
      %v2236 = vmax.f32 %v2170, 0.0
      %v2237 = vmax.f32 %v2173, 0.0
      %v2238 = vmax.f32 %v2175, 0.0
      %v2239 = vmax.f32 %v2178, 0.0
      %v2240 = vmax.f32 %v2180, 0.0
      %v2241 = vmax.f32 %v2183, 0.0
      %v2242 = vmax.f32 %v2185, 0.0
      %v2243 = vmax.f32 %v2188, 0.0
      %v2244 = vmax.f32 %v2190, 0.0
      %v2245 = vmax.f32 %v2193, 0.0
      %v2246 = vmax.f32 %v2195, 0.0
      %v2247 = vmax.f32 %v2198, 0.0
      %v2248 = vmax.f32 %v2200, 0.0
      %v2249 = vmax.f32 %v2203, 0.0
      %v2250 = vmax.f32 %v2205, 0.0
      %v2251 = vmax.f32 %v2208, 0.0
      %v2252 = vmax.f32 %v2210, 0.0
      %v2253 = vmax.f32 %v2213, 0.0
      %v2254 = vmax.f32 %v2215, 0.0
      %v2255 = vmax.f32 %v2218, 0.0
      %v2256 = vmax.f32 %v2220, 0.0
      %v2257 = vmax.f32 %v2223, 0.0
      %v2258 = vmax.f32 %v2225, 0.0
      %v2259 = vpack.c.bf16 %v2228, %v2227
      %v2260 = vpack.c.bf16 %v2230, %v2229
      %v2261 = vpack.c.bf16 %v2232, %v2231
      %v2262 = vpack.c.bf16 %v2234, %v2233
      %v2263 = vpack.c.bf16 %v2236, %v2235
      %v2264 = vpack.c.bf16 %v2238, %v2237
      %v2265 = vpack.c.bf16 %v2240, %v2239
      %v2266 = vpack.c.bf16 %v2242, %v2241
      %v2267 = vpack.c.bf16 %v2244, %v2243
      %v2268 = vpack.c.bf16 %v2246, %v2245
      %v2269 = vpack.c.bf16 %v2248, %v2247
      %v2270 = vpack.c.bf16 %v2250, %v2249
      %v2271 = vpack.c.bf16 %v2252, %v2251
      %v2272 = vpack.c.bf16 %v2254, %v2253
      %v2273 = vpack.c.bf16 %v2256, %v2255
      %v2274 = vpack.c.bf16 %v2258, %v2257
      %v2275 = vld [vmem:[%s7] sm:$0xf]
      %v2276 = vld [vmem:[%s7 + $0x4] sm:$0xf]
      %v2277 = vld [vmem:[%s7 + $0x8] sm:$0xf]
      %v2278 = vld [vmem:[%s7 + $0xc] sm:$0xf]
      %v2279 = vld [vmem:[%s7 + $0x10] sm:$0xf]
      %v2280 = vld [vmem:[%s7 + $0x14] sm:$0xf]
      %v2281 = vld [vmem:[%s7 + $0x18] sm:$0xf]
      %v2282 = vld [vmem:[%s7 + $0x1c] sm:$0xf]
      %v2283 = vld [vmem:[%s8] sm:$0x1]
      %v2285 = vperm.slane %v2283, 0
      %v2295 = vunpack.c.l.b16 %v2275
      %v2296 = vunpack.c.l.b16 %v2276
      %v2297 = vunpack.c.l.b16 %v2277
      %v2298 = vunpack.c.l.b16 %v2278
      %v2299 = vunpack.c.l.b16 %v2279
      %v2300 = vunpack.c.l.b16 %v2280
      %v2301 = vunpack.c.l.b16 %v2281
      %v2302 = vunpack.c.l.b16 %v2282
      %v2303 = vpack.c.b16 %v2296, %v2295
      %v2304 = vpack.c.b16 %v2298, %v2297
      %v2305 = vpack.c.b16 %v2300, %v2299
      %v2306 = vpack.c.b16 %v2302, %v2301
      %v2312 = vsel %vm2089, %v2259, 0
      %v2315 = vsel %vm2089, %v2260, 0
      %v2318 = vsel %vm2089, %v2261, 0
      %v2321 = vsel %vm2089, %v2262, 0
      %v2324 = vsel %vm2089, %v2263, 0
      %v2327 = vsel %vm2089, %v2264, 0
      %v2330 = vsel %vm2089, %v2265, 0
      %v2333 = vsel %vm2089, %v2266, 0
      %v2336 = vsel %vm2089, %v2267, 0
      %v2339 = vsel %vm2089, %v2268, 0
      %v2342 = vsel %vm2089, %v2269, 0
      %v2345 = vsel %vm2089, %v2270, 0
      %v2348 = vsel %vm2089, %v2271, 0
      %v2351 = vsel %vm2089, %v2272, 0
      %v2354 = vsel %vm2089, %v2273, 0
      %v2357 = vsel %vm2089, %v2274, 0
      %2359 = vmatpush.bf16.msra.mxu0 0
      %2360 = vmatpush.bf16.msra.mxu0 0
      %2361 = vmatpush.bf16.msra.mxu0 0
      %2362 = vmatpush.bf16.msra.mxu0 0
      %2363 = vmatpush.bf16.msra.mxu0 %v2306
      %2364 = vmatpush.bf16.msra.mxu0 %v2305
      %2365 = vmatpush.bf16.msra.mxu0 %v2304
      %2366 = vmatpush.bf16.msra.mxu0 %v2303
      %2367 = vmatmul.bf16.gmra.mxu0 %v2312
      %v2368 = vpop.f32.mrf.mxu0
      %v2369 = vadd.f32 %v2285, %v2368
      %v2370 = vpop.f32.mrf.mxu0
      %v2371 = vadd.f32 %v2285, %v2370
      %2372 = vmatmul.bf16.gmra.mxu0 %v2315
      %v2373 = vpop.f32.mrf.mxu0
      %v2374 = vadd.f32 %v2285, %v2373
      %v2375 = vpop.f32.mrf.mxu0
      %v2376 = vadd.f32 %v2285, %v2375
      %2377 = vmatmul.bf16.gmra.mxu0 %v2318
      %v2378 = vpop.f32.mrf.mxu0
      %v2379 = vadd.f32 %v2285, %v2378
      %v2380 = vpop.f32.mrf.mxu0
      %v2381 = vadd.f32 %v2285, %v2380
      %2382 = vmatmul.bf16.gmra.mxu0 %v2321
      %v2383 = vpop.f32.mrf.mxu0
      %v2384 = vadd.f32 %v2285, %v2383
      %v2385 = vpop.f32.mrf.mxu0
      %v2386 = vadd.f32 %v2285, %v2385
      %2387 = vmatmul.bf16.gmra.mxu0 %v2324
      %v2388 = vpop.f32.mrf.mxu0
      %v2389 = vadd.f32 %v2285, %v2388
      %v2390 = vpop.f32.mrf.mxu0
      %v2391 = vadd.f32 %v2285, %v2390
      %2392 = vmatmul.bf16.gmra.mxu0 %v2327
      %v2393 = vpop.f32.mrf.mxu0
      %v2394 = vadd.f32 %v2285, %v2393
      %v2395 = vpop.f32.mrf.mxu0
      %v2396 = vadd.f32 %v2285, %v2395
      %2397 = vmatmul.bf16.gmra.mxu0 %v2330
      %v2398 = vpop.f32.mrf.mxu0
      %v2399 = vadd.f32 %v2285, %v2398
      %v2400 = vpop.f32.mrf.mxu0
      %v2401 = vadd.f32 %v2285, %v2400
      %2402 = vmatmul.bf16.gmra.mxu0 %v2333
      %v2403 = vpop.f32.mrf.mxu0
      %v2404 = vadd.f32 %v2285, %v2403
      %v2405 = vpop.f32.mrf.mxu0
      %v2406 = vadd.f32 %v2285, %v2405
      %2407 = vmatmul.bf16.gmra.mxu0 %v2336
      %v2408 = vpop.f32.mrf.mxu0
      %v2409 = vadd.f32 %v2285, %v2408
      %v2410 = vpop.f32.mrf.mxu0
      %v2411 = vadd.f32 %v2285, %v2410
      %2412 = vmatmul.bf16.gmra.mxu0 %v2339
      %v2413 = vpop.f32.mrf.mxu0
      %v2414 = vadd.f32 %v2285, %v2413
      %v2415 = vpop.f32.mrf.mxu0
      %v2416 = vadd.f32 %v2285, %v2415
      %2417 = vmatmul.bf16.gmra.mxu0 %v2342
      %v2418 = vpop.f32.mrf.mxu0
      %v2419 = vadd.f32 %v2285, %v2418
      %v2420 = vpop.f32.mrf.mxu0
      %v2421 = vadd.f32 %v2285, %v2420
      %2422 = vmatmul.bf16.gmra.mxu0 %v2345
      %v2423 = vpop.f32.mrf.mxu0
      %v2424 = vadd.f32 %v2285, %v2423
      %v2425 = vpop.f32.mrf.mxu0
      %v2426 = vadd.f32 %v2285, %v2425
      %2427 = vmatmul.bf16.gmra.mxu0 %v2348
      %v2428 = vpop.f32.mrf.mxu0
      %v2429 = vadd.f32 %v2285, %v2428
      %v2430 = vpop.f32.mrf.mxu0
      %v2431 = vadd.f32 %v2285, %v2430
      %2432 = vmatmul.bf16.gmra.mxu0 %v2351
      %v2433 = vpop.f32.mrf.mxu0
      %v2434 = vadd.f32 %v2285, %v2433
      %v2435 = vpop.f32.mrf.mxu0
      %v2436 = vadd.f32 %v2285, %v2435
      %2437 = vmatmul.bf16.gmra.mxu0 %v2354
      %v2438 = vpop.f32.mrf.mxu0
      %v2439 = vadd.f32 %v2285, %v2438
      %v2440 = vpop.f32.mrf.mxu0
      %v2441 = vadd.f32 %v2285, %v2440
      %2442 = vmatmul.bf16.gmra.mxu0 %v2357
      %v2443 = vpop.f32.mrf.mxu0
      %v2444 = vadd.f32 %v2285, %v2443
      %v2445 = vpop.f32.mrf.mxu0
      %v2446 = vadd.f32 %v2285, %v2445
      %2447 = vdwg.mxu0
      %v2448 = vmax.f32 %v2369, 0.0
      %v2449 = vmax.f32 %v2371, 0.0
      %v2450 = vmax.f32 %v2374, 0.0
      %v2451 = vmax.f32 %v2376, 0.0
      %v2452 = vmax.f32 %v2379, 0.0
      %v2453 = vmax.f32 %v2381, 0.0
      %v2454 = vmax.f32 %v2384, 0.0
      %v2455 = vmax.f32 %v2386, 0.0
      %v2456 = vmax.f32 %v2389, 0.0
      %v2457 = vmax.f32 %v2391, 0.0
      %v2458 = vmax.f32 %v2394, 0.0
      %v2459 = vmax.f32 %v2396, 0.0
      %v2460 = vmax.f32 %v2399, 0.0
      %v2461 = vmax.f32 %v2401, 0.0
      %v2462 = vmax.f32 %v2404, 0.0
      %v2463 = vmax.f32 %v2406, 0.0
      %v2464 = vmax.f32 %v2409, 0.0
      %v2465 = vmax.f32 %v2411, 0.0
      %v2466 = vmax.f32 %v2414, 0.0
      %v2467 = vmax.f32 %v2416, 0.0
      %v2468 = vmax.f32 %v2419, 0.0
      %v2469 = vmax.f32 %v2421, 0.0
      %v2470 = vmax.f32 %v2424, 0.0
      %v2471 = vmax.f32 %v2426, 0.0
      %v2472 = vmax.f32 %v2429, 0.0
      %v2473 = vmax.f32 %v2431, 0.0
      %v2474 = vmax.f32 %v2434, 0.0
      %v2475 = vmax.f32 %v2436, 0.0
      %v2476 = vmax.f32 %v2439, 0.0
      %v2477 = vmax.f32 %v2441, 0.0
      %v2478 = vmax.f32 %v2444, 0.0
      %v2479 = vmax.f32 %v2446, 0.0
      %v2480 = vpack.c.bf16 %v2449, %v2448
      %v2481 = vpack.c.bf16 %v2451, %v2450
      %v2482 = vpack.c.bf16 %v2453, %v2452
      %v2483 = vpack.c.bf16 %v2455, %v2454
      %v2484 = vpack.c.bf16 %v2457, %v2456
      %v2485 = vpack.c.bf16 %v2459, %v2458
      %v2486 = vpack.c.bf16 %v2461, %v2460
      %v2487 = vpack.c.bf16 %v2463, %v2462
      %v2488 = vpack.c.bf16 %v2465, %v2464
      %v2489 = vpack.c.bf16 %v2467, %v2466
      %v2490 = vpack.c.bf16 %v2469, %v2468
      %v2491 = vpack.c.bf16 %v2471, %v2470
      %v2492 = vpack.c.bf16 %v2473, %v2472
      %v2493 = vpack.c.bf16 %v2475, %v2474
      %v2494 = vpack.c.bf16 %v2477, %v2476
      %v2495 = vpack.c.bf16 %v2479, %v2478
      %v2496 = vld [vmem:[%s9] sm:$0xff]
      %v2497 = vld [vmem:[%s9 + $0x8] sm:$0xff]
      %v2498 = vld [vmem:[%s9 + $0x10] sm:$0xff]
      %v2499 = vld [vmem:[%s9 + $0x18] sm:$0xf]
      %v2500 = vld [vmem:[%s9 + $0x1c] sm:$0xff]
      %v2501 = vld [vmem:[%s9 + $0x24] sm:$0xff]
      %v2502 = vld [vmem:[%s9 + $0x2c] sm:$0xff]
      %v2503 = vld [vmem:[%s9 + $0x34] sm:$0xf]
      %v2504 = vld [vmem:[%s9 + $0x38] sm:$0xff]
      %v2505 = vld [vmem:[%s9 + $0x40] sm:$0xff]
      %v2506 = vld [vmem:[%s9 + $0x48] sm:$0xff]
      %v2507 = vld [vmem:[%s9 + $0x50] sm:$0xf]
      %v2508 = vld [vmem:[%s9 + $0x54] sm:$0xff]
      %v2509 = vld [vmem:[%s9 + $0x5c] sm:$0xff]
      %v2510 = vld [vmem:[%s9 + $0x64] sm:$0xff]
      %v2511 = vld [vmem:[%s9 + $0x6c] sm:$0xf]
      %v2512 = vld [vmem:[%s9 + $0x70] sm:$0xff]
      %v2513 = vld [vmem:[%s9 + $0x78] sm:$0xff]
      %v2514 = vld [vmem:[%s9 + $0x80] sm:$0xff]
      %v2515 = vld [vmem:[%s9 + $0x88] sm:$0xf]
      %v2516 = vld [vmem:[%s9 + $0x8c] sm:$0xff]
      %v2517 = vld [vmem:[%s9 + $0x94] sm:$0xff]
      %v2518 = vld [vmem:[%s9 + $0x9c] sm:$0xff]
      %v2519 = vld [vmem:[%s9 + $0xa4] sm:$0xf]
      %v2520 = vld [vmem:[%s9 + $0xa8] sm:$0xff]
      %v2521 = vld [vmem:[%s9 + $0xb0] sm:$0xff]
      %v2522 = vld [vmem:[%s9 + $0xb8] sm:$0xff]
      %v2523 = vld [vmem:[%s9 + $0xc0] sm:$0xf]
      %v2524 = vld [vmem:[%s9 + $0xc4] sm:$0xff]
      %v2525 = vld [vmem:[%s9 + $0xcc] sm:$0xff]
      %v2526 = vld [vmem:[%s9 + $0xd4] sm:$0xff]
      %v2527 = vld [vmem:[%s9 + $0xdc] sm:$0xf]
      %v2528 = vld [vmem:[%s9 + $0xe0] sm:$0xff]
      %v2529 = vld [vmem:[%s9 + $0xe8] sm:$0xff]
      %v2530 = vld [vmem:[%s9 + $0xf0] sm:$0xff]
      %v2531 = vld [vmem:[%s9 + $0xf8] sm:$0xf]
      %v2532 = vld [vmem:[%s9 + $0xfc] sm:$0xff]
      %v2533 = vld [vmem:[%s9 + $0x104] sm:$0xff]
      %v2534 = vld [vmem:[%s9 + $0x10c] sm:$0xff]
      %v2535 = vld [vmem:[%s9 + $0x114] sm:$0xf]
      %v2536 = vld [vmem:[%s9 + $0x118] sm:$0xff]
      %v2537 = vld [vmem:[%s9 + $0x120] sm:$0xff]
      %v2538 = vld [vmem:[%s9 + $0x128] sm:$0xff]
      %v2539 = vld [vmem:[%s9 + $0x130] sm:$0xf]
      %v2540 = vld [vmem:[%s9 + $0x134] sm:$0xff]
      %v2541 = vld [vmem:[%s9 + $0x13c] sm:$0xff]
      %v2542 = vld [vmem:[%s9 + $0x144] sm:$0xff]
      %v2543 = vld [vmem:[%s9 + $0x14c] sm:$0xf]
      %v2544 = vld [vmem:[%s9 + $0x150] sm:$0xff]
      %v2545 = vld [vmem:[%s9 + $0x158] sm:$0xff]
      %v2546 = vld [vmem:[%s9 + $0x160] sm:$0xff]
      %v2547 = vld [vmem:[%s9 + $0x168] sm:$0xf]
      %v2548 = vld [vmem:[%s9 + $0x16c] sm:$0xff]
      %v2549 = vld [vmem:[%s9 + $0x174] sm:$0xff]
      %v2550 = vld [vmem:[%s9 + $0x17c] sm:$0xff]
      %v2551 = vld [vmem:[%s9 + $0x184] sm:$0xf]
      %v2552 = vld [vmem:[%s9 + $0x188] sm:$0xff]
      %v2553 = vld [vmem:[%s9 + $0x190] sm:$0xff]
      %v2554 = vld [vmem:[%s9 + $0x198] sm:$0xff]
      %v2555 = vld [vmem:[%s9 + $0x1a0] sm:$0xf]
      %v2556 = vld [vmem:[%s9 + $0x1a4] sm:$0xff]
      %v2557 = vld [vmem:[%s9 + $0x1ac] sm:$0xff]
      %v2558 = vld [vmem:[%s9 + $0x1b4] sm:$0xff]
      %v2559 = vld [vmem:[%s9 + $0x1bc] sm:$0xf]
      %v2560 = vld [vmem:[%s10] sm:$0x7f]
      %v2562 = vperm.slane %v2560, 0
      %v2563 = vperm.slane %v2560, 1
      %v2564 = vperm.slane %v2560, 2
      %v2565 = vperm.slane %v2560, 3
      %v2566 = vperm.slane %v2560, 4
      %v2567 = vperm.slane %v2560, 5
      %v2568 = vperm.slane %v2560, 6
      %v2640 = vunpack.c.l.b16 %v2496
      %v2641 = vunpack.c.h.b16 %v2496
      %v2642 = vunpack.c.l.b16 %v2497
      %v2643 = vunpack.c.h.b16 %v2497
      %v2644 = vunpack.c.l.b16 %v2498
      %v2645 = vunpack.c.h.b16 %v2498
      %v2646 = vunpack.c.l.b16 %v2499
      %v2647 = vunpack.c.l.b16 %v2500
      %v2648 = vunpack.c.h.b16 %v2500
      %v2649 = vunpack.c.l.b16 %v2501
      %v2650 = vunpack.c.h.b16 %v2501
      %v2651 = vunpack.c.l.b16 %v2502
      %v2652 = vunpack.c.h.b16 %v2502
      %v2653 = vunpack.c.l.b16 %v2503
      %v2654 = vunpack.c.l.b16 %v2504
      %v2655 = vunpack.c.h.b16 %v2504
      %v2656 = vunpack.c.l.b16 %v2505
      %v2657 = vunpack.c.h.b16 %v2505
      %v2658 = vunpack.c.l.b16 %v2506
      %v2659 = vunpack.c.h.b16 %v2506
      %v2660 = vunpack.c.l.b16 %v2507
      %v2661 = vunpack.c.l.b16 %v2508
      %v2662 = vunpack.c.h.b16 %v2508
      %v2663 = vunpack.c.l.b16 %v2509
      %v2664 = vunpack.c.h.b16 %v2509
      %v2665 = vunpack.c.l.b16 %v2510
      %v2666 = vunpack.c.h.b16 %v2510
      %v2667 = vunpack.c.l.b16 %v2511
      %v2668 = vunpack.c.l.b16 %v2512
      %v2669 = vunpack.c.h.b16 %v2512
      %v2670 = vunpack.c.l.b16 %v2513
      %v2671 = vunpack.c.h.b16 %v2513
      %v2672 = vunpack.c.l.b16 %v2514
      %v2673 = vunpack.c.h.b16 %v2514
      %v2674 = vunpack.c.l.b16 %v2515
      %v2675 = vunpack.c.l.b16 %v2516
      %v2676 = vunpack.c.h.b16 %v2516
      %v2677 = vunpack.c.l.b16 %v2517
      %v2678 = vunpack.c.h.b16 %v2517
      %v2679 = vunpack.c.l.b16 %v2518
      %v2680 = vunpack.c.h.b16 %v2518
      %v2681 = vunpack.c.l.b16 %v2519
      %v2682 = vunpack.c.l.b16 %v2520
      %v2683 = vunpack.c.h.b16 %v2520
      %v2684 = vunpack.c.l.b16 %v2521
      %v2685 = vunpack.c.h.b16 %v2521
      %v2686 = vunpack.c.l.b16 %v2522
      %v2687 = vunpack.c.h.b16 %v2522
      %v2688 = vunpack.c.l.b16 %v2523
      %v2689 = vunpack.c.l.b16 %v2524
      %v2690 = vunpack.c.h.b16 %v2524
      %v2691 = vunpack.c.l.b16 %v2525
      %v2692 = vunpack.c.h.b16 %v2525
      %v2693 = vunpack.c.l.b16 %v2526
      %v2694 = vunpack.c.h.b16 %v2526
      %v2695 = vunpack.c.l.b16 %v2527
      %v2696 = vunpack.c.l.b16 %v2528
      %v2697 = vunpack.c.h.b16 %v2528
      %v2698 = vunpack.c.l.b16 %v2529
      %v2699 = vunpack.c.h.b16 %v2529
      %v2700 = vunpack.c.l.b16 %v2530
      %v2701 = vunpack.c.h.b16 %v2530
      %v2702 = vunpack.c.l.b16 %v2531
      %v2703 = vunpack.c.l.b16 %v2532
      %v2704 = vunpack.c.h.b16 %v2532
      %v2705 = vunpack.c.l.b16 %v2533
      %v2706 = vunpack.c.h.b16 %v2533
      %v2707 = vunpack.c.l.b16 %v2534
      %v2708 = vunpack.c.h.b16 %v2534
      %v2709 = vunpack.c.l.b16 %v2535
      %v2710 = vunpack.c.l.b16 %v2536
      %v2711 = vunpack.c.h.b16 %v2536
      %v2712 = vunpack.c.l.b16 %v2537
      %v2713 = vunpack.c.h.b16 %v2537
      %v2714 = vunpack.c.l.b16 %v2538
      %v2715 = vunpack.c.h.b16 %v2538
      %v2716 = vunpack.c.l.b16 %v2539
      %v2717 = vunpack.c.l.b16 %v2540
      %v2718 = vunpack.c.h.b16 %v2540
      %v2719 = vunpack.c.l.b16 %v2541
      %v2720 = vunpack.c.h.b16 %v2541
      %v2721 = vunpack.c.l.b16 %v2542
      %v2722 = vunpack.c.h.b16 %v2542
      %v2723 = vunpack.c.l.b16 %v2543
      %v2724 = vunpack.c.l.b16 %v2544
      %v2725 = vunpack.c.h.b16 %v2544
      %v2726 = vunpack.c.l.b16 %v2545
      %v2727 = vunpack.c.h.b16 %v2545
      %v2728 = vunpack.c.l.b16 %v2546
      %v2729 = vunpack.c.h.b16 %v2546
      %v2730 = vunpack.c.l.b16 %v2547
      %v2731 = vunpack.c.l.b16 %v2548
      %v2732 = vunpack.c.h.b16 %v2548
      %v2733 = vunpack.c.l.b16 %v2549
      %v2734 = vunpack.c.h.b16 %v2549
      %v2735 = vunpack.c.l.b16 %v2550
      %v2736 = vunpack.c.h.b16 %v2550
      %v2737 = vunpack.c.l.b16 %v2551
      %v2738 = vunpack.c.l.b16 %v2552
      %v2739 = vunpack.c.h.b16 %v2552
      %v2740 = vunpack.c.l.b16 %v2553
      %v2741 = vunpack.c.h.b16 %v2553
      %v2742 = vunpack.c.l.b16 %v2554
      %v2743 = vunpack.c.h.b16 %v2554
      %v2744 = vunpack.c.l.b16 %v2555
      %v2745 = vunpack.c.l.b16 %v2556
      %v2746 = vunpack.c.h.b16 %v2556
      %v2747 = vunpack.c.l.b16 %v2557
      %v2748 = vunpack.c.h.b16 %v2557
      %v2749 = vunpack.c.l.b16 %v2558
      %v2750 = vunpack.c.h.b16 %v2558
      %v2751 = vunpack.c.l.b16 %v2559
      %v2752 = vpack.c.b16 %v2647, %v2640
      %v2753 = vpack.c.b16 %v2648, %v2641
      %v2754 = vpack.c.b16 %v2649, %v2642
      %v2755 = vpack.c.b16 %v2650, %v2643
      %v2756 = vpack.c.b16 %v2651, %v2644
      %v2757 = vpack.c.b16 %v2652, %v2645
      %v2758 = vpack.c.b16 %v2653, %v2646
      %v2759 = vpack.c.b16 %v2661, %v2654
      %v2760 = vpack.c.b16 %v2662, %v2655
      %v2761 = vpack.c.b16 %v2663, %v2656
      %v2762 = vpack.c.b16 %v2664, %v2657
      %v2763 = vpack.c.b16 %v2665, %v2658
      %v2764 = vpack.c.b16 %v2666, %v2659
      %v2765 = vpack.c.b16 %v2667, %v2660
      %v2766 = vpack.c.b16 %v2675, %v2668
      %v2767 = vpack.c.b16 %v2676, %v2669
      %v2768 = vpack.c.b16 %v2677, %v2670
      %v2769 = vpack.c.b16 %v2678, %v2671
      %v2770 = vpack.c.b16 %v2679, %v2672
      %v2771 = vpack.c.b16 %v2680, %v2673
      %v2772 = vpack.c.b16 %v2681, %v2674
      %v2773 = vpack.c.b16 %v2689, %v2682
      %v2774 = vpack.c.b16 %v2690, %v2683
      %v2775 = vpack.c.b16 %v2691, %v2684
      %v2776 = vpack.c.b16 %v2692, %v2685
      %v2777 = vpack.c.b16 %v2693, %v2686
      %v2778 = vpack.c.b16 %v2694, %v2687
      %v2779 = vpack.c.b16 %v2695, %v2688
      %v2780 = vpack.c.b16 %v2703, %v2696
      %v2781 = vpack.c.b16 %v2704, %v2697
      %v2782 = vpack.c.b16 %v2705, %v2698
      %v2783 = vpack.c.b16 %v2706, %v2699
      %v2784 = vpack.c.b16 %v2707, %v2700
      %v2785 = vpack.c.b16 %v2708, %v2701
      %v2786 = vpack.c.b16 %v2709, %v2702
      %v2787 = vpack.c.b16 %v2717, %v2710
      %v2788 = vpack.c.b16 %v2718, %v2711
      %v2789 = vpack.c.b16 %v2719, %v2712
      %v2790 = vpack.c.b16 %v2720, %v2713
      %v2791 = vpack.c.b16 %v2721, %v2714
      %v2792 = vpack.c.b16 %v2722, %v2715
      %v2793 = vpack.c.b16 %v2723, %v2716
      %v2794 = vpack.c.b16 %v2731, %v2724
      %v2795 = vpack.c.b16 %v2732, %v2725
      %v2796 = vpack.c.b16 %v2733, %v2726
      %v2797 = vpack.c.b16 %v2734, %v2727
      %v2798 = vpack.c.b16 %v2735, %v2728
      %v2799 = vpack.c.b16 %v2736, %v2729
      %v2800 = vpack.c.b16 %v2737, %v2730
      %v2801 = vpack.c.b16 %v2745, %v2738
      %v2802 = vpack.c.b16 %v2746, %v2739
      %v2803 = vpack.c.b16 %v2747, %v2740
      %v2804 = vpack.c.b16 %v2748, %v2741
      %v2805 = vpack.c.b16 %v2749, %v2742
      %v2806 = vpack.c.b16 %v2750, %v2743
      %v2807 = vpack.c.b16 %v2751, %v2744
      %2864 = vmatpush.bf16.msra.mxu0 %v2801
      %2865 = vmatpush.bf16.msra.mxu0 %v2794
      %2866 = vmatpush.bf16.msra.mxu0 %v2787
      %2867 = vmatpush.bf16.msra.mxu0 %v2780
      %2868 = vmatpush.bf16.msra.mxu0 %v2773
      %2869 = vmatpush.bf16.msra.mxu0 %v2766
      %2870 = vmatpush.bf16.msra.mxu0 %v2759
      %2871 = vmatpush.bf16.msra.mxu0 %v2752
      %2872 = vmatmul.bf16.gmra.mxu0 %v2480
      %v2873 = vpop.f32.mrf.mxu0
      %v2874 = vadd.f32 %v2562, %v2873
      %v2875 = vpop.f32.mrf.mxu0
      %v2876 = vadd.f32 %v2562, %v2875
      %2877 = vmatmul.bf16.gmra.mxu0 %v2481
      %v2878 = vpop.f32.mrf.mxu0
      %v2879 = vadd.f32 %v2562, %v2878
      %v2880 = vpop.f32.mrf.mxu0
      %v2881 = vadd.f32 %v2562, %v2880
      %2882 = vmatmul.bf16.gmra.mxu0 %v2482
      %v2883 = vpop.f32.mrf.mxu0
      %v2884 = vadd.f32 %v2562, %v2883
      %v2885 = vpop.f32.mrf.mxu0
      %v2886 = vadd.f32 %v2562, %v2885
      %2887 = vmatmul.bf16.gmra.mxu0 %v2483
      %v2888 = vpop.f32.mrf.mxu0
      %v2889 = vadd.f32 %v2562, %v2888
      %v2890 = vpop.f32.mrf.mxu0
      %v2891 = vadd.f32 %v2562, %v2890
      %2892 = vmatmul.bf16.gmra.mxu0 %v2484
      %v2893 = vpop.f32.mrf.mxu0
      %v2894 = vadd.f32 %v2562, %v2893
      %v2895 = vpop.f32.mrf.mxu0
      %v2896 = vadd.f32 %v2562, %v2895
      %2897 = vmatmul.bf16.gmra.mxu0 %v2485
      %v2898 = vpop.f32.mrf.mxu0
      %v2899 = vadd.f32 %v2562, %v2898
      %v2900 = vpop.f32.mrf.mxu0
      %v2901 = vadd.f32 %v2562, %v2900
      %2902 = vmatmul.bf16.gmra.mxu0 %v2486
      %v2903 = vpop.f32.mrf.mxu0
      %v2904 = vadd.f32 %v2562, %v2903
      %v2905 = vpop.f32.mrf.mxu0
      %v2906 = vadd.f32 %v2562, %v2905
      %2907 = vmatmul.bf16.gmra.mxu0 %v2487
      %v2908 = vpop.f32.mrf.mxu0
      %v2909 = vadd.f32 %v2562, %v2908
      %v2910 = vpop.f32.mrf.mxu0
      %v2911 = vadd.f32 %v2562, %v2910
      %2912 = vmatmul.bf16.gmra.mxu0 %v2488
      %v2913 = vpop.f32.mrf.mxu0
      %v2914 = vadd.f32 %v2562, %v2913
      %v2915 = vpop.f32.mrf.mxu0
      %v2916 = vadd.f32 %v2562, %v2915
      %2917 = vmatmul.bf16.gmra.mxu0 %v2489
      %v2918 = vpop.f32.mrf.mxu0
      %v2919 = vadd.f32 %v2562, %v2918
      %v2920 = vpop.f32.mrf.mxu0
      %v2921 = vadd.f32 %v2562, %v2920
      %2922 = vmatmul.bf16.gmra.mxu0 %v2490
      %v2923 = vpop.f32.mrf.mxu0
      %v2924 = vadd.f32 %v2562, %v2923
      %v2925 = vpop.f32.mrf.mxu0
      %v2926 = vadd.f32 %v2562, %v2925
      %2927 = vmatmul.bf16.gmra.mxu0 %v2491
      %v2928 = vpop.f32.mrf.mxu0
      %v2929 = vadd.f32 %v2562, %v2928
      %v2930 = vpop.f32.mrf.mxu0
      %v2931 = vadd.f32 %v2562, %v2930
      %2932 = vmatmul.bf16.gmra.mxu0 %v2492
      %v2933 = vpop.f32.mrf.mxu0
      %v2934 = vadd.f32 %v2562, %v2933
      %v2935 = vpop.f32.mrf.mxu0
      %v2936 = vadd.f32 %v2562, %v2935
      %2937 = vmatmul.bf16.gmra.mxu0 %v2493
      %v2938 = vpop.f32.mrf.mxu0
      %v2939 = vadd.f32 %v2562, %v2938
      %v2940 = vpop.f32.mrf.mxu0
      %v2941 = vadd.f32 %v2562, %v2940
      %2942 = vmatmul.bf16.gmra.mxu0 %v2494
      %v2943 = vpop.f32.mrf.mxu0
      %v2944 = vadd.f32 %v2562, %v2943
      %v2945 = vpop.f32.mrf.mxu0
      %v2946 = vadd.f32 %v2562, %v2945
      %2947 = vmatmul.bf16.gmra.mxu0 %v2495
      %v2948 = vpop.f32.mrf.mxu0
      %v2949 = vadd.f32 %v2562, %v2948
      %v2950 = vpop.f32.mrf.mxu0
      %v2951 = vadd.f32 %v2562, %v2950
      %2952 = vdwg.mxu0
      %2953 = vmatpush.bf16.msra.mxu0 %v2802
      %2954 = vmatpush.bf16.msra.mxu0 %v2795
      %2955 = vmatpush.bf16.msra.mxu0 %v2788
      %2956 = vmatpush.bf16.msra.mxu0 %v2781
      %2957 = vmatpush.bf16.msra.mxu0 %v2774
      %2958 = vmatpush.bf16.msra.mxu0 %v2767
      %2959 = vmatpush.bf16.msra.mxu0 %v2760
      %2960 = vmatpush.bf16.msra.mxu0 %v2753
      %2961 = vmatmul.bf16.gmra.mxu0 %v2480
      %v2962 = vpop.f32.mrf.mxu0
      %v2963 = vadd.f32 %v2563, %v2962
      %v2964 = vpop.f32.mrf.mxu0
      %v2965 = vadd.f32 %v2563, %v2964
      %2966 = vmatmul.bf16.gmra.mxu0 %v2481
      %v2967 = vpop.f32.mrf.mxu0
      %v2968 = vadd.f32 %v2563, %v2967
      %v2969 = vpop.f32.mrf.mxu0
      %v2970 = vadd.f32 %v2563, %v2969
      %2971 = vmatmul.bf16.gmra.mxu0 %v2482
      %v2972 = vpop.f32.mrf.mxu0
      %v2973 = vadd.f32 %v2563, %v2972
      %v2974 = vpop.f32.mrf.mxu0
      %v2975 = vadd.f32 %v2563, %v2974
      %2976 = vmatmul.bf16.gmra.mxu0 %v2483
      %v2977 = vpop.f32.mrf.mxu0
      %v2978 = vadd.f32 %v2563, %v2977
      %v2979 = vpop.f32.mrf.mxu0
      %v2980 = vadd.f32 %v2563, %v2979
      %2981 = vmatmul.bf16.gmra.mxu0 %v2484
      %v2982 = vpop.f32.mrf.mxu0
      %v2983 = vadd.f32 %v2563, %v2982
      %v2984 = vpop.f32.mrf.mxu0
      %v2985 = vadd.f32 %v2563, %v2984
      %2986 = vmatmul.bf16.gmra.mxu0 %v2485
      %v2987 = vpop.f32.mrf.mxu0
      %v2988 = vadd.f32 %v2563, %v2987
      %v2989 = vpop.f32.mrf.mxu0
      %v2990 = vadd.f32 %v2563, %v2989
      %2991 = vmatmul.bf16.gmra.mxu0 %v2486
      %v2992 = vpop.f32.mrf.mxu0
      %v2993 = vadd.f32 %v2563, %v2992
      %v2994 = vpop.f32.mrf.mxu0
      %v2995 = vadd.f32 %v2563, %v2994
      %2996 = vmatmul.bf16.gmra.mxu0 %v2487
      %v2997 = vpop.f32.mrf.mxu0
      %v2998 = vadd.f32 %v2563, %v2997
      %v2999 = vpop.f32.mrf.mxu0
      %v3000 = vadd.f32 %v2563, %v2999
      %3001 = vmatmul.bf16.gmra.mxu0 %v2488
      %v3002 = vpop.f32.mrf.mxu0
      %v3003 = vadd.f32 %v2563, %v3002
      %v3004 = vpop.f32.mrf.mxu0
      %v3005 = vadd.f32 %v2563, %v3004
      %3006 = vmatmul.bf16.gmra.mxu0 %v2489
      %v3007 = vpop.f32.mrf.mxu0
      %v3008 = vadd.f32 %v2563, %v3007
      %v3009 = vpop.f32.mrf.mxu0
      %v3010 = vadd.f32 %v2563, %v3009
      %3011 = vmatmul.bf16.gmra.mxu0 %v2490
      %v3012 = vpop.f32.mrf.mxu0
      %v3013 = vadd.f32 %v2563, %v3012
      %v3014 = vpop.f32.mrf.mxu0
      %v3015 = vadd.f32 %v2563, %v3014
      %3016 = vmatmul.bf16.gmra.mxu0 %v2491
      %v3017 = vpop.f32.mrf.mxu0
      %v3018 = vadd.f32 %v2563, %v3017
      %v3019 = vpop.f32.mrf.mxu0
      %v3020 = vadd.f32 %v2563, %v3019
      %3021 = vmatmul.bf16.gmra.mxu0 %v2492
      %v3022 = vpop.f32.mrf.mxu0
      %v3023 = vadd.f32 %v2563, %v3022
      %v3024 = vpop.f32.mrf.mxu0
      %v3025 = vadd.f32 %v2563, %v3024
      %3026 = vmatmul.bf16.gmra.mxu0 %v2493
      %v3027 = vpop.f32.mrf.mxu0
      %v3028 = vadd.f32 %v2563, %v3027
      %v3029 = vpop.f32.mrf.mxu0
      %v3030 = vadd.f32 %v2563, %v3029
      %3031 = vmatmul.bf16.gmra.mxu0 %v2494
      %v3032 = vpop.f32.mrf.mxu0
      %v3033 = vadd.f32 %v2563, %v3032
      %v3034 = vpop.f32.mrf.mxu0
      %v3035 = vadd.f32 %v2563, %v3034
      %3036 = vmatmul.bf16.gmra.mxu0 %v2495
      %v3037 = vpop.f32.mrf.mxu0
      %v3038 = vadd.f32 %v2563, %v3037
      %v3039 = vpop.f32.mrf.mxu0
      %v3040 = vadd.f32 %v2563, %v3039
      %3041 = vdwg.mxu0
      %3042 = vmatpush.bf16.msra.mxu0 %v2803
      %3043 = vmatpush.bf16.msra.mxu0 %v2796
      %3044 = vmatpush.bf16.msra.mxu0 %v2789
      %3045 = vmatpush.bf16.msra.mxu0 %v2782
      %3046 = vmatpush.bf16.msra.mxu0 %v2775
      %3047 = vmatpush.bf16.msra.mxu0 %v2768
      %3048 = vmatpush.bf16.msra.mxu0 %v2761
      %3049 = vmatpush.bf16.msra.mxu0 %v2754
      %3050 = vmatmul.bf16.gmra.mxu0 %v2480
      %v3051 = vpop.f32.mrf.mxu0
      %v3052 = vadd.f32 %v2564, %v3051
      %v3053 = vpop.f32.mrf.mxu0
      %v3054 = vadd.f32 %v2564, %v3053
      %3055 = vmatmul.bf16.gmra.mxu0 %v2481
      %v3056 = vpop.f32.mrf.mxu0
      %v3057 = vadd.f32 %v2564, %v3056
      %v3058 = vpop.f32.mrf.mxu0
      %v3059 = vadd.f32 %v2564, %v3058
      %3060 = vmatmul.bf16.gmra.mxu0 %v2482
      %v3061 = vpop.f32.mrf.mxu0
      %v3062 = vadd.f32 %v2564, %v3061
      %v3063 = vpop.f32.mrf.mxu0
      %v3064 = vadd.f32 %v2564, %v3063
      %3065 = vmatmul.bf16.gmra.mxu0 %v2483
      %v3066 = vpop.f32.mrf.mxu0
      %v3067 = vadd.f32 %v2564, %v3066
      %v3068 = vpop.f32.mrf.mxu0
      %v3069 = vadd.f32 %v2564, %v3068
      %3070 = vmatmul.bf16.gmra.mxu0 %v2484
      %v3071 = vpop.f32.mrf.mxu0
      %v3072 = vadd.f32 %v2564, %v3071
      %v3073 = vpop.f32.mrf.mxu0
      %v3074 = vadd.f32 %v2564, %v3073
      %3075 = vmatmul.bf16.gmra.mxu0 %v2485
      %v3076 = vpop.f32.mrf.mxu0
      %v3077 = vadd.f32 %v2564, %v3076
      %v3078 = vpop.f32.mrf.mxu0
      %v3079 = vadd.f32 %v2564, %v3078
      %3080 = vmatmul.bf16.gmra.mxu0 %v2486
      %v3081 = vpop.f32.mrf.mxu0
      %v3082 = vadd.f32 %v2564, %v3081
      %v3083 = vpop.f32.mrf.mxu0
      %v3084 = vadd.f32 %v2564, %v3083
      %3085 = vmatmul.bf16.gmra.mxu0 %v2487
      %v3086 = vpop.f32.mrf.mxu0
      %v3087 = vadd.f32 %v2564, %v3086
      %v3088 = vpop.f32.mrf.mxu0
      %v3089 = vadd.f32 %v2564, %v3088
      %3090 = vmatmul.bf16.gmra.mxu0 %v2488
      %v3091 = vpop.f32.mrf.mxu0
      %v3092 = vadd.f32 %v2564, %v3091
      %v3093 = vpop.f32.mrf.mxu0
      %v3094 = vadd.f32 %v2564, %v3093
      %3095 = vmatmul.bf16.gmra.mxu0 %v2489
      %v3096 = vpop.f32.mrf.mxu0
      %v3097 = vadd.f32 %v2564, %v3096
      %v3098 = vpop.f32.mrf.mxu0
      %v3099 = vadd.f32 %v2564, %v3098
      %3100 = vmatmul.bf16.gmra.mxu0 %v2490
      %v3101 = vpop.f32.mrf.mxu0
      %v3102 = vadd.f32 %v2564, %v3101
      %v3103 = vpop.f32.mrf.mxu0
      %v3104 = vadd.f32 %v2564, %v3103
      %3105 = vmatmul.bf16.gmra.mxu0 %v2491
      %v3106 = vpop.f32.mrf.mxu0
      %v3107 = vadd.f32 %v2564, %v3106
      %v3108 = vpop.f32.mrf.mxu0
      %v3109 = vadd.f32 %v2564, %v3108
      %3110 = vmatmul.bf16.gmra.mxu0 %v2492
      %v3111 = vpop.f32.mrf.mxu0
      %v3112 = vadd.f32 %v2564, %v3111
      %v3113 = vpop.f32.mrf.mxu0
      %v3114 = vadd.f32 %v2564, %v3113
      %3115 = vmatmul.bf16.gmra.mxu0 %v2493
      %v3116 = vpop.f32.mrf.mxu0
      %v3117 = vadd.f32 %v2564, %v3116
      %v3118 = vpop.f32.mrf.mxu0
      %v3119 = vadd.f32 %v2564, %v3118
      %3120 = vmatmul.bf16.gmra.mxu0 %v2494
      %v3121 = vpop.f32.mrf.mxu0
      %v3122 = vadd.f32 %v2564, %v3121
      %v3123 = vpop.f32.mrf.mxu0
      %v3124 = vadd.f32 %v2564, %v3123
      %3125 = vmatmul.bf16.gmra.mxu0 %v2495
      %v3126 = vpop.f32.mrf.mxu0
      %v3127 = vadd.f32 %v2564, %v3126
      %v3128 = vpop.f32.mrf.mxu0
      %v3129 = vadd.f32 %v2564, %v3128
      %3130 = vdwg.mxu0
      %3131 = vmatpush.bf16.msra.mxu0 %v2804
      %3132 = vmatpush.bf16.msra.mxu0 %v2797
      %3133 = vmatpush.bf16.msra.mxu0 %v2790
      %3134 = vmatpush.bf16.msra.mxu0 %v2783
      %3135 = vmatpush.bf16.msra.mxu0 %v2776
      %3136 = vmatpush.bf16.msra.mxu0 %v2769
      %3137 = vmatpush.bf16.msra.mxu0 %v2762
      %3138 = vmatpush.bf16.msra.mxu0 %v2755
      %3139 = vmatmul.bf16.gmra.mxu0 %v2480
      %v3140 = vpop.f32.mrf.mxu0
      %v3141 = vadd.f32 %v2565, %v3140
      %v3142 = vpop.f32.mrf.mxu0
      %v3143 = vadd.f32 %v2565, %v3142
      %3144 = vmatmul.bf16.gmra.mxu0 %v2481
      %v3145 = vpop.f32.mrf.mxu0
      %v3146 = vadd.f32 %v2565, %v3145
      %v3147 = vpop.f32.mrf.mxu0
      %v3148 = vadd.f32 %v2565, %v3147
      %3149 = vmatmul.bf16.gmra.mxu0 %v2482
      %v3150 = vpop.f32.mrf.mxu0
      %v3151 = vadd.f32 %v2565, %v3150
      %v3152 = vpop.f32.mrf.mxu0
      %v3153 = vadd.f32 %v2565, %v3152
      %3154 = vmatmul.bf16.gmra.mxu0 %v2483
      %v3155 = vpop.f32.mrf.mxu0
      %v3156 = vadd.f32 %v2565, %v3155
      %v3157 = vpop.f32.mrf.mxu0
      %v3158 = vadd.f32 %v2565, %v3157
      %3159 = vmatmul.bf16.gmra.mxu0 %v2484
      %v3160 = vpop.f32.mrf.mxu0
      %v3161 = vadd.f32 %v2565, %v3160
      %v3162 = vpop.f32.mrf.mxu0
      %v3163 = vadd.f32 %v2565, %v3162
      %3164 = vmatmul.bf16.gmra.mxu0 %v2485
      %v3165 = vpop.f32.mrf.mxu0
      %v3166 = vadd.f32 %v2565, %v3165
      %v3167 = vpop.f32.mrf.mxu0
      %v3168 = vadd.f32 %v2565, %v3167
      %3169 = vmatmul.bf16.gmra.mxu0 %v2486
      %v3170 = vpop.f32.mrf.mxu0
      %v3171 = vadd.f32 %v2565, %v3170
      %v3172 = vpop.f32.mrf.mxu0
      %v3173 = vadd.f32 %v2565, %v3172
      %3174 = vmatmul.bf16.gmra.mxu0 %v2487
      %v3175 = vpop.f32.mrf.mxu0
      %v3176 = vadd.f32 %v2565, %v3175
      %v3177 = vpop.f32.mrf.mxu0
      %v3178 = vadd.f32 %v2565, %v3177
      %3179 = vmatmul.bf16.gmra.mxu0 %v2488
      %v3180 = vpop.f32.mrf.mxu0
      %v3181 = vadd.f32 %v2565, %v3180
      %v3182 = vpop.f32.mrf.mxu0
      %v3183 = vadd.f32 %v2565, %v3182
      %3184 = vmatmul.bf16.gmra.mxu0 %v2489
      %v3185 = vpop.f32.mrf.mxu0
      %v3186 = vadd.f32 %v2565, %v3185
      %v3187 = vpop.f32.mrf.mxu0
      %v3188 = vadd.f32 %v2565, %v3187
      %3189 = vmatmul.bf16.gmra.mxu0 %v2490
      %v3190 = vpop.f32.mrf.mxu0
      %v3191 = vadd.f32 %v2565, %v3190
      %v3192 = vpop.f32.mrf.mxu0
      %v3193 = vadd.f32 %v2565, %v3192
      %3194 = vmatmul.bf16.gmra.mxu0 %v2491
      %v3195 = vpop.f32.mrf.mxu0
      %v3196 = vadd.f32 %v2565, %v3195
      %v3197 = vpop.f32.mrf.mxu0
      %v3198 = vadd.f32 %v2565, %v3197
      %3199 = vmatmul.bf16.gmra.mxu0 %v2492
      %v3200 = vpop.f32.mrf.mxu0
      %v3201 = vadd.f32 %v2565, %v3200
      %v3202 = vpop.f32.mrf.mxu0
      %v3203 = vadd.f32 %v2565, %v3202
      %3204 = vmatmul.bf16.gmra.mxu0 %v2493
      %v3205 = vpop.f32.mrf.mxu0
      %v3206 = vadd.f32 %v2565, %v3205
      %v3207 = vpop.f32.mrf.mxu0
      %v3208 = vadd.f32 %v2565, %v3207
      %3209 = vmatmul.bf16.gmra.mxu0 %v2494
      %v3210 = vpop.f32.mrf.mxu0
      %v3211 = vadd.f32 %v2565, %v3210
      %v3212 = vpop.f32.mrf.mxu0
      %v3213 = vadd.f32 %v2565, %v3212
      %3214 = vmatmul.bf16.gmra.mxu0 %v2495
      %v3215 = vpop.f32.mrf.mxu0
      %v3216 = vadd.f32 %v2565, %v3215
      %v3217 = vpop.f32.mrf.mxu0
      %v3218 = vadd.f32 %v2565, %v3217
      %3219 = vdwg.mxu0
      %3220 = vmatpush.bf16.msra.mxu0 %v2805
      %3221 = vmatpush.bf16.msra.mxu0 %v2798
      %3222 = vmatpush.bf16.msra.mxu0 %v2791
      %3223 = vmatpush.bf16.msra.mxu0 %v2784
      %3224 = vmatpush.bf16.msra.mxu0 %v2777
      %3225 = vmatpush.bf16.msra.mxu0 %v2770
      %3226 = vmatpush.bf16.msra.mxu0 %v2763
      %3227 = vmatpush.bf16.msra.mxu0 %v2756
      %3228 = vmatmul.bf16.gmra.mxu0 %v2480
      %v3229 = vpop.f32.mrf.mxu0
      %v3230 = vadd.f32 %v2566, %v3229
      %v3231 = vpop.f32.mrf.mxu0
      %v3232 = vadd.f32 %v2566, %v3231
      %3233 = vmatmul.bf16.gmra.mxu0 %v2481
      %v3234 = vpop.f32.mrf.mxu0
      %v3235 = vadd.f32 %v2566, %v3234
      %v3236 = vpop.f32.mrf.mxu0
      %v3237 = vadd.f32 %v2566, %v3236
      %3238 = vmatmul.bf16.gmra.mxu0 %v2482
      %v3239 = vpop.f32.mrf.mxu0
      %v3240 = vadd.f32 %v2566, %v3239
      %v3241 = vpop.f32.mrf.mxu0
      %v3242 = vadd.f32 %v2566, %v3241
      %3243 = vmatmul.bf16.gmra.mxu0 %v2483
      %v3244 = vpop.f32.mrf.mxu0
      %v3245 = vadd.f32 %v2566, %v3244
      %v3246 = vpop.f32.mrf.mxu0
      %v3247 = vadd.f32 %v2566, %v3246
      %3248 = vmatmul.bf16.gmra.mxu0 %v2484
      %v3249 = vpop.f32.mrf.mxu0
      %v3250 = vadd.f32 %v2566, %v3249
      %v3251 = vpop.f32.mrf.mxu0
      %v3252 = vadd.f32 %v2566, %v3251
      %3253 = vmatmul.bf16.gmra.mxu0 %v2485
      %v3254 = vpop.f32.mrf.mxu0
      %v3255 = vadd.f32 %v2566, %v3254
      %v3256 = vpop.f32.mrf.mxu0
      %v3257 = vadd.f32 %v2566, %v3256
      %3258 = vmatmul.bf16.gmra.mxu0 %v2486
      %v3259 = vpop.f32.mrf.mxu0
      %v3260 = vadd.f32 %v2566, %v3259
      %v3261 = vpop.f32.mrf.mxu0
      %v3262 = vadd.f32 %v2566, %v3261
      %3263 = vmatmul.bf16.gmra.mxu0 %v2487
      %v3264 = vpop.f32.mrf.mxu0
      %v3265 = vadd.f32 %v2566, %v3264
      %v3266 = vpop.f32.mrf.mxu0
      %v3267 = vadd.f32 %v2566, %v3266
      %3268 = vmatmul.bf16.gmra.mxu0 %v2488
      %v3269 = vpop.f32.mrf.mxu0
      %v3270 = vadd.f32 %v2566, %v3269
      %v3271 = vpop.f32.mrf.mxu0
      %v3272 = vadd.f32 %v2566, %v3271
      %3273 = vmatmul.bf16.gmra.mxu0 %v2489
      %v3274 = vpop.f32.mrf.mxu0
      %v3275 = vadd.f32 %v2566, %v3274
      %v3276 = vpop.f32.mrf.mxu0
      %v3277 = vadd.f32 %v2566, %v3276
      %3278 = vmatmul.bf16.gmra.mxu0 %v2490
      %v3279 = vpop.f32.mrf.mxu0
      %v3280 = vadd.f32 %v2566, %v3279
      %v3281 = vpop.f32.mrf.mxu0
      %v3282 = vadd.f32 %v2566, %v3281
      %3283 = vmatmul.bf16.gmra.mxu0 %v2491
      %v3284 = vpop.f32.mrf.mxu0
      %v3285 = vadd.f32 %v2566, %v3284
      %v3286 = vpop.f32.mrf.mxu0
      %v3287 = vadd.f32 %v2566, %v3286
      %3288 = vmatmul.bf16.gmra.mxu0 %v2492
      %v3289 = vpop.f32.mrf.mxu0
      %v3290 = vadd.f32 %v2566, %v3289
      %v3291 = vpop.f32.mrf.mxu0
      %v3292 = vadd.f32 %v2566, %v3291
      %3293 = vmatmul.bf16.gmra.mxu0 %v2493
      %v3294 = vpop.f32.mrf.mxu0
      %v3295 = vadd.f32 %v2566, %v3294
      %v3296 = vpop.f32.mrf.mxu0
      %v3297 = vadd.f32 %v2566, %v3296
      %3298 = vmatmul.bf16.gmra.mxu0 %v2494
      %v3299 = vpop.f32.mrf.mxu0
      %v3300 = vadd.f32 %v2566, %v3299
      %v3301 = vpop.f32.mrf.mxu0
      %v3302 = vadd.f32 %v2566, %v3301
      %3303 = vmatmul.bf16.gmra.mxu0 %v2495
      %v3304 = vpop.f32.mrf.mxu0
      %v3305 = vadd.f32 %v2566, %v3304
      %v3306 = vpop.f32.mrf.mxu0
      %v3307 = vadd.f32 %v2566, %v3306
      %3308 = vdwg.mxu0
      %3309 = vmatpush.bf16.msra.mxu0 %v2806
      %3310 = vmatpush.bf16.msra.mxu0 %v2799
      %3311 = vmatpush.bf16.msra.mxu0 %v2792
      %3312 = vmatpush.bf16.msra.mxu0 %v2785
      %3313 = vmatpush.bf16.msra.mxu0 %v2778
      %3314 = vmatpush.bf16.msra.mxu0 %v2771
      %3315 = vmatpush.bf16.msra.mxu0 %v2764
      %3316 = vmatpush.bf16.msra.mxu0 %v2757
      %3317 = vmatmul.bf16.gmra.mxu0 %v2480
      %v3318 = vpop.f32.mrf.mxu0
      %v3319 = vadd.f32 %v2567, %v3318
      %v3320 = vpop.f32.mrf.mxu0
      %v3321 = vadd.f32 %v2567, %v3320
      %3322 = vmatmul.bf16.gmra.mxu0 %v2481
      %v3323 = vpop.f32.mrf.mxu0
      %v3324 = vadd.f32 %v2567, %v3323
      %v3325 = vpop.f32.mrf.mxu0
      %v3326 = vadd.f32 %v2567, %v3325
      %3327 = vmatmul.bf16.gmra.mxu0 %v2482
      %v3328 = vpop.f32.mrf.mxu0
      %v3329 = vadd.f32 %v2567, %v3328
      %v3330 = vpop.f32.mrf.mxu0
      %v3331 = vadd.f32 %v2567, %v3330
      %3332 = vmatmul.bf16.gmra.mxu0 %v2483
      %v3333 = vpop.f32.mrf.mxu0
      %v3334 = vadd.f32 %v2567, %v3333
      %v3335 = vpop.f32.mrf.mxu0
      %v3336 = vadd.f32 %v2567, %v3335
      %3337 = vmatmul.bf16.gmra.mxu0 %v2484
      %v3338 = vpop.f32.mrf.mxu0
      %v3339 = vadd.f32 %v2567, %v3338
      %v3340 = vpop.f32.mrf.mxu0
      %v3341 = vadd.f32 %v2567, %v3340
      %3342 = vmatmul.bf16.gmra.mxu0 %v2485
      %v3343 = vpop.f32.mrf.mxu0
      %v3344 = vadd.f32 %v2567, %v3343
      %v3345 = vpop.f32.mrf.mxu0
      %v3346 = vadd.f32 %v2567, %v3345
      %3347 = vmatmul.bf16.gmra.mxu0 %v2486
      %v3348 = vpop.f32.mrf.mxu0
      %v3349 = vadd.f32 %v2567, %v3348
      %v3350 = vpop.f32.mrf.mxu0
      %v3351 = vadd.f32 %v2567, %v3350
      %3352 = vmatmul.bf16.gmra.mxu0 %v2487
      %v3353 = vpop.f32.mrf.mxu0
      %v3354 = vadd.f32 %v2567, %v3353
      %v3355 = vpop.f32.mrf.mxu0
      %v3356 = vadd.f32 %v2567, %v3355
      %3357 = vmatmul.bf16.gmra.mxu0 %v2488
      %v3358 = vpop.f32.mrf.mxu0
      %v3359 = vadd.f32 %v2567, %v3358
      %v3360 = vpop.f32.mrf.mxu0
      %v3361 = vadd.f32 %v2567, %v3360
      %3362 = vmatmul.bf16.gmra.mxu0 %v2489
      %v3363 = vpop.f32.mrf.mxu0
      %v3364 = vadd.f32 %v2567, %v3363
      %v3365 = vpop.f32.mrf.mxu0
      %v3366 = vadd.f32 %v2567, %v3365
      %3367 = vmatmul.bf16.gmra.mxu0 %v2490
      %v3368 = vpop.f32.mrf.mxu0
      %v3369 = vadd.f32 %v2567, %v3368
      %v3370 = vpop.f32.mrf.mxu0
      %v3371 = vadd.f32 %v2567, %v3370
      %3372 = vmatmul.bf16.gmra.mxu0 %v2491
      %v3373 = vpop.f32.mrf.mxu0
      %v3374 = vadd.f32 %v2567, %v3373
      %v3375 = vpop.f32.mrf.mxu0
      %v3376 = vadd.f32 %v2567, %v3375
      %3377 = vmatmul.bf16.gmra.mxu0 %v2492
      %v3378 = vpop.f32.mrf.mxu0
      %v3379 = vadd.f32 %v2567, %v3378
      %v3380 = vpop.f32.mrf.mxu0
      %v3381 = vadd.f32 %v2567, %v3380
      %3382 = vmatmul.bf16.gmra.mxu0 %v2493
      %v3383 = vpop.f32.mrf.mxu0
      %v3384 = vadd.f32 %v2567, %v3383
      %v3385 = vpop.f32.mrf.mxu0
      %v3386 = vadd.f32 %v2567, %v3385
      %3387 = vmatmul.bf16.gmra.mxu0 %v2494
      %v3388 = vpop.f32.mrf.mxu0
      %v3389 = vadd.f32 %v2567, %v3388
      %v3390 = vpop.f32.mrf.mxu0
      %v3391 = vadd.f32 %v2567, %v3390
      %3392 = vmatmul.bf16.gmra.mxu0 %v2495
      %v3393 = vpop.f32.mrf.mxu0
      %v3394 = vadd.f32 %v2567, %v3393
      %v3395 = vpop.f32.mrf.mxu0
      %v3396 = vadd.f32 %v2567, %v3395
      %3397 = vdwg.mxu0
      %3398 = vmatpush.bf16.msra.mxu0 %v2807
      %3399 = vmatpush.bf16.msra.mxu0 %v2800
      %3400 = vmatpush.bf16.msra.mxu0 %v2793
      %3401 = vmatpush.bf16.msra.mxu0 %v2786
      %3402 = vmatpush.bf16.msra.mxu0 %v2779
      %3403 = vmatpush.bf16.msra.mxu0 %v2772
      %3404 = vmatpush.bf16.msra.mxu0 %v2765
      %3405 = vmatpush.bf16.msra.mxu0 %v2758
      %3406 = vmatmul.bf16.gmra.mxu0 %v2480
      %v3407 = vpop.f32.mrf.mxu0
      %v3408 = vadd.f32 %v2568, %v3407
      %v3409 = vpop.f32.mrf.mxu0
      %v3410 = vadd.f32 %v2568, %v3409
      %3411 = vmatmul.bf16.gmra.mxu0 %v2481
      %v3412 = vpop.f32.mrf.mxu0
      %v3413 = vadd.f32 %v2568, %v3412
      %v3414 = vpop.f32.mrf.mxu0
      %v3415 = vadd.f32 %v2568, %v3414
      %3416 = vmatmul.bf16.gmra.mxu0 %v2482
      %v3417 = vpop.f32.mrf.mxu0
      %v3418 = vadd.f32 %v2568, %v3417
      %v3419 = vpop.f32.mrf.mxu0
      %v3420 = vadd.f32 %v2568, %v3419
      %3421 = vmatmul.bf16.gmra.mxu0 %v2483
      %v3422 = vpop.f32.mrf.mxu0
      %v3423 = vadd.f32 %v2568, %v3422
      %v3424 = vpop.f32.mrf.mxu0
      %v3425 = vadd.f32 %v2568, %v3424
      %3426 = vmatmul.bf16.gmra.mxu0 %v2484
      %v3427 = vpop.f32.mrf.mxu0
      %v3428 = vadd.f32 %v2568, %v3427
      %v3429 = vpop.f32.mrf.mxu0
      %v3430 = vadd.f32 %v2568, %v3429
      %3431 = vmatmul.bf16.gmra.mxu0 %v2485
      %v3432 = vpop.f32.mrf.mxu0
      %v3433 = vadd.f32 %v2568, %v3432
      %v3434 = vpop.f32.mrf.mxu0
      %v3435 = vadd.f32 %v2568, %v3434
      %3436 = vmatmul.bf16.gmra.mxu0 %v2486
      %v3437 = vpop.f32.mrf.mxu0
      %v3438 = vadd.f32 %v2568, %v3437
      %v3439 = vpop.f32.mrf.mxu0
      %v3440 = vadd.f32 %v2568, %v3439
      %3441 = vmatmul.bf16.gmra.mxu0 %v2487
      %v3442 = vpop.f32.mrf.mxu0
      %v3443 = vadd.f32 %v2568, %v3442
      %v3444 = vpop.f32.mrf.mxu0
      %v3445 = vadd.f32 %v2568, %v3444
      %3446 = vmatmul.bf16.gmra.mxu0 %v2488
      %v3447 = vpop.f32.mrf.mxu0
      %v3448 = vadd.f32 %v2568, %v3447
      %v3449 = vpop.f32.mrf.mxu0
      %v3450 = vadd.f32 %v2568, %v3449
      %3451 = vmatmul.bf16.gmra.mxu0 %v2489
      %v3452 = vpop.f32.mrf.mxu0
      %v3453 = vadd.f32 %v2568, %v3452
      %v3454 = vpop.f32.mrf.mxu0
      %v3455 = vadd.f32 %v2568, %v3454
      %3456 = vmatmul.bf16.gmra.mxu0 %v2490
      %v3457 = vpop.f32.mrf.mxu0
      %v3458 = vadd.f32 %v2568, %v3457
      %v3459 = vpop.f32.mrf.mxu0
      %v3460 = vadd.f32 %v2568, %v3459
      %3461 = vmatmul.bf16.gmra.mxu0 %v2491
      %v3462 = vpop.f32.mrf.mxu0
      %v3463 = vadd.f32 %v2568, %v3462
      %v3464 = vpop.f32.mrf.mxu0
      %v3465 = vadd.f32 %v2568, %v3464
      %3466 = vmatmul.bf16.gmra.mxu0 %v2492
      %v3467 = vpop.f32.mrf.mxu0
      %v3468 = vadd.f32 %v2568, %v3467
      %v3469 = vpop.f32.mrf.mxu0
      %v3470 = vadd.f32 %v2568, %v3469
      %3471 = vmatmul.bf16.gmra.mxu0 %v2493
      %v3472 = vpop.f32.mrf.mxu0
      %v3473 = vadd.f32 %v2568, %v3472
      %v3474 = vpop.f32.mrf.mxu0
      %v3475 = vadd.f32 %v2568, %v3474
      %3476 = vmatmul.bf16.gmra.mxu0 %v2494
      %v3477 = vpop.f32.mrf.mxu0
      %v3478 = vadd.f32 %v2568, %v3477
      %v3479 = vpop.f32.mrf.mxu0
      %v3480 = vadd.f32 %v2568, %v3479
      %3481 = vmatmul.bf16.gmra.mxu0 %v2495
      %v3482 = vpop.f32.mrf.mxu0
      %v3483 = vadd.f32 %v2568, %v3482
      %v3484 = vpop.f32.mrf.mxu0
      %v3485 = vadd.f32 %v2568, %v3484
      %3486 = vdwg.mxu0
      %v3487 = vpack.c.bf16 %v2963, %v2874
      %v3488 = vpack.c.bf16 %v3141, %v3052
      %v3489 = vpack.c.bf16 %v3319, %v3230
      %v3490 = vpack.c.bf16 %v3408, %v3408
      %v3491 = vpack.c.bf16 %v2965, %v2876
      %v3492 = vpack.c.bf16 %v3143, %v3054
      %v3493 = vpack.c.bf16 %v3321, %v3232
      %v3494 = vpack.c.bf16 %v3410, %v3410
      %v3495 = vpack.c.bf16 %v2968, %v2879
      %v3496 = vpack.c.bf16 %v3146, %v3057
      %v3497 = vpack.c.bf16 %v3324, %v3235
      %v3498 = vpack.c.bf16 %v3413, %v3413
      %v3499 = vpack.c.bf16 %v2970, %v2881
      %v3500 = vpack.c.bf16 %v3148, %v3059
      %v3501 = vpack.c.bf16 %v3326, %v3237
      %v3502 = vpack.c.bf16 %v3415, %v3415
      %v3503 = vpack.c.bf16 %v2973, %v2884
      %v3504 = vpack.c.bf16 %v3151, %v3062
      %v3505 = vpack.c.bf16 %v3329, %v3240
      %v3506 = vpack.c.bf16 %v3418, %v3418
      %v3507 = vpack.c.bf16 %v2975, %v2886
      %v3508 = vpack.c.bf16 %v3153, %v3064
      %v3509 = vpack.c.bf16 %v3331, %v3242
      %v3510 = vpack.c.bf16 %v3420, %v3420
      %v3511 = vpack.c.bf16 %v2978, %v2889
      %v3512 = vpack.c.bf16 %v3156, %v3067
      %v3513 = vpack.c.bf16 %v3334, %v3245
      %v3514 = vpack.c.bf16 %v3423, %v3423
      %v3515 = vpack.c.bf16 %v2980, %v2891
      %v3516 = vpack.c.bf16 %v3158, %v3069
      %v3517 = vpack.c.bf16 %v3336, %v3247
      %v3518 = vpack.c.bf16 %v3425, %v3425
      %v3519 = vpack.c.bf16 %v2983, %v2894
      %v3520 = vpack.c.bf16 %v3161, %v3072
      %v3521 = vpack.c.bf16 %v3339, %v3250
      %v3522 = vpack.c.bf16 %v3428, %v3428
      %v3523 = vpack.c.bf16 %v2985, %v2896
      %v3524 = vpack.c.bf16 %v3163, %v3074
      %v3525 = vpack.c.bf16 %v3341, %v3252
      %v3526 = vpack.c.bf16 %v3430, %v3430
      %v3527 = vpack.c.bf16 %v2988, %v2899
      %v3528 = vpack.c.bf16 %v3166, %v3077
      %v3529 = vpack.c.bf16 %v3344, %v3255
      %v3530 = vpack.c.bf16 %v3433, %v3433
      %v3531 = vpack.c.bf16 %v2990, %v2901
      %v3532 = vpack.c.bf16 %v3168, %v3079
      %v3533 = vpack.c.bf16 %v3346, %v3257
      %v3534 = vpack.c.bf16 %v3435, %v3435
      %v3535 = vpack.c.bf16 %v2993, %v2904
      %v3536 = vpack.c.bf16 %v3171, %v3082
      %v3537 = vpack.c.bf16 %v3349, %v3260
      %v3538 = vpack.c.bf16 %v3438, %v3438
      %v3539 = vpack.c.bf16 %v2995, %v2906
      %v3540 = vpack.c.bf16 %v3173, %v3084
      %v3541 = vpack.c.bf16 %v3351, %v3262
      %v3542 = vpack.c.bf16 %v3440, %v3440
      %v3543 = vpack.c.bf16 %v2998, %v2909
      %v3544 = vpack.c.bf16 %v3176, %v3087
      %v3545 = vpack.c.bf16 %v3354, %v3265
      %v3546 = vpack.c.bf16 %v3443, %v3443
      %v3547 = vpack.c.bf16 %v3000, %v2911
      %v3548 = vpack.c.bf16 %v3178, %v3089
      %v3549 = vpack.c.bf16 %v3356, %v3267
      %v3550 = vpack.c.bf16 %v3445, %v3445
      %v3551 = vpack.c.bf16 %v3003, %v2914
      %v3552 = vpack.c.bf16 %v3181, %v3092
      %v3553 = vpack.c.bf16 %v3359, %v3270
      %v3554 = vpack.c.bf16 %v3448, %v3448
      %v3555 = vpack.c.bf16 %v3005, %v2916
      %v3556 = vpack.c.bf16 %v3183, %v3094
      %v3557 = vpack.c.bf16 %v3361, %v3272
      %v3558 = vpack.c.bf16 %v3450, %v3450
      %v3559 = vpack.c.bf16 %v3008, %v2919
      %v3560 = vpack.c.bf16 %v3186, %v3097
      %v3561 = vpack.c.bf16 %v3364, %v3275
      %v3562 = vpack.c.bf16 %v3453, %v3453
      %v3563 = vpack.c.bf16 %v3010, %v2921
      %v3564 = vpack.c.bf16 %v3188, %v3099
      %v3565 = vpack.c.bf16 %v3366, %v3277
      %v3566 = vpack.c.bf16 %v3455, %v3455
      %v3567 = vpack.c.bf16 %v3013, %v2924
      %v3568 = vpack.c.bf16 %v3191, %v3102
      %v3569 = vpack.c.bf16 %v3369, %v3280
      %v3570 = vpack.c.bf16 %v3458, %v3458
      %v3571 = vpack.c.bf16 %v3015, %v2926
      %v3572 = vpack.c.bf16 %v3193, %v3104
      %v3573 = vpack.c.bf16 %v3371, %v3282
      %v3574 = vpack.c.bf16 %v3460, %v3460
      %v3575 = vpack.c.bf16 %v3018, %v2929
      %v3576 = vpack.c.bf16 %v3196, %v3107
      %v3577 = vpack.c.bf16 %v3374, %v3285
      %v3578 = vpack.c.bf16 %v3463, %v3463
      %v3579 = vpack.c.bf16 %v3020, %v2931
      %v3580 = vpack.c.bf16 %v3198, %v3109
      %v3581 = vpack.c.bf16 %v3376, %v3287
      %v3582 = vpack.c.bf16 %v3465, %v3465
      %v3583 = vpack.c.bf16 %v3023, %v2934
      %v3584 = vpack.c.bf16 %v3201, %v3112
      %v3585 = vpack.c.bf16 %v3379, %v3290
      %v3586 = vpack.c.bf16 %v3468, %v3468
      %v3587 = vpack.c.bf16 %v3025, %v2936
      %v3588 = vpack.c.bf16 %v3203, %v3114
      %v3589 = vpack.c.bf16 %v3381, %v3292
      %v3590 = vpack.c.bf16 %v3470, %v3470
      %v3591 = vpack.c.bf16 %v3028, %v2939
      %v3592 = vpack.c.bf16 %v3206, %v3117
      %v3593 = vpack.c.bf16 %v3384, %v3295
      %v3594 = vpack.c.bf16 %v3473, %v3473
      %v3595 = vpack.c.bf16 %v3030, %v2941
      %v3596 = vpack.c.bf16 %v3208, %v3119
      %v3597 = vpack.c.bf16 %v3386, %v3297
      %v3598 = vpack.c.bf16 %v3475, %v3475
      %v3599 = vpack.c.bf16 %v3033, %v2944
      %v3600 = vpack.c.bf16 %v3211, %v3122
      %v3601 = vpack.c.bf16 %v3389, %v3300
      %v3602 = vpack.c.bf16 %v3478, %v3478
      %v3603 = vpack.c.bf16 %v3035, %v2946
      %v3604 = vpack.c.bf16 %v3213, %v3124
      %v3605 = vpack.c.bf16 %v3391, %v3302
      %v3606 = vpack.c.bf16 %v3480, %v3480
      %v3607 = vpack.c.bf16 %v3038, %v2949
      %v3608 = vpack.c.bf16 %v3216, %v3127
      %v3609 = vpack.c.bf16 %v3394, %v3305
      %v3610 = vpack.c.bf16 %v3483, %v3483
      %v3611 = vpack.c.bf16 %v3040, %v2951
      %v3612 = vpack.c.bf16 %v3218, %v3129
      %v3613 = vpack.c.bf16 %v3396, %v3307
      %v3614 = vpack.c.bf16 %v3485, %v3485
      %3615 = vst [vmem:[%s393] sm:$0xff] %v3487
      %3616 = vst [vmem:[%s393 + $0x8] sm:$0xff] %v3488
      %3617 = vst [vmem:[%s393 + $0x10] sm:$0xff] %v3489
      %vm3618 = vcmask 125952
      %3619 = vst.msk [vmem:[%s393 + $0x18] sm:$0xf] %vm3618, %v3490
      %3620 = vst [vmem:[%s393 + $0x1c] sm:$0xff] %v3491
      %3621 = vst [vmem:[%s393 + $0x24] sm:$0xff] %v3492
      %3622 = vst [vmem:[%s393 + $0x2c] sm:$0xff] %v3493
      %3623 = vst.msk [vmem:[%s393 + $0x34] sm:$0xf] %vm3618, %v3494
      %3624 = vst [vmem:[%s393 + $0x38] sm:$0xff] %v3495
      %3625 = vst [vmem:[%s393 + $0x40] sm:$0xff] %v3496
      %3626 = vst [vmem:[%s393 + $0x48] sm:$0xff] %v3497
      %3627 = vst.msk [vmem:[%s393 + $0x50] sm:$0xf] %vm3618, %v3498
      %3628 = vst [vmem:[%s393 + $0x54] sm:$0xff] %v3499
      %3629 = vst [vmem:[%s393 + $0x5c] sm:$0xff] %v3500
      %3630 = vst [vmem:[%s393 + $0x64] sm:$0xff] %v3501
      %3631 = vst.msk [vmem:[%s393 + $0x6c] sm:$0xf] %vm3618, %v3502
      %3632 = vst [vmem:[%s393 + $0x70] sm:$0xff] %v3503
      %3633 = vst [vmem:[%s393 + $0x78] sm:$0xff] %v3504
      %3634 = vst [vmem:[%s393 + $0x80] sm:$0xff] %v3505
      %3635 = vst.msk [vmem:[%s393 + $0x88] sm:$0xf] %vm3618, %v3506
      %3636 = vst [vmem:[%s393 + $0x8c] sm:$0xff] %v3507
      %3637 = vst [vmem:[%s393 + $0x94] sm:$0xff] %v3508
      %3638 = vst [vmem:[%s393 + $0x9c] sm:$0xff] %v3509
      %3639 = vst.msk [vmem:[%s393 + $0xa4] sm:$0xf] %vm3618, %v3510
      %3640 = vst [vmem:[%s393 + $0xa8] sm:$0xff] %v3511
      %3641 = vst [vmem:[%s393 + $0xb0] sm:$0xff] %v3512
      %3642 = vst [vmem:[%s393 + $0xb8] sm:$0xff] %v3513
      %3643 = vst.msk [vmem:[%s393 + $0xc0] sm:$0xf] %vm3618, %v3514
      %3644 = vst [vmem:[%s393 + $0xc4] sm:$0xff] %v3515
      %3645 = vst [vmem:[%s393 + $0xcc] sm:$0xff] %v3516
      %3646 = vst [vmem:[%s393 + $0xd4] sm:$0xff] %v3517
      %3647 = vst.msk [vmem:[%s393 + $0xdc] sm:$0xf] %vm3618, %v3518
      %3648 = vst [vmem:[%s393 + $0xe0] sm:$0xff] %v3519
      %3649 = vst [vmem:[%s393 + $0xe8] sm:$0xff] %v3520
      %3650 = vst [vmem:[%s393 + $0xf0] sm:$0xff] %v3521
      %3651 = vst.msk [vmem:[%s393 + $0xf8] sm:$0xf] %vm3618, %v3522
      %3652 = vst [vmem:[%s393 + $0xfc] sm:$0xff] %v3523
      %3653 = vst [vmem:[%s393 + $0x104] sm:$0xff] %v3524
      %3654 = vst [vmem:[%s393 + $0x10c] sm:$0xff] %v3525
      %3655 = vst.msk [vmem:[%s393 + $0x114] sm:$0xf] %vm3618, %v3526
      %3656 = vst [vmem:[%s393 + $0x118] sm:$0xff] %v3527
      %3657 = vst [vmem:[%s393 + $0x120] sm:$0xff] %v3528
      %3658 = vst [vmem:[%s393 + $0x128] sm:$0xff] %v3529
      %3659 = vst.msk [vmem:[%s393 + $0x130] sm:$0xf] %vm3618, %v3530
      %3660 = vst [vmem:[%s393 + $0x134] sm:$0xff] %v3531
      %3661 = vst [vmem:[%s393 + $0x13c] sm:$0xff] %v3532
      %3662 = vst [vmem:[%s393 + $0x144] sm:$0xff] %v3533
      %3663 = vst.msk [vmem:[%s393 + $0x14c] sm:$0xf] %vm3618, %v3534
      %3664 = vst [vmem:[%s393 + $0x150] sm:$0xff] %v3535
      %3665 = vst [vmem:[%s393 + $0x158] sm:$0xff] %v3536
      %3666 = vst [vmem:[%s393 + $0x160] sm:$0xff] %v3537
      %3667 = vst.msk [vmem:[%s393 + $0x168] sm:$0xf] %vm3618, %v3538
      %3668 = vst [vmem:[%s393 + $0x16c] sm:$0xff] %v3539
      %3669 = vst [vmem:[%s393 + $0x174] sm:$0xff] %v3540
      %3670 = vst [vmem:[%s393 + $0x17c] sm:$0xff] %v3541
      %3671 = vst.msk [vmem:[%s393 + $0x184] sm:$0xf] %vm3618, %v3542
      %3672 = vst [vmem:[%s393 + $0x188] sm:$0xff] %v3543
      %3673 = vst [vmem:[%s393 + $0x190] sm:$0xff] %v3544
      %3674 = vst [vmem:[%s393 + $0x198] sm:$0xff] %v3545
      %3675 = vst.msk [vmem:[%s393 + $0x1a0] sm:$0xf] %vm3618, %v3546
      %3676 = vst [vmem:[%s393 + $0x1a4] sm:$0xff] %v3547
      %3677 = vst [vmem:[%s393 + $0x1ac] sm:$0xff] %v3548
      %3678 = vst [vmem:[%s393 + $0x1b4] sm:$0xff] %v3549
      %3679 = vst.msk [vmem:[%s393 + $0x1bc] sm:$0xf] %vm3618, %v3550
      %3680 = vst [vmem:[%s393 + $0x1c0] sm:$0xff] %v3551
      %3681 = vst [vmem:[%s393 + $0x1c8] sm:$0xff] %v3552
      %3682 = vst [vmem:[%s393 + $0x1d0] sm:$0xff] %v3553
      %3683 = vst.msk [vmem:[%s393 + $0x1d8] sm:$0xf] %vm3618, %v3554
      %3684 = vst [vmem:[%s393 + $0x1dc] sm:$0xff] %v3555
      %3685 = vst [vmem:[%s393 + $0x1e4] sm:$0xff] %v3556
      %3686 = vst [vmem:[%s393 + $0x1ec] sm:$0xff] %v3557
      %3687 = vst.msk [vmem:[%s393 + $0x1f4] sm:$0xf] %vm3618, %v3558
      %3688 = vst [vmem:[%s393 + $0x1f8] sm:$0xff] %v3559
      %3689 = vst [vmem:[%s393 + $0x200] sm:$0xff] %v3560
      %3690 = vst [vmem:[%s393 + $0x208] sm:$0xff] %v3561
      %3691 = vst.msk [vmem:[%s393 + $0x210] sm:$0xf] %vm3618, %v3562
      %3692 = vst [vmem:[%s393 + $0x214] sm:$0xff] %v3563
      %3693 = vst [vmem:[%s393 + $0x21c] sm:$0xff] %v3564
      %3694 = vst [vmem:[%s393 + $0x224] sm:$0xff] %v3565
      %3695 = vst.msk [vmem:[%s393 + $0x22c] sm:$0xf] %vm3618, %v3566
      %3696 = vst [vmem:[%s393 + $0x230] sm:$0xff] %v3567
      %3697 = vst [vmem:[%s393 + $0x238] sm:$0xff] %v3568
      %3698 = vst [vmem:[%s393 + $0x240] sm:$0xff] %v3569
      %3699 = vst.msk [vmem:[%s393 + $0x248] sm:$0xf] %vm3618, %v3570
      %3700 = vst [vmem:[%s393 + $0x24c] sm:$0xff] %v3571
      %3701 = vst [vmem:[%s393 + $0x254] sm:$0xff] %v3572
      %3702 = vst [vmem:[%s393 + $0x25c] sm:$0xff] %v3573
      %3703 = vst.msk [vmem:[%s393 + $0x264] sm:$0xf] %vm3618, %v3574
      %3704 = vst [vmem:[%s393 + $0x268] sm:$0xff] %v3575
      %3705 = vst [vmem:[%s393 + $0x270] sm:$0xff] %v3576
      %3706 = vst [vmem:[%s393 + $0x278] sm:$0xff] %v3577
      %3707 = vst.msk [vmem:[%s393 + $0x280] sm:$0xf] %vm3618, %v3578
      %3708 = vst [vmem:[%s393 + $0x284] sm:$0xff] %v3579
      %3709 = vst [vmem:[%s393 + $0x28c] sm:$0xff] %v3580
      %3710 = vst [vmem:[%s393 + $0x294] sm:$0xff] %v3581
      %3711 = vst.msk [vmem:[%s393 + $0x29c] sm:$0xf] %vm3618, %v3582
      %3712 = vst [vmem:[%s393 + $0x2a0] sm:$0xff] %v3583
      %3713 = vst [vmem:[%s393 + $0x2a8] sm:$0xff] %v3584
      %3714 = vst [vmem:[%s393 + $0x2b0] sm:$0xff] %v3585
      %3715 = vst.msk [vmem:[%s393 + $0x2b8] sm:$0xf] %vm3618, %v3586
      %3716 = vst [vmem:[%s393 + $0x2bc] sm:$0xff] %v3587
      %3717 = vst [vmem:[%s393 + $0x2c4] sm:$0xff] %v3588
      %3718 = vst [vmem:[%s393 + $0x2cc] sm:$0xff] %v3589
      %3719 = vst.msk [vmem:[%s393 + $0x2d4] sm:$0xf] %vm3618, %v3590
      %3720 = vst [vmem:[%s393 + $0x2d8] sm:$0xff] %v3591
      %3721 = vst [vmem:[%s393 + $0x2e0] sm:$0xff] %v3592
      %3722 = vst [vmem:[%s393 + $0x2e8] sm:$0xff] %v3593
      %3723 = vst.msk [vmem:[%s393 + $0x2f0] sm:$0xf] %vm3618, %v3594
      %3724 = vst [vmem:[%s393 + $0x2f4] sm:$0xff] %v3595
      %3725 = vst [vmem:[%s393 + $0x2fc] sm:$0xff] %v3596
      %3726 = vst [vmem:[%s393 + $0x304] sm:$0xff] %v3597
      %3727 = vst.msk [vmem:[%s393 + $0x30c] sm:$0xf] %vm3618, %v3598
      %3728 = vst [vmem:[%s393 + $0x310] sm:$0xff] %v3599
      %3729 = vst [vmem:[%s393 + $0x318] sm:$0xff] %v3600
      %3730 = vst [vmem:[%s393 + $0x320] sm:$0xff] %v3601
      %3731 = vst.msk [vmem:[%s393 + $0x328] sm:$0xf] %vm3618, %v3602
      %3732 = vst [vmem:[%s393 + $0x32c] sm:$0xff] %v3603
      %3733 = vst [vmem:[%s393 + $0x334] sm:$0xff] %v3604
      %3734 = vst [vmem:[%s393 + $0x33c] sm:$0xff] %v3605
      %3735 = vst.msk [vmem:[%s393 + $0x344] sm:$0xf] %vm3618, %v3606
      %3736 = vst [vmem:[%s393 + $0x348] sm:$0xff] %v3607
      %3737 = vst [vmem:[%s393 + $0x350] sm:$0xff] %v3608
      %3738 = vst [vmem:[%s393 + $0x358] sm:$0xff] %v3609
      %3739 = vst.msk [vmem:[%s393 + $0x360] sm:$0xf] %vm3618, %v3610
      %3740 = vst [vmem:[%s393 + $0x364] sm:$0xff] %v3611
      %3741 = vst [vmem:[%s393 + $0x36c] sm:$0xff] %v3612
      %3742 = vst [vmem:[%s393 + $0x374] sm:$0xff] %v3613
      %3743 = vst.msk [vmem:[%s393 + $0x37c] sm:$0xf] %vm3618, %v3614
      %s3744 = smul.u32 32, %s22
      %p3745 = scmp.lt.s32.totalorder %s3744, 63
      %s3746 = scalar_select %p3745, %s3744, 63
      %s3747 = smul.addr %s3746, 7
      %s3748 = smul.addr %s3747, 4
      %s3749 = scalar_lea.vmem %s11, %s3748
      // Predicated region
      $region65: #{tpu_custom_call.1} parent=63 // pred_check
        %p3750 = pneg %p276
      $region66: #{tpu_custom_call.1} parent=63 // pred_check_branch
        %3752 = sbr.rel (%p3750) target = $region68
      $region67: #{tpu_custom_call.1} parent=63 // pred_region
        %s3753 = smul.u32 32, %s22
      $region68: #{tpu_custom_call.1} parent=63 // pred_fallthru
        _
    $region64: #{tpu_custom_call.1} parent=5 // pred_fallthru
      _
    %p3754 = scmp.le.s32.totalorder 2, %s17
    // Predicated region
    $region69: #{tpu_custom_call.1} parent=5 // pred_check
      %p3755 = pneg %p3754
    $region70: #{tpu_custom_call.1} parent=5 // pred_check_branch
      %3757 = sbr.rel (%p3755) target = $region72
    $region71: #{tpu_custom_call.1} parent=5 // pred_region
      %s3758 = ssub.s32 %s17, 2
      // Predicated region
      $region73: #{tpu_custom_call.1} parent=71 // pred_check
        %p3759 = pneg %p282
      $region74: #{tpu_custom_call.1} parent=71 // pred_check_branch
        %3761 = sbr.rel (%p3759) target = $region76
      $region75: #{tpu_custom_call.1} parent=71 // pred_region
        %s3762 = smul.u32 32, %s23
        %p3763 = scmp.lt.s32.totalorder %s3762, 63
        %s3764 = scalar_select %p3763, %s3762, 63
        %s3765 = smul.addr %s3764, 7
        %s3766 = smul.addr %s3765, 4
        %s3767 = scalar_lea.vmem %s11, %s3766
      $region76: #{tpu_custom_call.1} parent=71 // pred_fallthru
        _
    $region72: #{tpu_custom_call.1} parent=5 // pred_fallthru
      _
  $region6: #{tpu_custom_call.1} parent=0 // loop_footer
    %s21 = sadd.s32 1, %s17
  $region7: #{tpu_custom_call.1} parent=0 // loop_footer_branch
    %16 = sbr.rel target = $region3
  $region8: #{tpu_custom_call.1} parent=0 // loop_exit
    _

</llo_original>
